<compile_context>
chip_gen: v7x
topology: tpu7x:2x2x1
jax: 0.10.0
libtpu: 0.0.40
codegen_flags: <defaults>
</compile_context>

<pallas_src>
import numpy as np
import jax
import jax.numpy as jnp
from jax.experimental import pallas as pl
from jax.experimental.pallas import tpu as pltpu

# ---- config (small synthetic sizes, consistent with config.emb_dim etc.) ----
VOCAB = 16
EMB_DIM = 32            # config.emb_dim
HIDDEN_DIM = 32         # config.hidden_dim
RAND_UNIF_INIT_MAG = 0.02      # config.rand_unif_init_mag
TRUNC_NORM_INIT_STD = 1e-4     # config.trunc_norm_init_std
SUBLANE = 8


# ---------------------------------------------------------------------------
# Fused encoder kernel.
# Gate order follows PyTorch: [i, f, g, o] per direction.
# Layout: x / outputs are flattened time-major 2-D slabs of shape (T*Bp, .),
#         rows [t*Bp : (t+1)*Bp] hold time step t for the whole (padded) batch.
# ---------------------------------------------------------------------------
def _encoder_kernel(x_ref, lens_ref, wih_ref, whh_ref, b_ref, wht_ref,
                    out_ref, feat_ref, hn_ref, cn_ref,
                    gx_ref, h_ref, c_ref, outf_ref, outb_ref):
    Bp = lens_ref.shape[0]
    H = hn_ref.shape[-1]
    G = 4 * H
    T = x_ref.shape[0] // Bp

    # ---- hoisted input projection: ONE (T*Bp, E) @ (E, 8H) matmul + bias ----
    gx_ref[...] = (jnp.dot(x_ref[...], wih_ref[...],
                           preferred_element_type=jnp.float32)
                   + b_ref[...])                       # (T*Bp, 8H)

    lens = lens_ref[...]                               # (Bp, 1) int32

    # recurrent state, both directions packed: fwd in [:, :H], bwd in [:, H:]
    h_ref[...] = jnp.zeros_like(h_ref)
    c_ref[...] = jnp.zeros_like(c_ref)

    def gate_math(gates, c_prev):
        # whole-vreg transcendentals on the (Bp, 4H) tile, then static slices
        sig = jax.nn.sigmoid(gates)
        tnh = jnp.tanh(gates)
        i = sig[:, 0:H]
        f = sig[:, H:2 * H]
        g = tnh[:, 2 * H:3 * H]
        o = sig[:, 3 * H:4 * H]
        c_new = f * c_prev + i * g
        h_new = o * jnp.tanh(c_new)
        return h_new, c_new

    # Fully unrolled static time loop (T is small and known at trace time);
    # equivalent to lax.fori_loop(..., unroll=True) but keeps every index static.
    for t in range(T):
        tb = T - 1 - t                                 # backward time index
        h = h_ref[...]                                 # (Bp, 2H)
        c = c_ref[...]

        # one 256-wide recurrent matmul for both directions (block-diag Whh)
        g_rec = jnp.dot(h, whh_ref[...],
                        preferred_element_type=jnp.float32)      # (Bp, 8H)

        gx_f = gx_ref[pl.ds(t * Bp, Bp), :]            # (Bp, 8H), fwd uses x[t]
        gx_b = gx_ref[pl.ds(tb * Bp, Bp), :]           # bwd uses x[T-1-t]
        gates_f = gx_f[:, 0:G] + g_rec[:, 0:G]
        gates_b = gx_b[:, G:2 * G] + g_rec[:, G:2 * G]

        hf_new, cf_new = gate_math(gates_f, c[:, 0:H])
        hb_new, cb_new = gate_math(gates_b, c[:, H:2 * H])

        mask_f = lens > t                              # (Bp, 1)
        mask_b = lens > tb

        hf = jnp.where(mask_f, hf_new, h[:, 0:H])
        cf = jnp.where(mask_f, cf_new, c[:, 0:H])
        hb = jnp.where(mask_b, hb_new, h[:, H:2 * H])
        cb = jnp.where(mask_b, cb_new, c[:, H:2 * H])

        h_ref[...] = jnp.concatenate([hf, hb], axis=-1)
        c_ref[...] = jnp.concatenate([cf, cb], axis=-1)

        # per-direction output slabs (full-lane-width row stores into VMEM)
        outf_ref[pl.ds(t * Bp, Bp), :] = jnp.where(mask_f, hf_new, 0.0)
        outb_ref[pl.ds(tb * Bp, Bp), :] = jnp.where(mask_b, hb_new, 0.0)

    # lane-dense combined output (fwd | bwd) + fused W_h projection
    out = jnp.concatenate([outf_ref[...], outb_ref[...]], axis=-1)  # (T*Bp, 2H)
    out_ref[...] = out
    feat_ref[...] = jnp.dot(out, wht_ref[...],
                            preferred_element_type=jnp.float32)     # (T*Bp, 2H)

    # final hidden / cell states, written exactly once
    h_fin = h_ref[...]
    c_fin = c_ref[...]
    hn_ref[0] = h_fin[:, 0:H]
    hn_ref[1] = h_fin[:, H:2 * H]
    cn_ref[0] = c_fin[:, 0:H]
    cn_ref[1] = c_fin[:, H:2 * H]


def encoder_pallas(x_2d, lens_b1, wih_cat, whh_bd, b_cat, wht):
    TB, E = x_2d.shape
    Bp = lens_b1.shape[0]
    T = TB // Bp
    H = HIDDEN_DIM

    def full(shape):
        return pl.BlockSpec(shape, lambda i, _n=len(shape): (0,) * _n)

    out_shapes = (
        jax.ShapeDtypeStruct((TB, 2 * H), jnp.float32),   # encoder_outputs (tm)
        jax.ShapeDtypeStruct((TB, 2 * H), jnp.float32),   # encoder_feature (tm)
        jax.ShapeDtypeStruct((2, Bp, H), jnp.float32),    # h_n
        jax.ShapeDtypeStruct((2, Bp, H), jnp.float32),    # c_n
    )
    return pl.pallas_call(
        _encoder_kernel,
        grid=(1,),
        in_specs=[
            full((TB, E)),            # x (time-major, flattened)
            full((Bp, 1)),            # seq lens
            full((E, 8 * H)),         # [Wih_f | Wih_b]
            full((2 * H, 8 * H)),     # block-diag [Whh_f, Whh_b]
            full((1, 8 * H)),         # combined biases
            full((2 * H, 2 * H)),     # W_h^T
        ],
        out_specs=(full((TB, 2 * H)), full((TB, 2 * H)),
                   full((2, Bp, H)), full((2, Bp, H))),
        out_shape=out_shapes,
        scratch_shapes=[
            pltpu.VMEM((TB, 8 * H), jnp.float32),   # hoisted gate inputs
            pltpu.VMEM((Bp, 2 * H), jnp.float32),   # h state (fwd|bwd)
            pltpu.VMEM((Bp, 2 * H), jnp.float32),   # c state (fwd|bwd)
            pltpu.VMEM((TB, H), jnp.float32),       # fwd outputs
            pltpu.VMEM((TB, H), jnp.float32),       # bwd outputs
        ],
        compiler_params=pltpu.CompilerParams(
            dimension_semantics=("arbitrary",)),
    )(x_2d, lens_b1, wih_cat, whh_bd, b_cat, wht)


# ---------------------------------------------------------------------------
# Parameter init (deterministic, mirrors the PyTorch init functions)
# ---------------------------------------------------------------------------
def init_params(key):
    ks = jax.random.split(key, 8)
    H, E = HIDDEN_DIM, EMB_DIM
    mag = RAND_UNIF_INIT_MAG

    # embedding "from_pretrained" weight (synthetic); the weight[i,0]==0 re-init
    # branch never triggers for a dense random matrix, so it is a no-op here.
    embedding = TRUNC_NORM_INIT_STD + jax.random.normal(
        ks[0], (VOCAB, E), jnp.float32) * 0.1

    def lstm_dir(k1, k2):
        wih = jax.random.uniform(k1, (E, 4 * H), jnp.float32, -mag, mag)
        whh = jax.random.uniform(k2, (H, 4 * H), jnp.float32, -mag, mag)
        # init_lstm_wt: b_ih and b_hh each zero except forget-gate slice = 1.0
        b_single = jnp.zeros((4 * H,), jnp.float32).at[H:2 * H].set(1.0)
        b = (b_single + b_single).reshape(1, 4 * H)   # combined b_ih + b_hh
        return wih, whh, b

    wih_f, whh_f, b_f = lstm_dir(ks[1], ks[2])
    wih_b, whh_b, b_b = lstm_dir(ks[3], ks[4])

    # W_h: nn.Linear(2H, 2H, bias=False) default init (uniform +/- 1/sqrt(fan_in))
    bound = 1.0 / np.sqrt(2 * H)
    w_h = jax.random.uniform(ks[5], (2 * H, 2 * H), jnp.float32, -bound, bound)

    return dict(embedding=embedding, wih_f=wih_f, whh_f=whh_f, b_f=b_f,
                wih_b=wih_b, whh_b=whh_b, b_b=b_b, w_h=w_h)


# ---------------------------------------------------------------------------
# Encoder forward (matches the PyTorch module's forward)
# ---------------------------------------------------------------------------
def encoder_forward(params, input_ids, seq_lens):
    seq_lens = np.asarray(seq_lens)
    B = input_ids.shape[0]
    H = HIDDEN_DIM

    # embedding lookup (plain-JAX gather glue; no clean Pallas equivalent)
    embedded = jnp.take(params["embedding"], input_ids, axis=0)   # (B, T_in, E)
    # pad_packed_sequence trims to the max length in the batch
    T = int(seq_lens.max())
    embedded = embedded[:, :T, :].astype(jnp.float32)

    # pad batch to a sublane multiple (>=8); padded rows get length 0
    Bp = max(SUBLANE, int(np.ceil(B / SUBLANE)) * SUBLANE)
    x_tbe = jnp.zeros((T, Bp, EMB_DIM), jnp.float32)
    x_tbe = x_tbe.at[:, :B, :].set(jnp.transpose(embedded, (1, 0, 2)))
    x_2d = x_tbe.reshape(T * Bp, EMB_DIM)                         # time-major
    lens_b1 = jnp.zeros((Bp, 1), jnp.int32).at[:B, 0].set(
        jnp.asarray(seq_lens, jnp.int32))

    # weight packing for wide MXU-friendly matmuls (one-time layout transform)
    wih_cat = jnp.concatenate([params["wih_f"], params["wih_b"]], axis=1)  # (E, 8H)
    whh_bd = jnp.zeros((2 * H, 8 * H), jnp.float32)
    whh_bd = whh_bd.at[:H, :4 * H].set(params["whh_f"])
    whh_bd = whh_bd.at[H:, 4 * H:].set(params["whh_b"])                    # (2H, 8H)
    b_cat = jnp.concatenate([params["b_f"], params["b_b"]], axis=1)        # (1, 8H)
    wht = params["w_h"].T                                                  # (2H, 2H)

    out_2d, feat_2d, h_n, c_n = encoder_pallas(
        x_2d, lens_b1, wih_cat, whh_bd, b_cat, wht)

    out_tb = out_2d.reshape(T, Bp, 2 * H)[:, :B, :]
    feat_tb = feat_2d.reshape(T, Bp, 2 * H)[:, :B, :]
    encoder_outputs = jnp.transpose(out_tb, (1, 0, 2))            # (B, T, 2H)
    encoder_feature = jnp.transpose(feat_tb, (1, 0, 2)).reshape(-1, 2 * H)
    hidden = (h_n[:, :B, :], c_n[:, :B, :])                       # each (2, B, H)
    return encoder_outputs, encoder_feature, hidden


if __name__ == "__main__":
    key = jax.random.PRNGKey(0)
    pkey, ikey = jax.random.split(key)
    params = init_params(pkey)

    B, T_in = 2, 8
    input_ids = jax.random.randint(ikey, (B, T_in), 0, VOCAB, dtype=jnp.int32)
    seq_lens = [8, 5]   # CPU-side lengths, as in pack_padded_sequence

    enc_out, enc_feat, (h_n, c_n) = encoder_forward(params, input_ids, seq_lens)
    jax.block_until_ready((enc_out, enc_feat, h_n, c_n))

    assert enc_out.shape == (B, max(seq_lens), 2 * HIDDEN_DIM)
    assert enc_feat.shape == (B * max(seq_lens), 2 * HIDDEN_DIM)
    assert h_n.shape == (2, B, HIDDEN_DIM) and c_n.shape == (2, B, HIDDEN_DIM)
    # padded-output check: sequence 1 has length 5 -> outputs past t=5 are zero
    assert float(jnp.abs(enc_out[1, 5:, :]).max()) == 0.0
    print("KERNEL_OK")
</pallas_src>

<mosaic_0001>
module attributes {stable_mosaic.version = 11 : i64} {
  func.func @_encoder_kernel(%arg0: i32, %arg1: memref<64x32xf32, #tpu.memory_space<vmem>>, %arg2: memref<8x1xi32, #tpu.memory_space<vmem>>, %arg3: memref<32x256xf32, #tpu.memory_space<vmem>>, %arg4: memref<64x256xf32, #tpu.memory_space<vmem>>, %arg5: memref<1x256xf32, #tpu.memory_space<vmem>>, %arg6: memref<64x64xf32, #tpu.memory_space<vmem>>, %arg7: memref<64x64xf32, #tpu.memory_space<vmem>>, %arg8: memref<64x64xf32, #tpu.memory_space<vmem>>, %arg9: memref<2x8x32xf32, #tpu.memory_space<vmem>>, %arg10: memref<2x8x32xf32, #tpu.memory_space<vmem>>, %arg11: memref<64x256xf32, #tpu.memory_space<vmem>>, %arg12: memref<8x64xf32, #tpu.memory_space<vmem>>, %arg13: memref<8x64xf32, #tpu.memory_space<vmem>>, %arg14: memref<64x32xf32, #tpu.memory_space<vmem>>, %arg15: memref<64x32xf32, #tpu.memory_space<vmem>>) attributes {dimension_semantics = [#tpu.dimension_semantics<arbitrary>], iteration_bounds = array<i64: 1>, scalar_prefetch = 0 : i64, scratch_operands = 5 : i64, tpu.core_type = #tpu.core_type<tc>, window_params = [{pipeline_mode = #tpu.pipeline_mode<synchronous>, transform_indices = @transform_0, window_bounds = array<i64: 64, 32>}, {pipeline_mode = #tpu.pipeline_mode<synchronous>, transform_indices = @transform_1, window_bounds = array<i64: 8, 1>}, {pipeline_mode = #tpu.pipeline_mode<synchronous>, transform_indices = @transform_2, window_bounds = array<i64: 32, 256>}, {pipeline_mode = #tpu.pipeline_mode<synchronous>, transform_indices = @transform_3, window_bounds = array<i64: 64, 256>}, {pipeline_mode = #tpu.pipeline_mode<synchronous>, transform_indices = @transform_4, window_bounds = array<i64: 1, 256>}, {pipeline_mode = #tpu.pipeline_mode<synchronous>, transform_indices = @transform_5, window_bounds = array<i64: 64, 64>}, {pipeline_mode = #tpu.pipeline_mode<synchronous>, transform_indices = @transform_6, window_bounds = array<i64: 64, 64>}, {pipeline_mode = #tpu.pipeline_mode<synchronous>, transform_indices = @transform_7, window_bounds = array<i64: 64, 64>}, {pipeline_mode = #tpu.pipeline_mode<synchronous>, transform_indices = @transform_8, window_bounds = array<i64: 2, 8, 32>}, {pipeline_mode = #tpu.pipeline_mode<synchronous>, transform_indices = @transform_9, window_bounds = array<i64: 2, 8, 32>}]} {
    %c0 = arith.constant 0 : index
    %c0_0 = arith.constant 0 : index
    %0 = vector.load %arg1[%c0, %c0_0] : memref<64x32xf32, #tpu.memory_space<vmem>>, vector<64x32xf32>
    %c0_1 = arith.constant 0 : index
    %c0_2 = arith.constant 0 : index
    %1 = vector.load %arg3[%c0_1, %c0_2] : memref<32x256xf32, #tpu.memory_space<vmem>>, vector<32x256xf32>
    %cst = arith.constant dense<0.000000e+00> : vector<64x256xf32>
    %2 = tpu.matmul %0, %1, %cst {dimension_numbers = #tpu.dot_dimension_numbers<[1], [0], [0], [1], [0, 0, 1, 1], [], []>} : vector<64x32xf32>, vector<32x256xf32>, vector<64x256xf32> -> vector<64x256xf32>
    %c0_3 = arith.constant 0 : index
    %c0_4 = arith.constant 0 : index
    %3 = vector.load %arg5[%c0_3, %c0_4] : memref<1x256xf32, #tpu.memory_space<vmem>>, vector<1x256xf32>
    %4 = vector.broadcast %3 : vector<1x256xf32> to vector<64x256xf32>
    %5 = arith.addf %2, %4 : vector<64x256xf32>
    %c0_5 = arith.constant 0 : index
    %c0_6 = arith.constant 0 : index
    %6 = vector.load %arg11[%c0_5, %c0_6] : memref<64x256xf32, #tpu.memory_space<vmem>>, vector<64x256xf32>
    tpu.vector_store %arg11[%c0_5, %c0_6], %5 {strides = array<i32>} : memref<64x256xf32, #tpu.memory_space<vmem>>, vector<64x256xf32>,
    %c0_7 = arith.constant 0 : index
    %c0_8 = arith.constant 0 : index
    %7 = vector.load %arg2[%c0_7, %c0_8] : memref<8x1xi32, #tpu.memory_space<vmem>>, vector<8x1xi32>
    %cst_9 = arith.constant 0.000000e+00 : f32
    %8 = vector.broadcast %cst_9 : f32 to vector<8x64xf32>
    %c0_10 = arith.constant 0 : index
    %c0_11 = arith.constant 0 : index
    %9 = vector.load %arg12[%c0_10, %c0_11] : memref<8x64xf32, #tpu.memory_space<vmem>>, vector<8x64xf32>
    tpu.vector_store %arg12[%c0_10, %c0_11], %8 {strides = array<i32>} : memref<8x64xf32, #tpu.memory_space<vmem>>, vector<8x64xf32>,
    %cst_12 = arith.constant 0.000000e+00 : f32
    %10 = vector.broadcast %cst_12 : f32 to vector<8x64xf32>
    %c0_13 = arith.constant 0 : index
    %c0_14 = arith.constant 0 : index
    %11 = vector.load %arg13[%c0_13, %c0_14] : memref<8x64xf32, #tpu.memory_space<vmem>>, vector<8x64xf32>
    tpu.vector_store %arg13[%c0_13, %c0_14], %10 {strides = array<i32>} : memref<8x64xf32, #tpu.memory_space<vmem>>, vector<8x64xf32>,
    %c0_15 = arith.constant 0 : index
    %c0_16 = arith.constant 0 : index
    %12 = vector.load %arg12[%c0_15, %c0_16] : memref<8x64xf32, #tpu.memory_space<vmem>>, vector<8x64xf32>
    %c0_17 = arith.constant 0 : index
    %c0_18 = arith.constant 0 : index
    %13 = vector.load %arg13[%c0_17, %c0_18] : memref<8x64xf32, #tpu.memory_space<vmem>>, vector<8x64xf32>
    %c0_19 = arith.constant 0 : index
    %c0_20 = arith.constant 0 : index
    %14 = vector.load %arg4[%c0_19, %c0_20] : memref<64x256xf32, #tpu.memory_space<vmem>>, vector<64x256xf32>
    %cst_21 = arith.constant dense<0.000000e+00> : vector<8x256xf32>
    %15 = tpu.matmul %12, %14, %cst_21 {dimension_numbers = #tpu.dot_dimension_numbers<[1], [0], [0], [1], [0, 0, 1, 1], [], []>} : vector<8x64xf32>, vector<64x256xf32>, vector<8x256xf32> -> vector<8x256xf32>
    %c0_22 = arith.constant 0 : index
    %c0_23 = arith.constant 0 : index
    %16 = vector.load %arg11[%c0_22, %c0_23] : memref<64x256xf32, #tpu.memory_space<vmem>>, vector<8x256xf32>
    %c56 = arith.constant 56 : index
    %c0_24 = arith.constant 0 : index
    %17 = vector.load %arg11[%c56, %c0_24] : memref<64x256xf32, #tpu.memory_space<vmem>>, vector<8x256xf32>
    %18 = vector.extract_strided_slice %16 {offsets = [0, 0], sizes = [8, 128], strides = [1, 1]} : vector<8x256xf32> to vector<8x128xf32>
    %19 = vector.extract_strided_slice %15 {offsets = [0, 0], sizes = [8, 128], strides = [1, 1]} : vector<8x256xf32> to vector<8x128xf32>
    %20 = arith.addf %18, %19 : vector<8x128xf32>
    %21 = vector.extract_strided_slice %17 {offsets = [0, 128], sizes = [8, 128], strides = [1, 1]} : vector<8x256xf32> to vector<8x128xf32>
    %22 = vector.extract_strided_slice %15 {offsets = [0, 128], sizes = [8, 128], strides = [1, 1]} : vector<8x256xf32> to vector<8x128xf32>
    %23 = arith.addf %21, %22 : vector<8x128xf32>
    %24 = vector.extract_strided_slice %13 {offsets = [0, 0], sizes = [8, 32], strides = [1, 1]} : vector<8x64xf32> to vector<8x32xf32>
    %25 = arith.negf %20 : vector<8x128xf32>
    %26 = math.exp %25 : vector<8x128xf32>
    %cst_25 = arith.constant 1.000000e+00 : f32
    %27 = vector.broadcast %cst_25 : f32 to vector<8x128xf32>
    %28 = arith.addf %27, %26 : vector<8x128xf32>
    %29 = arith.divf %27, %28 : vector<8x128xf32>
    %30 = math.tanh %20 : vector<8x128xf32>
    %31 = vector.extract_strided_slice %29 {offsets = [0, 0], sizes = [8, 32], strides = [1, 1]} : vector<8x128xf32> to vector<8x32xf32>
    %32 = vector.extract_strided_slice %29 {offsets = [0, 32], sizes = [8, 32], strides = [1, 1]} : vector<8x128xf32> to vector<8x32xf32>
    %33 = vector.extract_strided_slice %30 {offsets = [0, 64], sizes = [8, 32], strides = [1, 1]} : vector<8x128xf32> to vector<8x32xf32>
    %34 = vector.extract_strided_slice %29 {offsets = [0, 96], sizes = [8, 32], strides = [1, 1]} : vector<8x128xf32> to vector<8x32xf32>
    %35 = arith.mulf %32, %24 : vector<8x32xf32>
    %36 = arith.mulf %31, %33 : vector<8x32xf32>
    %37 = arith.addf %35, %36 : vector<8x32xf32>
    %38 = math.tanh %37 : vector<8x32xf32>
    %39 = arith.mulf %34, %38 : vector<8x32xf32>
    %40 = vector.extract_strided_slice %13 {offsets = [0, 32], sizes = [8, 32], strides = [1, 1]} : vector<8x64xf32> to vector<8x32xf32>
    %41 = arith.negf %23 : vector<8x128xf32>
    %42 = math.exp %41 : vector<8x128xf32>
    %cst_26 = arith.constant 1.000000e+00 : f32
    %43 = vector.broadcast %cst_26 : f32 to vector<8x128xf32>
    %44 = arith.addf %43, %42 : vector<8x128xf32>
    %45 = arith.divf %43, %44 : vector<8x128xf32>
    %46 = math.tanh %23 : vector<8x128xf32>
    %47 = vector.extract_strided_slice %45 {offsets = [0, 0], sizes = [8, 32], strides = [1, 1]} : vector<8x128xf32> to vector<8x32xf32>
    %48 = vector.extract_strided_slice %45 {offsets = [0, 32], sizes = [8, 32], strides = [1, 1]} : vector<8x128xf32> to vector<8x32xf32>
    %49 = vector.extract_strided_slice %46 {offsets = [0, 64], sizes = [8, 32], strides = [1, 1]} : vector<8x128xf32> to vector<8x32xf32>
    %50 = vector.extract_strided_slice %45 {offsets = [0, 96], sizes = [8, 32], strides = [1, 1]} : vector<8x128xf32> to vector<8x32xf32>
    %51 = arith.mulf %48, %40 : vector<8x32xf32>
    %52 = arith.mulf %47, %49 : vector<8x32xf32>
    %53 = arith.addf %51, %52 : vector<8x32xf32>
    %54 = math.tanh %53 : vector<8x32xf32>
    %55 = arith.mulf %50, %54 : vector<8x32xf32>
    %c0_i32 = arith.constant 0 : i32
    %56 = vector.broadcast %c0_i32 : i32 to vector<8x1xi32>
    %57 = arith.cmpi sgt, %7, %56 : vector<8x1xi32>
    %c7_i32 = arith.constant 7 : i32
    %58 = vector.broadcast %c7_i32 : i32 to vector<8x1xi32>
    %59 = arith.cmpi sgt, %7, %58 : vector<8x1xi32>
    %60 = vector.extract_strided_slice %12 {offsets = [0, 0], sizes = [8, 32], strides = [1, 1]} : vector<8x64xf32> to vector<8x32xf32>
    %61 = vector.shape_cast %57 : vector<8x1xi1> to vector<8x1xi1>
    %62 = vector.broadcast %61 : vector<8x1xi1> to vector<8x32xi1>
    %63 = arith.select %62, %39, %60 : vector<8x32xi1>, vector<8x32xf32>
    %64 = vector.extract_strided_slice %13 {offsets = [0, 0], sizes = [8, 32], strides = [1, 1]} : vector<8x64xf32> to vector<8x32xf32>
    %65 = vector.shape_cast %57 : vector<8x1xi1> to vector<8x1xi1>
    %66 = vector.broadcast %65 : vector<8x1xi1> to vector<8x32xi1>
    %67 = arith.select %66, %37, %64 : vector<8x32xi1>, vector<8x32xf32>
    %68 = vector.extract_strided_slice %12 {offsets = [0, 32], sizes = [8, 32], strides = [1, 1]} : vector<8x64xf32> to vector<8x32xf32>
    %69 = vector.shape_cast %59 : vector<8x1xi1> to vector<8x1xi1>
    %70 = vector.broadcast %69 : vector<8x1xi1> to vector<8x32xi1>
    %71 = arith.select %70, %55, %68 : vector<8x32xi1>, vector<8x32xf32>
    %72 = vector.extract_strided_slice %13 {offsets = [0, 32], sizes = [8, 32], strides = [1, 1]} : vector<8x64xf32> to vector<8x32xf32>
    %73 = vector.shape_cast %59 : vector<8x1xi1> to vector<8x1xi1>
    %74 = vector.broadcast %73 : vector<8x1xi1> to vector<8x32xi1>
    %75 = arith.select %74, %53, %72 : vector<8x32xi1>, vector<8x32xf32>
    %76 = tpu.concatenate %63, %71 in 1 : vector<8x32xf32>, vector<8x32xf32> -> vector<8x64xf32>
    %c0_27 = arith.constant 0 : index
    %c0_28 = arith.constant 0 : index
    %77 = vector.load %arg12[%c0_27, %c0_28] : memref<8x64xf32, #tpu.memory_space<vmem>>, vector<8x64xf32>
    tpu.vector_store %arg12[%c0_27, %c0_28], %76 {strides = array<i32>} : memref<8x64xf32, #tpu.memory_space<vmem>>, vector<8x64xf32>,
    %78 = tpu.concatenate %67, %75 in 1 : vector<8x32xf32>, vector<8x32xf32> -> vector<8x64xf32>
    %c0_29 = arith.constant 0 : index
    %c0_30 = arith.constant 0 : index
    %79 = vector.load %arg13[%c0_29, %c0_30] : memref<8x64xf32, #tpu.memory_space<vmem>>, vector<8x64xf32>
    tpu.vector_store %arg13[%c0_29, %c0_30], %78 {strides = array<i32>} : memref<8x64xf32, #tpu.memory_space<vmem>>, vector<8x64xf32>,
    %cst_31 = arith.constant 0.000000e+00 : f32
    %80 = vector.shape_cast %57 : vector<8x1xi1> to vector<8x1xi1>
    %81 = vector.broadcast %80 : vector<8x1xi1> to vector<8x32xi1>
    %82 = vector.broadcast %cst_31 : f32 to vector<8x32xf32>
    %83 = arith.select %81, %39, %82 : vector<8x32xi1>, vector<8x32xf32>
    %c0_32 = arith.constant 0 : index
    %c0_33 = arith.constant 0 : index
    %84 = vector.load %arg14[%c0_32, %c0_33] : memref<64x32xf32, #tpu.memory_space<vmem>>, vector<8x32xf32>
    tpu.vector_store %arg14[%c0_32, %c0_33], %83 {strides = array<i32>} : memref<64x32xf32, #tpu.memory_space<vmem>>, vector<8x32xf32>,
    %cst_34 = arith.constant 0.000000e+00 : f32
    %85 = vector.shape_cast %59 : vector<8x1xi1> to vector<8x1xi1>
    %86 = vector.broadcast %85 : vector<8x1xi1> to vector<8x32xi1>
    %87 = vector.broadcast %cst_34 : f32 to vector<8x32xf32>
    %88 = arith.select %86, %55, %87 : vector<8x32xi1>, vector<8x32xf32>
    %c56_35 = arith.constant 56 : index
    %c0_36 = arith.constant 0 : index
    %89 = vector.load %arg15[%c56_35, %c0_36] : memref<64x32xf32, #tpu.memory_space<vmem>>, vector<8x32xf32>
    tpu.vector_store %arg15[%c56_35, %c0_36], %88 {strides = array<i32>} : memref<64x32xf32, #tpu.memory_space<vmem>>, vector<8x32xf32>,
    %c0_37 = arith.constant 0 : index
    %c0_38 = arith.constant 0 : index
    %90 = vector.load %arg12[%c0_37, %c0_38] : memref<8x64xf32, #tpu.memory_space<vmem>>, vector<8x64xf32>
    %c0_39 = arith.constant 0 : index
    %c0_40 = arith.constant 0 : index
    %91 = vector.load %arg13[%c0_39, %c0_40] : memref<8x64xf32, #tpu.memory_space<vmem>>, vector<8x64xf32>
    %c0_41 = arith.constant 0 : index
    %c0_42 = arith.constant 0 : index
    %92 = vector.load %arg4[%c0_41, %c0_42] : memref<64x256xf32, #tpu.memory_space<vmem>>, vector<64x256xf32>
    %cst_43 = arith.constant dense<0.000000e+00> : vector<8x256xf32>
    %93 = tpu.matmul %90, %92, %cst_43 {dimension_numbers = #tpu.dot_dimension_numbers<[1], [0], [0], [1], [0, 0, 1, 1], [], []>} : vector<8x64xf32>, vector<64x256xf32>, vector<8x256xf32> -> vector<8x256xf32>
    %c8 = arith.constant 8 : index
    %c0_44 = arith.constant 0 : index
    %94 = vector.load %arg11[%c8, %c0_44] : memref<64x256xf32, #tpu.memory_space<vmem>>, vector<8x256xf32>
    %c48 = arith.constant 48 : index
    %c0_45 = arith.constant 0 : index
    %95 = vector.load %arg11[%c48, %c0_45] : memref<64x256xf32, #tpu.memory_space<vmem>>, vector<8x256xf32>
    %96 = vector.extract_strided_slice %94 {offsets = [0, 0], sizes = [8, 128], strides = [1, 1]} : vector<8x256xf32> to vector<8x128xf32>
    %97 = vector.extract_strided_slice %93 {offsets = [0, 0], sizes = [8, 128], strides = [1, 1]} : vector<8x256xf32> to vector<8x128xf32>
    %98 = arith.addf %96, %97 : vector<8x128xf32>
    %99 = vector.extract_strided_slice %95 {offsets = [0, 128], sizes = [8, 128], strides = [1, 1]} : vector<8x256xf32> to vector<8x128xf32>
    %100 = vector.extract_strided_slice %93 {offsets = [0, 128], sizes = [8, 128], strides = [1, 1]} : vector<8x256xf32> to vector<8x128xf32>
    %101 = arith.addf %99, %100 : vector<8x128xf32>
    %102 = vector.extract_strided_slice %91 {offsets = [0, 0], sizes = [8, 32], strides = [1, 1]} : vector<8x64xf32> to vector<8x32xf32>
    %103 = arith.negf %98 : vector<8x128xf32>
    %104 = math.exp %103 : vector<8x128xf32>
    %cst_46 = arith.constant 1.000000e+00 : f32
    %105 = vector.broadcast %cst_46 : f32 to vector<8x128xf32>
    %106 = arith.addf %105, %104 : vector<8x128xf32>
    %107 = arith.divf %105, %106 : vector<8x128xf32>
    %108 = math.tanh %98 : vector<8x128xf32>
    %109 = vector.extract_strided_slice %107 {offsets = [0, 0], sizes = [8, 32], strides = [1, 1]} : vector<8x128xf32> to vector<8x32xf32>
    %110 = vector.extract_strided_slice %107 {offsets = [0, 32], sizes = [8, 32], strides = [1, 1]} : vector<8x128xf32> to vector<8x32xf32>
    %111 = vector.extract_strided_slice %108 {offsets = [0, 64], sizes = [8, 32], strides = [1, 1]} : vector<8x128xf32> to vector<8x32xf32>
    %112 = vector.extract_strided_slice %107 {offsets = [0, 96], sizes = [8, 32], strides = [1, 1]} : vector<8x128xf32> to vector<8x32xf32>
    %113 = arith.mulf %110, %102 : vector<8x32xf32>
    %114 = arith.mulf %109, %111 : vector<8x32xf32>
    %115 = arith.addf %113, %114 : vector<8x32xf32>
    %116 = math.tanh %115 : vector<8x32xf32>
    %117 = arith.mulf %112, %116 : vector<8x32xf32>
    %118 = vector.extract_strided_slice %91 {offsets = [0, 32], sizes = [8, 32], strides = [1, 1]} : vector<8x64xf32> to vector<8x32xf32>
    %119 = arith.negf %101 : vector<8x128xf32>
    %120 = math.exp %119 : vector<8x128xf32>
    %cst_47 = arith.constant 1.000000e+00 : f32
    %121 = vector.broadcast %cst_47 : f32 to vector<8x128xf32>
    %122 = arith.addf %121, %120 : vector<8x128xf32>
    %123 = arith.divf %121, %122 : vector<8x128xf32>
    %124 = math.tanh %101 : vector<8x128xf32>
    %125 = vector.extract_strided_slice %123 {offsets = [0, 0], sizes = [8, 32], strides = [1, 1]} : vector<8x128xf32> to vector<8x32xf32>
    %126 = vector.extract_strided_slice %123 {offsets = [0, 32], sizes = [8, 32], strides = [1, 1]} : vector<8x128xf32> to vector<8x32xf32>
    %127 = vector.extract_strided_slice %124 {offsets = [0, 64], sizes = [8, 32], strides = [1, 1]} : vector<8x128xf32> to vector<8x32xf32>
    %128 = vector.extract_strided_slice %123 {offsets = [0, 96], sizes = [8, 32], strides = [1, 1]} : vector<8x128xf32> to vector<8x32xf32>
    %129 = arith.mulf %126, %118 : vector<8x32xf32>
    %130 = arith.mulf %125, %127 : vector<8x32xf32>
    %131 = arith.addf %129, %130 : vector<8x32xf32>
    %132 = math.tanh %131 : vector<8x32xf32>
    %133 = arith.mulf %128, %132 : vector<8x32xf32>
    %c1_i32 = arith.constant 1 : i32
    %134 = vector.broadcast %c1_i32 : i32 to vector<8x1xi32>
    %135 = arith.cmpi sgt, %7, %134 : vector<8x1xi32>
    %c6_i32 = arith.constant 6 : i32
    %136 = vector.broadcast %c6_i32 : i32 to vector<8x1xi32>
    %137 = arith.cmpi sgt, %7, %136 : vector<8x1xi32>
    %138 = vector.extract_strided_slice %90 {offsets = [0, 0], sizes = [8, 32], strides = [1, 1]} : vector<8x64xf32> to vector<8x32xf32>
    %139 = vector.shape_cast %135 : vector<8x1xi1> to vector<8x1xi1>
    %140 = vector.broadcast %139 : vector<8x1xi1> to vector<8x32xi1>
    %141 = arith.select %140, %117, %138 : vector<8x32xi1>, vector<8x32xf32>
    %142 = vector.extract_strided_slice %91 {offsets = [0, 0], sizes = [8, 32], strides = [1, 1]} : vector<8x64xf32> to vector<8x32xf32>
    %143 = vector.shape_cast %135 : vector<8x1xi1> to vector<8x1xi1>
    %144 = vector.broadcast %143 : vector<8x1xi1> to vector<8x32xi1>
    %145 = arith.select %144, %115, %142 : vector<8x32xi1>, vector<8x32xf32>
    %146 = vector.extract_strided_slice %90 {offsets = [0, 32], sizes = [8, 32], strides = [1, 1]} : vector<8x64xf32> to vector<8x32xf32>
    %147 = vector.shape_cast %137 : vector<8x1xi1> to vector<8x1xi1>
    %148 = vector.broadcast %147 : vector<8x1xi1> to vector<8x32xi1>
    %149 = arith.select %148, %133, %146 : vector<8x32xi1>, vector<8x32xf32>
    %150 = vector.extract_strided_slice %91 {offsets = [0, 32], sizes = [8, 32], strides = [1, 1]} : vector<8x64xf32> to vector<8x32xf32>
    %151 = vector.shape_cast %137 : vector<8x1xi1> to vector<8x1xi1>
    %152 = vector.broadcast %151 : vector<8x1xi1> to vector<8x32xi1>
    %153 = arith.select %152, %131, %150 : vector<8x32xi1>, vector<8x32xf32>
    %154 = tpu.concatenate %141, %149 in 1 : vector<8x32xf32>, vector<8x32xf32> -> vector<8x64xf32>
    %c0_48 = arith.constant 0 : index
    %c0_49 = arith.constant 0 : index
    %155 = vector.load %arg12[%c0_48, %c0_49] : memref<8x64xf32, #tpu.memory_space<vmem>>, vector<8x64xf32>
    tpu.vector_store %arg12[%c0_48, %c0_49], %154 {strides = array<i32>} : memref<8x64xf32, #tpu.memory_space<vmem>>, vector<8x64xf32>,
    %156 = tpu.concatenate %145, %153 in 1 : vector<8x32xf32>, vector<8x32xf32> -> vector<8x64xf32>
    %c0_50 = arith.constant 0 : index
    %c0_51 = arith.constant 0 : index
    %157 = vector.load %arg13[%c0_50, %c0_51] : memref<8x64xf32, #tpu.memory_space<vmem>>, vector<8x64xf32>
    tpu.vector_store %arg13[%c0_50, %c0_51], %156 {strides = array<i32>} : memref<8x64xf32, #tpu.memory_space<vmem>>, vector<8x64xf32>,
    %cst_52 = arith.constant 0.000000e+00 : f32
    %158 = vector.shape_cast %135 : vector<8x1xi1> to vector<8x1xi1>
    %159 = vector.broadcast %158 : vector<8x1xi1> to vector<8x32xi1>
    %160 = vector.broadcast %cst_52 : f32 to vector<8x32xf32>
    %161 = arith.select %159, %117, %160 : vector<8x32xi1>, vector<8x32xf32>
    %c8_53 = arith.constant 8 : index
    %c0_54 = arith.constant 0 : index
    %162 = vector.load %arg14[%c8_53, %c0_54] : memref<64x32xf32, #tpu.memory_space<vmem>>, vector<8x32xf32>
    tpu.vector_store %arg14[%c8_53, %c0_54], %161 {strides = array<i32>} : memref<64x32xf32, #tpu.memory_space<vmem>>, vector<8x32xf32>,
    %cst_55 = arith.constant 0.000000e+00 : f32
    %163 = vector.shape_cast %137 : vector<8x1xi1> to vector<8x1xi1>
    %164 = vector.broadcast %163 : vector<8x1xi1> to vector<8x32xi1>
    %165 = vector.broadcast %cst_55 : f32 to vector<8x32xf32>
    %166 = arith.select %164, %133, %165 : vector<8x32xi1>, vector<8x32xf32>
    %c48_56 = arith.constant 48 : index
    %c0_57 = arith.constant 0 : index
    %167 = vector.load %arg15[%c48_56, %c0_57] : memref<64x32xf32, #tpu.memory_space<vmem>>, vector<8x32xf32>
    tpu.vector_store %arg15[%c48_56, %c0_57], %166 {strides = array<i32>} : memref<64x32xf32, #tpu.memory_space<vmem>>, vector<8x32xf32>,
    %c0_58 = arith.constant 0 : index
    %c0_59 = arith.constant 0 : index
    %168 = vector.load %arg12[%c0_58, %c0_59] : memref<8x64xf32, #tpu.memory_space<vmem>>, vector<8x64xf32>
    %c0_60 = arith.constant 0 : index
    %c0_61 = arith.constant 0 : index
    %169 = vector.load %arg13[%c0_60, %c0_61] : memref<8x64xf32, #tpu.memory_space<vmem>>, vector<8x64xf32>
    %c0_62 = arith.constant 0 : index
    %c0_63 = arith.constant 0 : index
    %170 = vector.load %arg4[%c0_62, %c0_63] : memref<64x256xf32, #tpu.memory_space<vmem>>, vector<64x256xf32>
    %cst_64 = arith.constant dense<0.000000e+00> : vector<8x256xf32>
    %171 = tpu.matmul %168, %170, %cst_64 {dimension_numbers = #tpu.dot_dimension_numbers<[1], [0], [0], [1], [0, 0, 1, 1], [], []>} : vector<8x64xf32>, vector<64x256xf32>, vector<8x256xf32> -> vector<8x256xf32>
    %c16 = arith.constant 16 : index
    %c0_65 = arith.constant 0 : index
    %172 = vector.load %arg11[%c16, %c0_65] : memref<64x256xf32, #tpu.memory_space<vmem>>, vector<8x256xf32>
    %c40 = arith.constant 40 : index
    %c0_66 = arith.constant 0 : index
    %173 = vector.load %arg11[%c40, %c0_66] : memref<64x256xf32, #tpu.memory_space<vmem>>, vector<8x256xf32>
    %174 = vector.extract_strided_slice %172 {offsets = [0, 0], sizes = [8, 128], strides = [1, 1]} : vector<8x256xf32> to vector<8x128xf32>
    %175 = vector.extract_strided_slice %171 {offsets = [0, 0], sizes = [8, 128], strides = [1, 1]} : vector<8x256xf32> to vector<8x128xf32>
    %176 = arith.addf %174, %175 : vector<8x128xf32>
    %177 = vector.extract_strided_slice %173 {offsets = [0, 128], sizes = [8, 128], strides = [1, 1]} : vector<8x256xf32> to vector<8x128xf32>
    %178 = vector.extract_strided_slice %171 {offsets = [0, 128], sizes = [8, 128], strides = [1, 1]} : vector<8x256xf32> to vector<8x128xf32>
    %179 = arith.addf %177, %178 : vector<8x128xf32>
    %180 = vector.extract_strided_slice %169 {offsets = [0, 0], sizes = [8, 32], strides = [1, 1]} : vector<8x64xf32> to vector<8x32xf32>
    %181 = arith.negf %176 : vector<8x128xf32>
    %182 = math.exp %181 : vector<8x128xf32>
    %cst_67 = arith.constant 1.000000e+00 : f32
    %183 = vector.broadcast %cst_67 : f32 to vector<8x128xf32>
    %184 = arith.addf %183, %182 : vector<8x128xf32>
    %185 = arith.divf %183, %184 : vector<8x128xf32>
    %186 = math.tanh %176 : vector<8x128xf32>
    %187 = vector.extract_strided_slice %185 {offsets = [0, 0], sizes = [8, 32], strides = [1, 1]} : vector<8x128xf32> to vector<8x32xf32>
    %188 = vector.extract_strided_slice %185 {offsets = [0, 32], sizes = [8, 32], strides = [1, 1]} : vector<8x128xf32> to vector<8x32xf32>
    %189 = vector.extract_strided_slice %186 {offsets = [0, 64], sizes = [8, 32], strides = [1, 1]} : vector<8x128xf32> to vector<8x32xf32>
    %190 = vector.extract_strided_slice %185 {offsets = [0, 96], sizes = [8, 32], strides = [1, 1]} : vector<8x128xf32> to vector<8x32xf32>
    %191 = arith.mulf %188, %180 : vector<8x32xf32>
    %192 = arith.mulf %187, %189 : vector<8x32xf32>
    %193 = arith.addf %191, %192 : vector<8x32xf32>
    %194 = math.tanh %193 : vector<8x32xf32>
    %195 = arith.mulf %190, %194 : vector<8x32xf32>
    %196 = vector.extract_strided_slice %169 {offsets = [0, 32], sizes = [8, 32], strides = [1, 1]} : vector<8x64xf32> to vector<8x32xf32>
    %197 = arith.negf %179 : vector<8x128xf32>
    %198 = math.exp %197 : vector<8x128xf32>
    %cst_68 = arith.constant 1.000000e+00 : f32
    %199 = vector.broadcast %cst_68 : f32 to vector<8x128xf32>
    %200 = arith.addf %199, %198 : vector<8x128xf32>
    %201 = arith.divf %199, %200 : vector<8x128xf32>
    %202 = math.tanh %179 : vector<8x128xf32>
    %203 = vector.extract_strided_slice %201 {offsets = [0, 0], sizes = [8, 32], strides = [1, 1]} : vector<8x128xf32> to vector<8x32xf32>
    %204 = vector.extract_strided_slice %201 {offsets = [0, 32], sizes = [8, 32], strides = [1, 1]} : vector<8x128xf32> to vector<8x32xf32>
    %205 = vector.extract_strided_slice %202 {offsets = [0, 64], sizes = [8, 32], strides = [1, 1]} : vector<8x128xf32> to vector<8x32xf32>
    %206 = vector.extract_strided_slice %201 {offsets = [0, 96], sizes = [8, 32], strides = [1, 1]} : vector<8x128xf32> to vector<8x32xf32>
    %207 = arith.mulf %204, %196 : vector<8x32xf32>
    %208 = arith.mulf %203, %205 : vector<8x32xf32>
    %209 = arith.addf %207, %208 : vector<8x32xf32>
    %210 = math.tanh %209 : vector<8x32xf32>
    %211 = arith.mulf %206, %210 : vector<8x32xf32>
    %c2_i32 = arith.constant 2 : i32
    %212 = vector.broadcast %c2_i32 : i32 to vector<8x1xi32>
    %213 = arith.cmpi sgt, %7, %212 : vector<8x1xi32>
    %c5_i32 = arith.constant 5 : i32
    %214 = vector.broadcast %c5_i32 : i32 to vector<8x1xi32>
    %215 = arith.cmpi sgt, %7, %214 : vector<8x1xi32>
    %216 = vector.extract_strided_slice %168 {offsets = [0, 0], sizes = [8, 32], strides = [1, 1]} : vector<8x64xf32> to vector<8x32xf32>
    %217 = vector.shape_cast %213 : vector<8x1xi1> to vector<8x1xi1>
    %218 = vector.broadcast %217 : vector<8x1xi1> to vector<8x32xi1>
    %219 = arith.select %218, %195, %216 : vector<8x32xi1>, vector<8x32xf32>
    %220 = vector.extract_strided_slice %169 {offsets = [0, 0], sizes = [8, 32], strides = [1, 1]} : vector<8x64xf32> to vector<8x32xf32>
    %221 = vector.shape_cast %213 : vector<8x1xi1> to vector<8x1xi1>
    %222 = vector.broadcast %221 : vector<8x1xi1> to vector<8x32xi1>
    %223 = arith.select %222, %193, %220 : vector<8x32xi1>, vector<8x32xf32>
    %224 = vector.extract_strided_slice %168 {offsets = [0, 32], sizes = [8, 32], strides = [1, 1]} : vector<8x64xf32> to vector<8x32xf32>
    %225 = vector.shape_cast %215 : vector<8x1xi1> to vector<8x1xi1>
    %226 = vector.broadcast %225 : vector<8x1xi1> to vector<8x32xi1>
    %227 = arith.select %226, %211, %224 : vector<8x32xi1>, vector<8x32xf32>
    %228 = vector.extract_strided_slice %169 {offsets = [0, 32], sizes = [8, 32], strides = [1, 1]} : vector<8x64xf32> to vector<8x32xf32>
    %229 = vector.shape_cast %215 : vector<8x1xi1> to vector<8x1xi1>
    %230 = vector.broadcast %229 : vector<8x1xi1> to vector<8x32xi1>
    %231 = arith.select %230, %209, %228 : vector<8x32xi1>, vector<8x32xf32>
    %232 = tpu.concatenate %219, %227 in 1 : vector<8x32xf32>, vector<8x32xf32> -> vector<8x64xf32>
    %c0_69 = arith.constant 0 : index
    %c0_70 = arith.constant 0 : index
    %233 = vector.load %arg12[%c0_69, %c0_70] : memref<8x64xf32, #tpu.memory_space<vmem>>, vector<8x64xf32>
    tpu.vector_store %arg12[%c0_69, %c0_70], %232 {strides = array<i32>} : memref<8x64xf32, #tpu.memory_space<vmem>>, vector<8x64xf32>,
    %234 = tpu.concatenate %223, %231 in 1 : vector<8x32xf32>, vector<8x32xf32> -> vector<8x64xf32>
    %c0_71 = arith.constant 0 : index
    %c0_72 = arith.constant 0 : index
    %235 = vector.load %arg13[%c0_71, %c0_72] : memref<8x64xf32, #tpu.memory_space<vmem>>, vector<8x64xf32>
    tpu.vector_store %arg13[%c0_71, %c0_72], %234 {strides = array<i32>} : memref<8x64xf32, #tpu.memory_space<vmem>>, vector<8x64xf32>,
    %cst_73 = arith.constant 0.000000e+00 : f32
    %236 = vector.shape_cast %213 : vector<8x1xi1> to vector<8x1xi1>
    %237 = vector.broadcast %236 : vector<8x1xi1> to vector<8x32xi1>
    %238 = vector.broadcast %cst_73 : f32 to vector<8x32xf32>
    %239 = arith.select %237, %195, %238 : vector<8x32xi1>, vector<8x32xf32>
    %c16_74 = arith.constant 16 : index
    %c0_75 = arith.constant 0 : index
    %240 = vector.load %arg14[%c16_74, %c0_75] : memref<64x32xf32, #tpu.memory_space<vmem>>, vector<8x32xf32>
    tpu.vector_store %arg14[%c16_74, %c0_75], %239 {strides = array<i32>} : memref<64x32xf32, #tpu.memory_space<vmem>>, vector<8x32xf32>,
    %cst_76 = arith.constant 0.000000e+00 : f32
    %241 = vector.shape_cast %215 : vector<8x1xi1> to vector<8x1xi1>
    %242 = vector.broadcast %241 : vector<8x1xi1> to vector<8x32xi1>
    %243 = vector.broadcast %cst_76 : f32 to vector<8x32xf32>
    %244 = arith.select %242, %211, %243 : vector<8x32xi1>, vector<8x32xf32>
    %c40_77 = arith.constant 40 : index
    %c0_78 = arith.constant 0 : index
    %245 = vector.load %arg15[%c40_77, %c0_78] : memref<64x32xf32, #tpu.memory_space<vmem>>, vector<8x32xf32>
    tpu.vector_store %arg15[%c40_77, %c0_78], %244 {strides = array<i32>} : memref<64x32xf32, #tpu.memory_space<vmem>>, vector<8x32xf32>,
    %c0_79 = arith.constant 0 : index
    %c0_80 = arith.constant 0 : index
    %246 = vector.load %arg12[%c0_79, %c0_80] : memref<8x64xf32, #tpu.memory_space<vmem>>, vector<8x64xf32>
    %c0_81 = arith.constant 0 : index
    %c0_82 = arith.constant 0 : index
    %247 = vector.load %arg13[%c0_81, %c0_82] : memref<8x64xf32, #tpu.memory_space<vmem>>, vector<8x64xf32>
    %c0_83 = arith.constant 0 : index
    %c0_84 = arith.constant 0 : index
    %248 = vector.load %arg4[%c0_83, %c0_84] : memref<64x256xf32, #tpu.memory_space<vmem>>, vector<64x256xf32>
    %cst_85 = arith.constant dense<0.000000e+00> : vector<8x256xf32>
    %249 = tpu.matmul %246, %248, %cst_85 {dimension_numbers = #tpu.dot_dimension_numbers<[1], [0], [0], [1], [0, 0, 1, 1], [], []>} : vector<8x64xf32>, vector<64x256xf32>, vector<8x256xf32> -> vector<8x256xf32>
    %c24 = arith.constant 24 : index
    %c0_86 = arith.constant 0 : index
    %250 = vector.load %arg11[%c24, %c0_86] : memref<64x256xf32, #tpu.memory_space<vmem>>, vector<8x256xf32>
    %c32 = arith.constant 32 : index
    %c0_87 = arith.constant 0 : index
    %251 = vector.load %arg11[%c32, %c0_87] : memref<64x256xf32, #tpu.memory_space<vmem>>, vector<8x256xf32>
    %252 = vector.extract_strided_slice %250 {offsets = [0, 0], sizes = [8, 128], strides = [1, 1]} : vector<8x256xf32> to vector<8x128xf32>
    %253 = vector.extract_strided_slice %249 {offsets = [0, 0], sizes = [8, 128], strides = [1, 1]} : vector<8x256xf32> to vector<8x128xf32>
    %254 = arith.addf %252, %253 : vector<8x128xf32>
    %255 = vector.extract_strided_slice %251 {offsets = [0, 128], sizes = [8, 128], strides = [1, 1]} : vector<8x256xf32> to vector<8x128xf32>
    %256 = vector.extract_strided_slice %249 {offsets = [0, 128], sizes = [8, 128], strides = [1, 1]} : vector<8x256xf32> to vector<8x128xf32>
    %257 = arith.addf %255, %256 : vector<8x128xf32>
    %258 = vector.extract_strided_slice %247 {offsets = [0, 0], sizes = [8, 32], strides = [1, 1]} : vector<8x64xf32> to vector<8x32xf32>
    %259 = arith.negf %254 : vector<8x128xf32>
    %260 = math.exp %259 : vector<8x128xf32>
    %cst_88 = arith.constant 1.000000e+00 : f32
    %261 = vector.broadcast %cst_88 : f32 to vector<8x128xf32>
    %262 = arith.addf %261, %260 : vector<8x128xf32>
    %263 = arith.divf %261, %262 : vector<8x128xf32>
    %264 = math.tanh %254 : vector<8x128xf32>
    %265 = vector.extract_strided_slice %263 {offsets = [0, 0], sizes = [8, 32], strides = [1, 1]} : vector<8x128xf32> to vector<8x32xf32>
    %266 = vector.extract_strided_slice %263 {offsets = [0, 32], sizes = [8, 32], strides = [1, 1]} : vector<8x128xf32> to vector<8x32xf32>
    %267 = vector.extract_strided_slice %264 {offsets = [0, 64], sizes = [8, 32], strides = [1, 1]} : vector<8x128xf32> to vector<8x32xf32>
    %268 = vector.extract_strided_slice %263 {offsets = [0, 96], sizes = [8, 32], strides = [1, 1]} : vector<8x128xf32> to vector<8x32xf32>
    %269 = arith.mulf %266, %258 : vector<8x32xf32>
    %270 = arith.mulf %265, %267 : vector<8x32xf32>
    %271 = arith.addf %269, %270 : vector<8x32xf32>
    %272 = math.tanh %271 : vector<8x32xf32>
    %273 = arith.mulf %268, %272 : vector<8x32xf32>
    %274 = vector.extract_strided_slice %247 {offsets = [0, 32], sizes = [8, 32], strides = [1, 1]} : vector<8x64xf32> to vector<8x32xf32>
    %275 = arith.negf %257 : vector<8x128xf32>
    %276 = math.exp %275 : vector<8x128xf32>
    %cst_89 = arith.constant 1.000000e+00 : f32
    %277 = vector.broadcast %cst_89 : f32 to vector<8x128xf32>
    %278 = arith.addf %277, %276 : vector<8x128xf32>
    %279 = arith.divf %277, %278 : vector<8x128xf32>
    %280 = math.tanh %257 : vector<8x128xf32>
    %281 = vector.extract_strided_slice %279 {offsets = [0, 0], sizes = [8, 32], strides = [1, 1]} : vector<8x128xf32> to vector<8x32xf32>
    %282 = vector.extract_strided_slice %279 {offsets = [0, 32], sizes = [8, 32], strides = [1, 1]} : vector<8x128xf32> to vector<8x32xf32>
    %283 = vector.extract_strided_slice %280 {offsets = [0, 64], sizes = [8, 32], strides = [1, 1]} : vector<8x128xf32> to vector<8x32xf32>
    %284 = vector.extract_strided_slice %279 {offsets = [0, 96], sizes = [8, 32], strides = [1, 1]} : vector<8x128xf32> to vector<8x32xf32>
    %285 = arith.mulf %282, %274 : vector<8x32xf32>
    %286 = arith.mulf %281, %283 : vector<8x32xf32>
    %287 = arith.addf %285, %286 : vector<8x32xf32>
    %288 = math.tanh %287 : vector<8x32xf32>
    %289 = arith.mulf %284, %288 : vector<8x32xf32>
    %c3_i32 = arith.constant 3 : i32
    %290 = vector.broadcast %c3_i32 : i32 to vector<8x1xi32>
    %291 = arith.cmpi sgt, %7, %290 : vector<8x1xi32>
    %c4_i32 = arith.constant 4 : i32
    %292 = vector.broadcast %c4_i32 : i32 to vector<8x1xi32>
    %293 = arith.cmpi sgt, %7, %292 : vector<8x1xi32>
    %294 = vector.extract_strided_slice %246 {offsets = [0, 0], sizes = [8, 32], strides = [1, 1]} : vector<8x64xf32> to vector<8x32xf32>
    %295 = vector.shape_cast %291 : vector<8x1xi1> to vector<8x1xi1>
    %296 = vector.broadcast %295 : vector<8x1xi1> to vector<8x32xi1>
    %297 = arith.select %296, %273, %294 : vector<8x32xi1>, vector<8x32xf32>
    %298 = vector.extract_strided_slice %247 {offsets = [0, 0], sizes = [8, 32], strides = [1, 1]} : vector<8x64xf32> to vector<8x32xf32>
    %299 = vector.shape_cast %291 : vector<8x1xi1> to vector<8x1xi1>
    %300 = vector.broadcast %299 : vector<8x1xi1> to vector<8x32xi1>
    %301 = arith.select %300, %271, %298 : vector<8x32xi1>, vector<8x32xf32>
    %302 = vector.extract_strided_slice %246 {offsets = [0, 32], sizes = [8, 32], strides = [1, 1]} : vector<8x64xf32> to vector<8x32xf32>
    %303 = vector.shape_cast %293 : vector<8x1xi1> to vector<8x1xi1>
    %304 = vector.broadcast %303 : vector<8x1xi1> to vector<8x32xi1>
    %305 = arith.select %304, %289, %302 : vector<8x32xi1>, vector<8x32xf32>
    %306 = vector.extract_strided_slice %247 {offsets = [0, 32], sizes = [8, 32], strides = [1, 1]} : vector<8x64xf32> to vector<8x32xf32>
    %307 = vector.shape_cast %293 : vector<8x1xi1> to vector<8x1xi1>
    %308 = vector.broadcast %307 : vector<8x1xi1> to vector<8x32xi1>
    %309 = arith.select %308, %287, %306 : vector<8x32xi1>, vector<8x32xf32>
    %310 = tpu.concatenate %297, %305 in 1 : vector<8x32xf32>, vector<8x32xf32> -> vector<8x64xf32>
    %c0_90 = arith.constant 0 : index
    %c0_91 = arith.constant 0 : index
    %311 = vector.load %arg12[%c0_90, %c0_91] : memref<8x64xf32, #tpu.memory_space<vmem>>, vector<8x64xf32>
    tpu.vector_store %arg12[%c0_90, %c0_91], %310 {strides = array<i32>} : memref<8x64xf32, #tpu.memory_space<vmem>>, vector<8x64xf32>,
    %312 = tpu.concatenate %301, %309 in 1 : vector<8x32xf32>, vector<8x32xf32> -> vector<8x64xf32>
    %c0_92 = arith.constant 0 : index
    %c0_93 = arith.constant 0 : index
    %313 = vector.load %arg13[%c0_92, %c0_93] : memref<8x64xf32, #tpu.memory_space<vmem>>, vector<8x64xf32>
    tpu.vector_store %arg13[%c0_92, %c0_93], %312 {strides = array<i32>} : memref<8x64xf32, #tpu.memory_space<vmem>>, vector<8x64xf32>,
    %cst_94 = arith.constant 0.000000e+00 : f32
    %314 = vector.shape_cast %291 : vector<8x1xi1> to vector<8x1xi1>
    %315 = vector.broadcast %314 : vector<8x1xi1> to vector<8x32xi1>
    %316 = vector.broadcast %cst_94 : f32 to vector<8x32xf32>
    %317 = arith.select %315, %273, %316 : vector<8x32xi1>, vector<8x32xf32>
    %c24_95 = arith.constant 24 : index
    %c0_96 = arith.constant 0 : index
    %318 = vector.load %arg14[%c24_95, %c0_96] : memref<64x32xf32, #tpu.memory_space<vmem>>, vector<8x32xf32>
    tpu.vector_store %arg14[%c24_95, %c0_96], %317 {strides = array<i32>} : memref<64x32xf32, #tpu.memory_space<vmem>>, vector<8x32xf32>,
    %cst_97 = arith.constant 0.000000e+00 : f32
    %319 = vector.shape_cast %293 : vector<8x1xi1> to vector<8x1xi1>
    %320 = vector.broadcast %319 : vector<8x1xi1> to vector<8x32xi1>
    %321 = vector.broadcast %cst_97 : f32 to vector<8x32xf32>
    %322 = arith.select %320, %289, %321 : vector<8x32xi1>, vector<8x32xf32>
    %c32_98 = arith.constant 32 : index
    %c0_99 = arith.constant 0 : index
    %323 = vector.load %arg15[%c32_98, %c0_99] : memref<64x32xf32, #tpu.memory_space<vmem>>, vector<8x32xf32>
    tpu.vector_store %arg15[%c32_98, %c0_99], %322 {strides = array<i32>} : memref<64x32xf32, #tpu.memory_space<vmem>>, vector<8x32xf32>,
    %c0_100 = arith.constant 0 : index
    %c0_101 = arith.constant 0 : index
    %324 = vector.load %arg12[%c0_100, %c0_101] : memref<8x64xf32, #tpu.memory_space<vmem>>, vector<8x64xf32>
    %c0_102 = arith.constant 0 : index
    %c0_103 = arith.constant 0 : index
    %325 = vector.load %arg13[%c0_102, %c0_103] : memref<8x64xf32, #tpu.memory_space<vmem>>, vector<8x64xf32>
    %c0_104 = arith.constant 0 : index
    %c0_105 = arith.constant 0 : index
    %326 = vector.load %arg4[%c0_104, %c0_105] : memref<64x256xf32, #tpu.memory_space<vmem>>, vector<64x256xf32>
    %cst_106 = arith.constant dense<0.000000e+00> : vector<8x256xf32>
    %327 = tpu.matmul %324, %326, %cst_106 {dimension_numbers = #tpu.dot_dimension_numbers<[1], [0], [0], [1], [0, 0, 1, 1], [], []>} : vector<8x64xf32>, vector<64x256xf32>, vector<8x256xf32> -> vector<8x256xf32>
    %c32_107 = arith.constant 32 : index
    %c0_108 = arith.constant 0 : index
    %328 = vector.load %arg11[%c32_107, %c0_108] : memref<64x256xf32, #tpu.memory_space<vmem>>, vector<8x256xf32>
    %c24_109 = arith.constant 24 : index
    %c0_110 = arith.constant 0 : index
    %329 = vector.load %arg11[%c24_109, %c0_110] : memref<64x256xf32, #tpu.memory_space<vmem>>, vector<8x256xf32>
    %330 = vector.extract_strided_slice %328 {offsets = [0, 0], sizes = [8, 128], strides = [1, 1]} : vector<8x256xf32> to vector<8x128xf32>
    %331 = vector.extract_strided_slice %327 {offsets = [0, 0], sizes = [8, 128], strides = [1, 1]} : vector<8x256xf32> to vector<8x128xf32>
    %332 = arith.addf %330, %331 : vector<8x128xf32>
    %333 = vector.extract_strided_slice %329 {offsets = [0, 128], sizes = [8, 128], strides = [1, 1]} : vector<8x256xf32> to vector<8x128xf32>
    %334 = vector.extract_strided_slice %327 {offsets = [0, 128], sizes = [8, 128], strides = [1, 1]} : vector<8x256xf32> to vector<8x128xf32>
    %335 = arith.addf %333, %334 : vector<8x128xf32>
    %336 = vector.extract_strided_slice %325 {offsets = [0, 0], sizes = [8, 32], strides = [1, 1]} : vector<8x64xf32> to vector<8x32xf32>
    %337 = arith.negf %332 : vector<8x128xf32>
    %338 = math.exp %337 : vector<8x128xf32>
    %cst_111 = arith.constant 1.000000e+00 : f32
    %339 = vector.broadcast %cst_111 : f32 to vector<8x128xf32>
    %340 = arith.addf %339, %338 : vector<8x128xf32>
    %341 = arith.divf %339, %340 : vector<8x128xf32>
    %342 = math.tanh %332 : vector<8x128xf32>
    %343 = vector.extract_strided_slice %341 {offsets = [0, 0], sizes = [8, 32], strides = [1, 1]} : vector<8x128xf32> to vector<8x32xf32>
    %344 = vector.extract_strided_slice %341 {offsets = [0, 32], sizes = [8, 32], strides = [1, 1]} : vector<8x128xf32> to vector<8x32xf32>
    %345 = vector.extract_strided_slice %342 {offsets = [0, 64], sizes = [8, 32], strides = [1, 1]} : vector<8x128xf32> to vector<8x32xf32>
    %346 = vector.extract_strided_slice %341 {offsets = [0, 96], sizes = [8, 32], strides = [1, 1]} : vector<8x128xf32> to vector<8x32xf32>
    %347 = arith.mulf %344, %336 : vector<8x32xf32>
    %348 = arith.mulf %343, %345 : vector<8x32xf32>
    %349 = arith.addf %347, %348 : vector<8x32xf32>
    %350 = math.tanh %349 : vector<8x32xf32>
    %351 = arith.mulf %346, %350 : vector<8x32xf32>
    %352 = vector.extract_strided_slice %325 {offsets = [0, 32], sizes = [8, 32], strides = [1, 1]} : vector<8x64xf32> to vector<8x32xf32>
    %353 = arith.negf %335 : vector<8x128xf32>
    %354 = math.exp %353 : vector<8x128xf32>
    %cst_112 = arith.constant 1.000000e+00 : f32
    %355 = vector.broadcast %cst_112 : f32 to vector<8x128xf32>
    %356 = arith.addf %355, %354 : vector<8x128xf32>
    %357 = arith.divf %355, %356 : vector<8x128xf32>
    %358 = math.tanh %335 : vector<8x128xf32>
    %359 = vector.extract_strided_slice %357 {offsets = [0, 0], sizes = [8, 32], strides = [1, 1]} : vector<8x128xf32> to vector<8x32xf32>
    %360 = vector.extract_strided_slice %357 {offsets = [0, 32], sizes = [8, 32], strides = [1, 1]} : vector<8x128xf32> to vector<8x32xf32>
    %361 = vector.extract_strided_slice %358 {offsets = [0, 64], sizes = [8, 32], strides = [1, 1]} : vector<8x128xf32> to vector<8x32xf32>
    %362 = vector.extract_strided_slice %357 {offsets = [0, 96], sizes = [8, 32], strides = [1, 1]} : vector<8x128xf32> to vector<8x32xf32>
    %363 = arith.mulf %360, %352 : vector<8x32xf32>
    %364 = arith.mulf %359, %361 : vector<8x32xf32>
    %365 = arith.addf %363, %364 : vector<8x32xf32>
    %366 = math.tanh %365 : vector<8x32xf32>
    %367 = arith.mulf %362, %366 : vector<8x32xf32>
    %c4_i32_113 = arith.constant 4 : i32
    %368 = vector.broadcast %c4_i32_113 : i32 to vector<8x1xi32>
    %369 = arith.cmpi sgt, %7, %368 : vector<8x1xi32>
    %c3_i32_114 = arith.constant 3 : i32
    %370 = vector.broadcast %c3_i32_114 : i32 to vector<8x1xi32>
    %371 = arith.cmpi sgt, %7, %370 : vector<8x1xi32>
    %372 = vector.extract_strided_slice %324 {offsets = [0, 0], sizes = [8, 32], strides = [1, 1]} : vector<8x64xf32> to vector<8x32xf32>
    %373 = vector.shape_cast %369 : vector<8x1xi1> to vector<8x1xi1>
    %374 = vector.broadcast %373 : vector<8x1xi1> to vector<8x32xi1>
    %375 = arith.select %374, %351, %372 : vector<8x32xi1>, vector<8x32xf32>
    %376 = vector.extract_strided_slice %325 {offsets = [0, 0], sizes = [8, 32], strides = [1, 1]} : vector<8x64xf32> to vector<8x32xf32>
    %377 = vector.shape_cast %369 : vector<8x1xi1> to vector<8x1xi1>
    %378 = vector.broadcast %377 : vector<8x1xi1> to vector<8x32xi1>
    %379 = arith.select %378, %349, %376 : vector<8x32xi1>, vector<8x32xf32>
    %380 = vector.extract_strided_slice %324 {offsets = [0, 32], sizes = [8, 32], strides = [1, 1]} : vector<8x64xf32> to vector<8x32xf32>
    %381 = vector.shape_cast %371 : vector<8x1xi1> to vector<8x1xi1>
    %382 = vector.broadcast %381 : vector<8x1xi1> to vector<8x32xi1>
    %383 = arith.select %382, %367, %380 : vector<8x32xi1>, vector<8x32xf32>
    %384 = vector.extract_strided_slice %325 {offsets = [0, 32], sizes = [8, 32], strides = [1, 1]} : vector<8x64xf32> to vector<8x32xf32>
    %385 = vector.shape_cast %371 : vector<8x1xi1> to vector<8x1xi1>
    %386 = vector.broadcast %385 : vector<8x1xi1> to vector<8x32xi1>
    %387 = arith.select %386, %365, %384 : vector<8x32xi1>, vector<8x32xf32>
    %388 = tpu.concatenate %375, %383 in 1 : vector<8x32xf32>, vector<8x32xf32> -> vector<8x64xf32>
    %c0_115 = arith.constant 0 : index
    %c0_116 = arith.constant 0 : index
    %389 = vector.load %arg12[%c0_115, %c0_116] : memref<8x64xf32, #tpu.memory_space<vmem>>, vector<8x64xf32>
    tpu.vector_store %arg12[%c0_115, %c0_116], %388 {strides = array<i32>} : memref<8x64xf32, #tpu.memory_space<vmem>>, vector<8x64xf32>,
    %390 = tpu.concatenate %379, %387 in 1 : vector<8x32xf32>, vector<8x32xf32> -> vector<8x64xf32>
    %c0_117 = arith.constant 0 : index
    %c0_118 = arith.constant 0 : index
    %391 = vector.load %arg13[%c0_117, %c0_118] : memref<8x64xf32, #tpu.memory_space<vmem>>, vector<8x64xf32>
    tpu.vector_store %arg13[%c0_117, %c0_118], %390 {strides = array<i32>} : memref<8x64xf32, #tpu.memory_space<vmem>>, vector<8x64xf32>,
    %cst_119 = arith.constant 0.000000e+00 : f32
    %392 = vector.shape_cast %369 : vector<8x1xi1> to vector<8x1xi1>
    %393 = vector.broadcast %392 : vector<8x1xi1> to vector<8x32xi1>
    %394 = vector.broadcast %cst_119 : f32 to vector<8x32xf32>
    %395 = arith.select %393, %351, %394 : vector<8x32xi1>, vector<8x32xf32>
    %c32_120 = arith.constant 32 : index
    %c0_121 = arith.constant 0 : index
    %396 = vector.load %arg14[%c32_120, %c0_121] : memref<64x32xf32, #tpu.memory_space<vmem>>, vector<8x32xf32>
    tpu.vector_store %arg14[%c32_120, %c0_121], %395 {strides = array<i32>} : memref<64x32xf32, #tpu.memory_space<vmem>>, vector<8x32xf32>,
    %cst_122 = arith.constant 0.000000e+00 : f32
    %397 = vector.shape_cast %371 : vector<8x1xi1> to vector<8x1xi1>
    %398 = vector.broadcast %397 : vector<8x1xi1> to vector<8x32xi1>
    %399 = vector.broadcast %cst_122 : f32 to vector<8x32xf32>
    %400 = arith.select %398, %367, %399 : vector<8x32xi1>, vector<8x32xf32>
    %c24_123 = arith.constant 24 : index
    %c0_124 = arith.constant 0 : index
    %401 = vector.load %arg15[%c24_123, %c0_124] : memref<64x32xf32, #tpu.memory_space<vmem>>, vector<8x32xf32>
    tpu.vector_store %arg15[%c24_123, %c0_124], %400 {strides = array<i32>} : memref<64x32xf32, #tpu.memory_space<vmem>>, vector<8x32xf32>,
    %c0_125 = arith.constant 0 : index
    %c0_126 = arith.constant 0 : index
    %402 = vector.load %arg12[%c0_125, %c0_126] : memref<8x64xf32, #tpu.memory_space<vmem>>, vector<8x64xf32>
    %c0_127 = arith.constant 0 : index
    %c0_128 = arith.constant 0 : index
    %403 = vector.load %arg13[%c0_127, %c0_128] : memref<8x64xf32, #tpu.memory_space<vmem>>, vector<8x64xf32>
    %c0_129 = arith.constant 0 : index
    %c0_130 = arith.constant 0 : index
    %404 = vector.load %arg4[%c0_129, %c0_130] : memref<64x256xf32, #tpu.memory_space<vmem>>, vector<64x256xf32>
    %cst_131 = arith.constant dense<0.000000e+00> : vector<8x256xf32>
    %405 = tpu.matmul %402, %404, %cst_131 {dimension_numbers = #tpu.dot_dimension_numbers<[1], [0], [0], [1], [0, 0, 1, 1], [], []>} : vector<8x64xf32>, vector<64x256xf32>, vector<8x256xf32> -> vector<8x256xf32>
    %c40_132 = arith.constant 40 : index
    %c0_133 = arith.constant 0 : index
    %406 = vector.load %arg11[%c40_132, %c0_133] : memref<64x256xf32, #tpu.memory_space<vmem>>, vector<8x256xf32>
    %c16_134 = arith.constant 16 : index
    %c0_135 = arith.constant 0 : index
    %407 = vector.load %arg11[%c16_134, %c0_135] : memref<64x256xf32, #tpu.memory_space<vmem>>, vector<8x256xf32>
    %408 = vector.extract_strided_slice %406 {offsets = [0, 0], sizes = [8, 128], strides = [1, 1]} : vector<8x256xf32> to vector<8x128xf32>
    %409 = vector.extract_strided_slice %405 {offsets = [0, 0], sizes = [8, 128], strides = [1, 1]} : vector<8x256xf32> to vector<8x128xf32>
    %410 = arith.addf %408, %409 : vector<8x128xf32>
    %411 = vector.extract_strided_slice %407 {offsets = [0, 128], sizes = [8, 128], strides = [1, 1]} : vector<8x256xf32> to vector<8x128xf32>
    %412 = vector.extract_strided_slice %405 {offsets = [0, 128], sizes = [8, 128], strides = [1, 1]} : vector<8x256xf32> to vector<8x128xf32>
    %413 = arith.addf %411, %412 : vector<8x128xf32>
    %414 = vector.extract_strided_slice %403 {offsets = [0, 0], sizes = [8, 32], strides = [1, 1]} : vector<8x64xf32> to vector<8x32xf32>
    %415 = arith.negf %410 : vector<8x128xf32>
    %416 = math.exp %415 : vector<8x128xf32>
    %cst_136 = arith.constant 1.000000e+00 : f32
    %417 = vector.broadcast %cst_136 : f32 to vector<8x128xf32>
    %418 = arith.addf %417, %416 : vector<8x128xf32>
    %419 = arith.divf %417, %418 : vector<8x128xf32>
    %420 = math.tanh %410 : vector<8x128xf32>
    %421 = vector.extract_strided_slice %419 {offsets = [0, 0], sizes = [8, 32], strides = [1, 1]} : vector<8x128xf32> to vector<8x32xf32>
    %422 = vector.extract_strided_slice %419 {offsets = [0, 32], sizes = [8, 32], strides = [1, 1]} : vector<8x128xf32> to vector<8x32xf32>
    %423 = vector.extract_strided_slice %420 {offsets = [0, 64], sizes = [8, 32], strides = [1, 1]} : vector<8x128xf32> to vector<8x32xf32>
    %424 = vector.extract_strided_slice %419 {offsets = [0, 96], sizes = [8, 32], strides = [1, 1]} : vector<8x128xf32> to vector<8x32xf32>
    %425 = arith.mulf %422, %414 : vector<8x32xf32>
    %426 = arith.mulf %421, %423 : vector<8x32xf32>
    %427 = arith.addf %425, %426 : vector<8x32xf32>
    %428 = math.tanh %427 : vector<8x32xf32>
    %429 = arith.mulf %424, %428 : vector<8x32xf32>
    %430 = vector.extract_strided_slice %403 {offsets = [0, 32], sizes = [8, 32], strides = [1, 1]} : vector<8x64xf32> to vector<8x32xf32>
    %431 = arith.negf %413 : vector<8x128xf32>
    %432 = math.exp %431 : vector<8x128xf32>
    %cst_137 = arith.constant 1.000000e+00 : f32
    %433 = vector.broadcast %cst_137 : f32 to vector<8x128xf32>
    %434 = arith.addf %433, %432 : vector<8x128xf32>
    %435 = arith.divf %433, %434 : vector<8x128xf32>
    %436 = math.tanh %413 : vector<8x128xf32>
    %437 = vector.extract_strided_slice %435 {offsets = [0, 0], sizes = [8, 32], strides = [1, 1]} : vector<8x128xf32> to vector<8x32xf32>
    %438 = vector.extract_strided_slice %435 {offsets = [0, 32], sizes = [8, 32], strides = [1, 1]} : vector<8x128xf32> to vector<8x32xf32>
    %439 = vector.extract_strided_slice %436 {offsets = [0, 64], sizes = [8, 32], strides = [1, 1]} : vector<8x128xf32> to vector<8x32xf32>
    %440 = vector.extract_strided_slice %435 {offsets = [0, 96], sizes = [8, 32], strides = [1, 1]} : vector<8x128xf32> to vector<8x32xf32>
    %441 = arith.mulf %438, %430 : vector<8x32xf32>
    %442 = arith.mulf %437, %439 : vector<8x32xf32>
    %443 = arith.addf %441, %442 : vector<8x32xf32>
    %444 = math.tanh %443 : vector<8x32xf32>
    %445 = arith.mulf %440, %444 : vector<8x32xf32>
    %c5_i32_138 = arith.constant 5 : i32
    %446 = vector.broadcast %c5_i32_138 : i32 to vector<8x1xi32>
    %447 = arith.cmpi sgt, %7, %446 : vector<8x1xi32>
    %c2_i32_139 = arith.constant 2 : i32
    %448 = vector.broadcast %c2_i32_139 : i32 to vector<8x1xi32>
    %449 = arith.cmpi sgt, %7, %448 : vector<8x1xi32>
    %450 = vector.extract_strided_slice %402 {offsets = [0, 0], sizes = [8, 32], strides = [1, 1]} : vector<8x64xf32> to vector<8x32xf32>
    %451 = vector.shape_cast %447 : vector<8x1xi1> to vector<8x1xi1>
    %452 = vector.broadcast %451 : vector<8x1xi1> to vector<8x32xi1>
    %453 = arith.select %452, %429, %450 : vector<8x32xi1>, vector<8x32xf32>
    %454 = vector.extract_strided_slice %403 {offsets = [0, 0], sizes = [8, 32], strides = [1, 1]} : vector<8x64xf32> to vector<8x32xf32>
    %455 = vector.shape_cast %447 : vector<8x1xi1> to vector<8x1xi1>
    %456 = vector.broadcast %455 : vector<8x1xi1> to vector<8x32xi1>
    %457 = arith.select %456, %427, %454 : vector<8x32xi1>, vector<8x32xf32>
    %458 = vector.extract_strided_slice %402 {offsets = [0, 32], sizes = [8, 32], strides = [1, 1]} : vector<8x64xf32> to vector<8x32xf32>
    %459 = vector.shape_cast %449 : vector<8x1xi1> to vector<8x1xi1>
    %460 = vector.broadcast %459 : vector<8x1xi1> to vector<8x32xi1>
    %461 = arith.select %460, %445, %458 : vector<8x32xi1>, vector<8x32xf32>
    %462 = vector.extract_strided_slice %403 {offsets = [0, 32], sizes = [8, 32], strides = [1, 1]} : vector<8x64xf32> to vector<8x32xf32>
    %463 = vector.shape_cast %449 : vector<8x1xi1> to vector<8x1xi1>
    %464 = vector.broadcast %463 : vector<8x1xi1> to vector<8x32xi1>
    %465 = arith.select %464, %443, %462 : vector<8x32xi1>, vector<8x32xf32>
    %466 = tpu.concatenate %453, %461 in 1 : vector<8x32xf32>, vector<8x32xf32> -> vector<8x64xf32>
    %c0_140 = arith.constant 0 : index
    %c0_141 = arith.constant 0 : index
    %467 = vector.load %arg12[%c0_140, %c0_141] : memref<8x64xf32, #tpu.memory_space<vmem>>, vector<8x64xf32>
    tpu.vector_store %arg12[%c0_140, %c0_141], %466 {strides = array<i32>} : memref<8x64xf32, #tpu.memory_space<vmem>>, vector<8x64xf32>,
    %468 = tpu.concatenate %457, %465 in 1 : vector<8x32xf32>, vector<8x32xf32> -> vector<8x64xf32>
    %c0_142 = arith.constant 0 : index
    %c0_143 = arith.constant 0 : index
    %469 = vector.load %arg13[%c0_142, %c0_143] : memref<8x64xf32, #tpu.memory_space<vmem>>, vector<8x64xf32>
    tpu.vector_store %arg13[%c0_142, %c0_143], %468 {strides = array<i32>} : memref<8x64xf32, #tpu.memory_space<vmem>>, vector<8x64xf32>,
    %cst_144 = arith.constant 0.000000e+00 : f32
    %470 = vector.shape_cast %447 : vector<8x1xi1> to vector<8x1xi1>
    %471 = vector.broadcast %470 : vector<8x1xi1> to vector<8x32xi1>
    %472 = vector.broadcast %cst_144 : f32 to vector<8x32xf32>
    %473 = arith.select %471, %429, %472 : vector<8x32xi1>, vector<8x32xf32>
    %c40_145 = arith.constant 40 : index
    %c0_146 = arith.constant 0 : index
    %474 = vector.load %arg14[%c40_145, %c0_146] : memref<64x32xf32, #tpu.memory_space<vmem>>, vector<8x32xf32>
    tpu.vector_store %arg14[%c40_145, %c0_146], %473 {strides = array<i32>} : memref<64x32xf32, #tpu.memory_space<vmem>>, vector<8x32xf32>,
    %cst_147 = arith.constant 0.000000e+00 : f32
    %475 = vector.shape_cast %449 : vector<8x1xi1> to vector<8x1xi1>
    %476 = vector.broadcast %475 : vector<8x1xi1> to vector<8x32xi1>
    %477 = vector.broadcast %cst_147 : f32 to vector<8x32xf32>
    %478 = arith.select %476, %445, %477 : vector<8x32xi1>, vector<8x32xf32>
    %c16_148 = arith.constant 16 : index
    %c0_149 = arith.constant 0 : index
    %479 = vector.load %arg15[%c16_148, %c0_149] : memref<64x32xf32, #tpu.memory_space<vmem>>, vector<8x32xf32>
    tpu.vector_store %arg15[%c16_148, %c0_149], %478 {strides = array<i32>} : memref<64x32xf32, #tpu.memory_space<vmem>>, vector<8x32xf32>,
    %c0_150 = arith.constant 0 : index
    %c0_151 = arith.constant 0 : index
    %480 = vector.load %arg12[%c0_150, %c0_151] : memref<8x64xf32, #tpu.memory_space<vmem>>, vector<8x64xf32>
    %c0_152 = arith.constant 0 : index
    %c0_153 = arith.constant 0 : index
    %481 = vector.load %arg13[%c0_152, %c0_153] : memref<8x64xf32, #tpu.memory_space<vmem>>, vector<8x64xf32>
    %c0_154 = arith.constant 0 : index
    %c0_155 = arith.constant 0 : index
    %482 = vector.load %arg4[%c0_154, %c0_155] : memref<64x256xf32, #tpu.memory_space<vmem>>, vector<64x256xf32>
    %cst_156 = arith.constant dense<0.000000e+00> : vector<8x256xf32>
    %483 = tpu.matmul %480, %482, %cst_156 {dimension_numbers = #tpu.dot_dimension_numbers<[1], [0], [0], [1], [0, 0, 1, 1], [], []>} : vector<8x64xf32>, vector<64x256xf32>, vector<8x256xf32> -> vector<8x256xf32>
    %c48_157 = arith.constant 48 : index
    %c0_158 = arith.constant 0 : index
    %484 = vector.load %arg11[%c48_157, %c0_158] : memref<64x256xf32, #tpu.memory_space<vmem>>, vector<8x256xf32>
    %c8_159 = arith.constant 8 : index
    %c0_160 = arith.constant 0 : index
    %485 = vector.load %arg11[%c8_159, %c0_160] : memref<64x256xf32, #tpu.memory_space<vmem>>, vector<8x256xf32>
    %486 = vector.extract_strided_slice %484 {offsets = [0, 0], sizes = [8, 128], strides = [1, 1]} : vector<8x256xf32> to vector<8x128xf32>
    %487 = vector.extract_strided_slice %483 {offsets = [0, 0], sizes = [8, 128], strides = [1, 1]} : vector<8x256xf32> to vector<8x128xf32>
    %488 = arith.addf %486, %487 : vector<8x128xf32>
    %489 = vector.extract_strided_slice %485 {offsets = [0, 128], sizes = [8, 128], strides = [1, 1]} : vector<8x256xf32> to vector<8x128xf32>
    %490 = vector.extract_strided_slice %483 {offsets = [0, 128], sizes = [8, 128], strides = [1, 1]} : vector<8x256xf32> to vector<8x128xf32>
    %491 = arith.addf %489, %490 : vector<8x128xf32>
    %492 = vector.extract_strided_slice %481 {offsets = [0, 0], sizes = [8, 32], strides = [1, 1]} : vector<8x64xf32> to vector<8x32xf32>
    %493 = arith.negf %488 : vector<8x128xf32>
    %494 = math.exp %493 : vector<8x128xf32>
    %cst_161 = arith.constant 1.000000e+00 : f32
    %495 = vector.broadcast %cst_161 : f32 to vector<8x128xf32>
    %496 = arith.addf %495, %494 : vector<8x128xf32>
    %497 = arith.divf %495, %496 : vector<8x128xf32>
    %498 = math.tanh %488 : vector<8x128xf32>
    %499 = vector.extract_strided_slice %497 {offsets = [0, 0], sizes = [8, 32], strides = [1, 1]} : vector<8x128xf32> to vector<8x32xf32>
    %500 = vector.extract_strided_slice %497 {offsets = [0, 32], sizes = [8, 32], strides = [1, 1]} : vector<8x128xf32> to vector<8x32xf32>
    %501 = vector.extract_strided_slice %498 {offsets = [0, 64], sizes = [8, 32], strides = [1, 1]} : vector<8x128xf32> to vector<8x32xf32>
    %502 = vector.extract_strided_slice %497 {offsets = [0, 96], sizes = [8, 32], strides = [1, 1]} : vector<8x128xf32> to vector<8x32xf32>
    %503 = arith.mulf %500, %492 : vector<8x32xf32>
    %504 = arith.mulf %499, %501 : vector<8x32xf32>
    %505 = arith.addf %503, %504 : vector<8x32xf32>
    %506 = math.tanh %505 : vector<8x32xf32>
    %507 = arith.mulf %502, %506 : vector<8x32xf32>
    %508 = vector.extract_strided_slice %481 {offsets = [0, 32], sizes = [8, 32], strides = [1, 1]} : vector<8x64xf32> to vector<8x32xf32>
    %509 = arith.negf %491 : vector<8x128xf32>
    %510 = math.exp %509 : vector<8x128xf32>
    %cst_162 = arith.constant 1.000000e+00 : f32
    %511 = vector.broadcast %cst_162 : f32 to vector<8x128xf32>
    %512 = arith.addf %511, %510 : vector<8x128xf32>
    %513 = arith.divf %511, %512 : vector<8x128xf32>
    %514 = math.tanh %491 : vector<8x128xf32>
    %515 = vector.extract_strided_slice %513 {offsets = [0, 0], sizes = [8, 32], strides = [1, 1]} : vector<8x128xf32> to vector<8x32xf32>
    %516 = vector.extract_strided_slice %513 {offsets = [0, 32], sizes = [8, 32], strides = [1, 1]} : vector<8x128xf32> to vector<8x32xf32>
    %517 = vector.extract_strided_slice %514 {offsets = [0, 64], sizes = [8, 32], strides = [1, 1]} : vector<8x128xf32> to vector<8x32xf32>
    %518 = vector.extract_strided_slice %513 {offsets = [0, 96], sizes = [8, 32], strides = [1, 1]} : vector<8x128xf32> to vector<8x32xf32>
    %519 = arith.mulf %516, %508 : vector<8x32xf32>
    %520 = arith.mulf %515, %517 : vector<8x32xf32>
    %521 = arith.addf %519, %520 : vector<8x32xf32>
    %522 = math.tanh %521 : vector<8x32xf32>
    %523 = arith.mulf %518, %522 : vector<8x32xf32>
    %c6_i32_163 = arith.constant 6 : i32
    %524 = vector.broadcast %c6_i32_163 : i32 to vector<8x1xi32>
    %525 = arith.cmpi sgt, %7, %524 : vector<8x1xi32>
    %c1_i32_164 = arith.constant 1 : i32
    %526 = vector.broadcast %c1_i32_164 : i32 to vector<8x1xi32>
    %527 = arith.cmpi sgt, %7, %526 : vector<8x1xi32>
    %528 = vector.extract_strided_slice %480 {offsets = [0, 0], sizes = [8, 32], strides = [1, 1]} : vector<8x64xf32> to vector<8x32xf32>
    %529 = vector.shape_cast %525 : vector<8x1xi1> to vector<8x1xi1>
    %530 = vector.broadcast %529 : vector<8x1xi1> to vector<8x32xi1>
    %531 = arith.select %530, %507, %528 : vector<8x32xi1>, vector<8x32xf32>
    %532 = vector.extract_strided_slice %481 {offsets = [0, 0], sizes = [8, 32], strides = [1, 1]} : vector<8x64xf32> to vector<8x32xf32>
    %533 = vector.shape_cast %525 : vector<8x1xi1> to vector<8x1xi1>
    %534 = vector.broadcast %533 : vector<8x1xi1> to vector<8x32xi1>
    %535 = arith.select %534, %505, %532 : vector<8x32xi1>, vector<8x32xf32>
    %536 = vector.extract_strided_slice %480 {offsets = [0, 32], sizes = [8, 32], strides = [1, 1]} : vector<8x64xf32> to vector<8x32xf32>
    %537 = vector.shape_cast %527 : vector<8x1xi1> to vector<8x1xi1>
    %538 = vector.broadcast %537 : vector<8x1xi1> to vector<8x32xi1>
    %539 = arith.select %538, %523, %536 : vector<8x32xi1>, vector<8x32xf32>
    %540 = vector.extract_strided_slice %481 {offsets = [0, 32], sizes = [8, 32], strides = [1, 1]} : vector<8x64xf32> to vector<8x32xf32>
    %541 = vector.shape_cast %527 : vector<8x1xi1> to vector<8x1xi1>
    %542 = vector.broadcast %541 : vector<8x1xi1> to vector<8x32xi1>
    %543 = arith.select %542, %521, %540 : vector<8x32xi1>, vector<8x32xf32>
    %544 = tpu.concatenate %531, %539 in 1 : vector<8x32xf32>, vector<8x32xf32> -> vector<8x64xf32>
    %c0_165 = arith.constant 0 : index
    %c0_166 = arith.constant 0 : index
    %545 = vector.load %arg12[%c0_165, %c0_166] : memref<8x64xf32, #tpu.memory_space<vmem>>, vector<8x64xf32>
    tpu.vector_store %arg12[%c0_165, %c0_166], %544 {strides = array<i32>} : memref<8x64xf32, #tpu.memory_space<vmem>>, vector<8x64xf32>,
    %546 = tpu.concatenate %535, %543 in 1 : vector<8x32xf32>, vector<8x32xf32> -> vector<8x64xf32>
    %c0_167 = arith.constant 0 : index
    %c0_168 = arith.constant 0 : index
    %547 = vector.load %arg13[%c0_167, %c0_168] : memref<8x64xf32, #tpu.memory_space<vmem>>, vector<8x64xf32>
    tpu.vector_store %arg13[%c0_167, %c0_168], %546 {strides = array<i32>} : memref<8x64xf32, #tpu.memory_space<vmem>>, vector<8x64xf32>,
    %cst_169 = arith.constant 0.000000e+00 : f32
    %548 = vector.shape_cast %525 : vector<8x1xi1> to vector<8x1xi1>
    %549 = vector.broadcast %548 : vector<8x1xi1> to vector<8x32xi1>
    %550 = vector.broadcast %cst_169 : f32 to vector<8x32xf32>
    %551 = arith.select %549, %507, %550 : vector<8x32xi1>, vector<8x32xf32>
    %c48_170 = arith.constant 48 : index
    %c0_171 = arith.constant 0 : index
    %552 = vector.load %arg14[%c48_170, %c0_171] : memref<64x32xf32, #tpu.memory_space<vmem>>, vector<8x32xf32>
    tpu.vector_store %arg14[%c48_170, %c0_171], %551 {strides = array<i32>} : memref<64x32xf32, #tpu.memory_space<vmem>>, vector<8x32xf32>,
    %cst_172 = arith.constant 0.000000e+00 : f32
    %553 = vector.shape_cast %527 : vector<8x1xi1> to vector<8x1xi1>
    %554 = vector.broadcast %553 : vector<8x1xi1> to vector<8x32xi1>
    %555 = vector.broadcast %cst_172 : f32 to vector<8x32xf32>
    %556 = arith.select %554, %523, %555 : vector<8x32xi1>, vector<8x32xf32>
    %c8_173 = arith.constant 8 : index
    %c0_174 = arith.constant 0 : index
    %557 = vector.load %arg15[%c8_173, %c0_174] : memref<64x32xf32, #tpu.memory_space<vmem>>, vector<8x32xf32>
    tpu.vector_store %arg15[%c8_173, %c0_174], %556 {strides = array<i32>} : memref<64x32xf32, #tpu.memory_space<vmem>>, vector<8x32xf32>,
    %c0_175 = arith.constant 0 : index
    %c0_176 = arith.constant 0 : index
    %558 = vector.load %arg12[%c0_175, %c0_176] : memref<8x64xf32, #tpu.memory_space<vmem>>, vector<8x64xf32>
    %c0_177 = arith.constant 0 : index
    %c0_178 = arith.constant 0 : index
    %559 = vector.load %arg13[%c0_177, %c0_178] : memref<8x64xf32, #tpu.memory_space<vmem>>, vector<8x64xf32>
    %c0_179 = arith.constant 0 : index
    %c0_180 = arith.constant 0 : index
    %560 = vector.load %arg4[%c0_179, %c0_180] : memref<64x256xf32, #tpu.memory_space<vmem>>, vector<64x256xf32>
    %cst_181 = arith.constant dense<0.000000e+00> : vector<8x256xf32>
    %561 = tpu.matmul %558, %560, %cst_181 {dimension_numbers = #tpu.dot_dimension_numbers<[1], [0], [0], [1], [0, 0, 1, 1], [], []>} : vector<8x64xf32>, vector<64x256xf32>, vector<8x256xf32> -> vector<8x256xf32>
    %c56_182 = arith.constant 56 : index
    %c0_183 = arith.constant 0 : index
    %562 = vector.load %arg11[%c56_182, %c0_183] : memref<64x256xf32, #tpu.memory_space<vmem>>, vector<8x256xf32>
    %c0_184 = arith.constant 0 : index
    %c0_185 = arith.constant 0 : index
    %563 = vector.load %arg11[%c0_184, %c0_185] : memref<64x256xf32, #tpu.memory_space<vmem>>, vector<8x256xf32>
    %564 = vector.extract_strided_slice %562 {offsets = [0, 0], sizes = [8, 128], strides = [1, 1]} : vector<8x256xf32> to vector<8x128xf32>
    %565 = vector.extract_strided_slice %561 {offsets = [0, 0], sizes = [8, 128], strides = [1, 1]} : vector<8x256xf32> to vector<8x128xf32>
    %566 = arith.addf %564, %565 : vector<8x128xf32>
    %567 = vector.extract_strided_slice %563 {offsets = [0, 128], sizes = [8, 128], strides = [1, 1]} : vector<8x256xf32> to vector<8x128xf32>
    %568 = vector.extract_strided_slice %561 {offsets = [0, 128], sizes = [8, 128], strides = [1, 1]} : vector<8x256xf32> to vector<8x128xf32>
    %569 = arith.addf %567, %568 : vector<8x128xf32>
    %570 = vector.extract_strided_slice %559 {offsets = [0, 0], sizes = [8, 32], strides = [1, 1]} : vector<8x64xf32> to vector<8x32xf32>
    %571 = arith.negf %566 : vector<8x128xf32>
    %572 = math.exp %571 : vector<8x128xf32>
    %cst_186 = arith.constant 1.000000e+00 : f32
    %573 = vector.broadcast %cst_186 : f32 to vector<8x128xf32>
    %574 = arith.addf %573, %572 : vector<8x128xf32>
    %575 = arith.divf %573, %574 : vector<8x128xf32>
    %576 = math.tanh %566 : vector<8x128xf32>
    %577 = vector.extract_strided_slice %575 {offsets = [0, 0], sizes = [8, 32], strides = [1, 1]} : vector<8x128xf32> to vector<8x32xf32>
    %578 = vector.extract_strided_slice %575 {offsets = [0, 32], sizes = [8, 32], strides = [1, 1]} : vector<8x128xf32> to vector<8x32xf32>
    %579 = vector.extract_strided_slice %576 {offsets = [0, 64], sizes = [8, 32], strides = [1, 1]} : vector<8x128xf32> to vector<8x32xf32>
    %580 = vector.extract_strided_slice %575 {offsets = [0, 96], sizes = [8, 32], strides = [1, 1]} : vector<8x128xf32> to vector<8x32xf32>
    %581 = arith.mulf %578, %570 : vector<8x32xf32>
    %582 = arith.mulf %577, %579 : vector<8x32xf32>
    %583 = arith.addf %581, %582 : vector<8x32xf32>
    %584 = math.tanh %583 : vector<8x32xf32>
    %585 = arith.mulf %580, %584 : vector<8x32xf32>
    %586 = vector.extract_strided_slice %559 {offsets = [0, 32], sizes = [8, 32], strides = [1, 1]} : vector<8x64xf32> to vector<8x32xf32>
    %587 = arith.negf %569 : vector<8x128xf32>
    %588 = math.exp %587 : vector<8x128xf32>
    %cst_187 = arith.constant 1.000000e+00 : f32
    %589 = vector.broadcast %cst_187 : f32 to vector<8x128xf32>
    %590 = arith.addf %589, %588 : vector<8x128xf32>
    %591 = arith.divf %589, %590 : vector<8x128xf32>
    %592 = math.tanh %569 : vector<8x128xf32>
    %593 = vector.extract_strided_slice %591 {offsets = [0, 0], sizes = [8, 32], strides = [1, 1]} : vector<8x128xf32> to vector<8x32xf32>
    %594 = vector.extract_strided_slice %591 {offsets = [0, 32], sizes = [8, 32], strides = [1, 1]} : vector<8x128xf32> to vector<8x32xf32>
    %595 = vector.extract_strided_slice %592 {offsets = [0, 64], sizes = [8, 32], strides = [1, 1]} : vector<8x128xf32> to vector<8x32xf32>
    %596 = vector.extract_strided_slice %591 {offsets = [0, 96], sizes = [8, 32], strides = [1, 1]} : vector<8x128xf32> to vector<8x32xf32>
    %597 = arith.mulf %594, %586 : vector<8x32xf32>
    %598 = arith.mulf %593, %595 : vector<8x32xf32>
    %599 = arith.addf %597, %598 : vector<8x32xf32>
    %600 = math.tanh %599 : vector<8x32xf32>
    %601 = arith.mulf %596, %600 : vector<8x32xf32>
    %c7_i32_188 = arith.constant 7 : i32
    %602 = vector.broadcast %c7_i32_188 : i32 to vector<8x1xi32>
    %603 = arith.cmpi sgt, %7, %602 : vector<8x1xi32>
    %c0_i32_189 = arith.constant 0 : i32
    %604 = vector.broadcast %c0_i32_189 : i32 to vector<8x1xi32>
    %605 = arith.cmpi sgt, %7, %604 : vector<8x1xi32>
    %606 = vector.extract_strided_slice %558 {offsets = [0, 0], sizes = [8, 32], strides = [1, 1]} : vector<8x64xf32> to vector<8x32xf32>
    %607 = vector.shape_cast %603 : vector<8x1xi1> to vector<8x1xi1>
    %608 = vector.broadcast %607 : vector<8x1xi1> to vector<8x32xi1>
    %609 = arith.select %608, %585, %606 : vector<8x32xi1>, vector<8x32xf32>
    %610 = vector.extract_strided_slice %559 {offsets = [0, 0], sizes = [8, 32], strides = [1, 1]} : vector<8x64xf32> to vector<8x32xf32>
    %611 = vector.shape_cast %603 : vector<8x1xi1> to vector<8x1xi1>
    %612 = vector.broadcast %611 : vector<8x1xi1> to vector<8x32xi1>
    %613 = arith.select %612, %583, %610 : vector<8x32xi1>, vector<8x32xf32>
    %614 = vector.extract_strided_slice %558 {offsets = [0, 32], sizes = [8, 32], strides = [1, 1]} : vector<8x64xf32> to vector<8x32xf32>
    %615 = vector.shape_cast %605 : vector<8x1xi1> to vector<8x1xi1>
    %616 = vector.broadcast %615 : vector<8x1xi1> to vector<8x32xi1>
    %617 = arith.select %616, %601, %614 : vector<8x32xi1>, vector<8x32xf32>
    %618 = vector.extract_strided_slice %559 {offsets = [0, 32], sizes = [8, 32], strides = [1, 1]} : vector<8x64xf32> to vector<8x32xf32>
    %619 = vector.shape_cast %605 : vector<8x1xi1> to vector<8x1xi1>
    %620 = vector.broadcast %619 : vector<8x1xi1> to vector<8x32xi1>
    %621 = arith.select %620, %599, %618 : vector<8x32xi1>, vector<8x32xf32>
    %622 = tpu.concatenate %609, %617 in 1 : vector<8x32xf32>, vector<8x32xf32> -> vector<8x64xf32>
    %c0_190 = arith.constant 0 : index
    %c0_191 = arith.constant 0 : index
    %623 = vector.load %arg12[%c0_190, %c0_191] : memref<8x64xf32, #tpu.memory_space<vmem>>, vector<8x64xf32>
    tpu.vector_store %arg12[%c0_190, %c0_191], %622 {strides = array<i32>} : memref<8x64xf32, #tpu.memory_space<vmem>>, vector<8x64xf32>,
    %624 = tpu.concatenate %613, %621 in 1 : vector<8x32xf32>, vector<8x32xf32> -> vector<8x64xf32>
    %c0_192 = arith.constant 0 : index
    %c0_193 = arith.constant 0 : index
    %625 = vector.load %arg13[%c0_192, %c0_193] : memref<8x64xf32, #tpu.memory_space<vmem>>, vector<8x64xf32>
    tpu.vector_store %arg13[%c0_192, %c0_193], %624 {strides = array<i32>} : memref<8x64xf32, #tpu.memory_space<vmem>>, vector<8x64xf32>,
    %cst_194 = arith.constant 0.000000e+00 : f32
    %626 = vector.shape_cast %603 : vector<8x1xi1> to vector<8x1xi1>
    %627 = vector.broadcast %626 : vector<8x1xi1> to vector<8x32xi1>
    %628 = vector.broadcast %cst_194 : f32 to vector<8x32xf32>
    %629 = arith.select %627, %585, %628 : vector<8x32xi1>, vector<8x32xf32>
    %c56_195 = arith.constant 56 : index
    %c0_196 = arith.constant 0 : index
    %630 = vector.load %arg14[%c56_195, %c0_196] : memref<64x32xf32, #tpu.memory_space<vmem>>, vector<8x32xf32>
    tpu.vector_store %arg14[%c56_195, %c0_196], %629 {strides = array<i32>} : memref<64x32xf32, #tpu.memory_space<vmem>>, vector<8x32xf32>,
    %cst_197 = arith.constant 0.000000e+00 : f32
    %631 = vector.shape_cast %605 : vector<8x1xi1> to vector<8x1xi1>
    %632 = vector.broadcast %631 : vector<8x1xi1> to vector<8x32xi1>
    %633 = vector.broadcast %cst_197 : f32 to vector<8x32xf32>
    %634 = arith.select %632, %601, %633 : vector<8x32xi1>, vector<8x32xf32>
    %c0_198 = arith.constant 0 : index
    %c0_199 = arith.constant 0 : index
    %635 = vector.load %arg15[%c0_198, %c0_199] : memref<64x32xf32, #tpu.memory_space<vmem>>, vector<8x32xf32>
    tpu.vector_store %arg15[%c0_198, %c0_199], %634 {strides = array<i32>} : memref<64x32xf32, #tpu.memory_space<vmem>>, vector<8x32xf32>,
    %c0_200 = arith.constant 0 : index
    %c0_201 = arith.constant 0 : index
    %636 = vector.load %arg14[%c0_200, %c0_201] : memref<64x32xf32, #tpu.memory_space<vmem>>, vector<64x32xf32>
    %c0_202 = arith.constant 0 : index
    %c0_203 = arith.constant 0 : index
    %637 = vector.load %arg15[%c0_202, %c0_203] : memref<64x32xf32, #tpu.memory_space<vmem>>, vector<64x32xf32>
    %638 = tpu.concatenate %636, %637 in 1 : vector<64x32xf32>, vector<64x32xf32> -> vector<64x64xf32>
    %c0_204 = arith.constant 0 : index
    %c0_205 = arith.constant 0 : index
    %639 = vector.load %arg7[%c0_204, %c0_205] : memref<64x64xf32, #tpu.memory_space<vmem>>, vector<64x64xf32>
    tpu.vector_store %arg7[%c0_204, %c0_205], %638 {strides = array<i32>} : memref<64x64xf32, #tpu.memory_space<vmem>>, vector<64x64xf32>,
    %c0_206 = arith.constant 0 : index
    %c0_207 = arith.constant 0 : index
    %640 = vector.load %arg6[%c0_206, %c0_207] : memref<64x64xf32, #tpu.memory_space<vmem>>, vector<64x64xf32>
    %cst_208 = arith.constant dense<0.000000e+00> : vector<64x64xf32>
    %641 = tpu.matmul %638, %640, %cst_208 {dimension_numbers = #tpu.dot_dimension_numbers<[1], [0], [0], [1], [0, 0, 1, 1], [], []>} : vector<64x64xf32>, vector<64x64xf32>, vector<64x64xf32> -> vector<64x64xf32>
    %c0_209 = arith.constant 0 : index
    %c0_210 = arith.constant 0 : index
    %642 = vector.load %arg8[%c0_209, %c0_210] : memref<64x64xf32, #tpu.memory_space<vmem>>, vector<64x64xf32>
    tpu.vector_store %arg8[%c0_209, %c0_210], %641 {strides = array<i32>} : memref<64x64xf32, #tpu.memory_space<vmem>>, vector<64x64xf32>,
    %c0_211 = arith.constant 0 : index
    %c0_212 = arith.constant 0 : index
    %643 = vector.load %arg12[%c0_211, %c0_212] : memref<8x64xf32, #tpu.memory_space<vmem>>, vector<8x64xf32>
    %c0_213 = arith.constant 0 : index
    %c0_214 = arith.constant 0 : index
    %644 = vector.load %arg13[%c0_213, %c0_214] : memref<8x64xf32, #tpu.memory_space<vmem>>, vector<8x64xf32>
    %645 = vector.extract_strided_slice %643 {offsets = [0, 0], sizes = [8, 32], strides = [1, 1]} : vector<8x64xf32> to vector<8x32xf32>
    %c0_215 = arith.constant 0 : index
    %c0_216 = arith.constant 0 : index
    %c0_217 = arith.constant 0 : index
    %646 = vector.load %arg9[%c0_215, %c0_216, %c0_217] : memref<2x8x32xf32, #tpu.memory_space<vmem>>, vector<1x8x32xf32>
    %647 = vector.shape_cast %646 : vector<1x8x32xf32> to vector<8x32xf32>
    %648 = vector.shape_cast %645 : vector<8x32xf32> to vector<1x8x32xf32>
    tpu.vector_store %arg9[%c0_215, %c0_216, %c0_217], %648 {strides = array<i32>} : memref<2x8x32xf32, #tpu.memory_space<vmem>>, vector<1x8x32xf32>,
    %649 = vector.extract_strided_slice %643 {offsets = [0, 32], sizes = [8, 32], strides = [1, 1]} : vector<8x64xf32> to vector<8x32xf32>
    %c1 = arith.constant 1 : index
    %c0_218 = arith.constant 0 : index
    %c0_219 = arith.constant 0 : index
    %650 = vector.load %arg9[%c1, %c0_218, %c0_219] : memref<2x8x32xf32, #tpu.memory_space<vmem>>, vector<1x8x32xf32>
    %651 = vector.shape_cast %650 : vector<1x8x32xf32> to vector<8x32xf32>
    %652 = vector.shape_cast %649 : vector<8x32xf32> to vector<1x8x32xf32>
    tpu.vector_store %arg9[%c1, %c0_218, %c0_219], %652 {strides = array<i32>} : memref<2x8x32xf32, #tpu.memory_space<vmem>>, vector<1x8x32xf32>,
    %653 = vector.extract_strided_slice %644 {offsets = [0, 0], sizes = [8, 32], strides = [1, 1]} : vector<8x64xf32> to vector<8x32xf32>
    %c0_220 = arith.constant 0 : index
    %c0_221 = arith.constant 0 : index
    %c0_222 = arith.constant 0 : index
    %654 = vector.load %arg10[%c0_220, %c0_221, %c0_222] : memref<2x8x32xf32, #tpu.memory_space<vmem>>, vector<1x8x32xf32>
    %655 = vector.shape_cast %654 : vector<1x8x32xf32> to vector<8x32xf32>
    %656 = vector.shape_cast %653 : vector<8x32xf32> to vector<1x8x32xf32>
    tpu.vector_store %arg10[%c0_220, %c0_221, %c0_222], %656 {strides = array<i32>} : memref<2x8x32xf32, #tpu.memory_space<vmem>>, vector<1x8x32xf32>,
    %657 = vector.extract_strided_slice %644 {offsets = [0, 32], sizes = [8, 32], strides = [1, 1]} : vector<8x64xf32> to vector<8x32xf32>
    %c1_223 = arith.constant 1 : index
    %c0_224 = arith.constant 0 : index
    %c0_225 = arith.constant 0 : index
    %658 = vector.load %arg10[%c1_223, %c0_224, %c0_225] : memref<2x8x32xf32, #tpu.memory_space<vmem>>, vector<1x8x32xf32>
    %659 = vector.shape_cast %658 : vector<1x8x32xf32> to vector<8x32xf32>
    %660 = vector.shape_cast %657 : vector<8x32xf32> to vector<1x8x32xf32>
    tpu.vector_store %arg10[%c1_223, %c0_224, %c0_225], %660 {strides = array<i32>} : memref<2x8x32xf32, #tpu.memory_space<vmem>>, vector<1x8x32xf32>,
    return
  }
  func.func @transform_0(%arg0: i32) -> (i32, i32) {
    %c0_i32 = arith.constant 0 : i32
    %c0_i32_0 = arith.constant 0 : i32
    %c0_i32_1 = arith.constant 0 : i32
    return %c0_i32, %c0_i32_0 : i32, i32
  }
  func.func @transform_1(%arg0: i32) -> (i32, i32) {
    %c0_i32 = arith.constant 0 : i32
    %c0_i32_0 = arith.constant 0 : i32
    %c0_i32_1 = arith.constant 0 : i32
    return %c0_i32, %c0_i32_0 : i32, i32
  }
  func.func @transform_2(%arg0: i32) -> (i32, i32) {
    %c0_i32 = arith.constant 0 : i32
    %c0_i32_0 = arith.constant 0 : i32
    %c0_i32_1 = arith.constant 0 : i32
    return %c0_i32, %c0_i32_0 : i32, i32
  }
  func.func @transform_3(%arg0: i32) -> (i32, i32) {
    %c0_i32 = arith.constant 0 : i32
    %c0_i32_0 = arith.constant 0 : i32
    %c0_i32_1 = arith.constant 0 : i32
    return %c0_i32, %c0_i32_0 : i32, i32
  }
  func.func @transform_4(%arg0: i32) -> (i32, i32) {
    %c0_i32 = arith.constant 0 : i32
    %c0_i32_0 = arith.constant 0 : i32
    %c0_i32_1 = arith.constant 0 : i32
    return %c0_i32, %c0_i32_0 : i32, i32
  }
  func.func @transform_5(%arg0: i32) -> (i32, i32) {
    %c0_i32 = arith.constant 0 : i32
    %c0_i32_0 = arith.constant 0 : i32
    %c0_i32_1 = arith.constant 0 : i32
    return %c0_i32, %c0_i32_0 : i32, i32
  }
  func.func @transform_6(%arg0: i32) -> (i32, i32) {
    %c0_i32 = arith.constant 0 : i32
    %c0_i32_0 = arith.constant 0 : i32
    %c0_i32_1 = arith.constant 0 : i32
    return %c0_i32, %c0_i32_0 : i32, i32
  }
  func.func @transform_7(%arg0: i32) -> (i32, i32) {
    %c0_i32 = arith.constant 0 : i32
    %c0_i32_0 = arith.constant 0 : i32
    %c0_i32_1 = arith.constant 0 : i32
    return %c0_i32, %c0_i32_0 : i32, i32
  }
  func.func @transform_8(%arg0: i32) -> (i32, i32, i32) {
    %c0_i32 = arith.constant 0 : i32
    %c0_i32_0 = arith.constant 0 : i32
    %c0_i32_1 = arith.constant 0 : i32
    %c0_i32_2 = arith.constant 0 : i32
    return %c0_i32, %c0_i32_0, %c0_i32_1 : i32, i32, i32
  }
  func.func @transform_9(%arg0: i32) -> (i32, i32, i32) {
    %c0_i32 = arith.constant 0 : i32
    %c0_i32_0 = arith.constant 0 : i32
    %c0_i32_1 = arith.constant 0 : i32
    %c0_i32_2 = arith.constant 0 : i32
    return %c0_i32, %c0_i32_0, %c0_i32_1 : i32, i32, i32
  }
}

</mosaic_0001>

<llo_original>
// kernel: tpu_custom_call.1
$region0: #{tpu_custom_call.1}
  #allocation0 [shape = 'u32[]', space=smem, size = 0x4, offset = 0x4, fixed_abs, tag = 'smem constant byte address 0x4 - core index']
  #allocation1 [shape = 'u32[144,128]{1,0:T(1,128)}', space=vmem, size = 0x12000, scoped, tag = 'internal scratch']
  #allocation2 [shape = 'f32[64,256]{1,0:T(8,128)}', space=vmem, size = 0x10000, scoped, tag = 'scratch operand']
  #allocation3 [shape = 'f32[8,64]{1,0:T(8,128)}', space=vmem, size = 0x1000, scoped, tag = 'scratch operand']
  #allocation4 [shape = 'f32[8,64]{1,0:T(8,128)}', space=vmem, size = 0x1000, scoped, tag = 'scratch operand']
  #allocation5 [shape = 'f32[64,32]{1,0:T(8,128)}', space=vmem, size = 0x8000, scoped, tag = 'scratch operand']
  #allocation6 [shape = 'f32[64,32]{1,0:T(8,128)}', space=vmem, size = 0x8000, scoped, tag = 'scratch operand']
  %s0 = inlined_call_operand.vmem [shape: f32[64,32], index: 0, kind: input, shape index: {}]
  %s1 = inlined_call_operand.vmem [shape: s32[8,1], index: 1, kind: input, shape index: {}]
  %s2 = inlined_call_operand.vmem [shape: f32[32,256], index: 2, kind: input, shape index: {}]
  %s3 = inlined_call_operand.hbm [shape: f32[64,256], index: 3, kind: input, shape index: {}]
  %s4 = inlined_call_operand.vmem [shape: f32[1,256], index: 4, kind: input, shape index: {}]
  %s5 = inlined_call_operand.hbm [shape: f32[64,64], index: 5, kind: input, shape index: {}]
  %s6 = inlined_call_operand.hbm [shape: f32[64,64], index: 6, kind: output, shape index: {0}]
  %s7 = inlined_call_operand.hbm [shape: f32[64,64], index: 7, kind: output, shape index: {1}]
  %s8 = inlined_call_operand.hbm [shape: f32[2,8,32], index: 8, kind: output, shape index: {2}]
  %s9 = inlined_call_operand.hbm [shape: f32[2,8,32], index: 9, kind: output, shape index: {3}]
  %10 = xla_tuple %s6, %s7, %s8, %s9
  %s11 = sld [smem:[#allocation0]]
  $region66: #{tpu_custom_call.1} parent=0
    _
  %s13 = ssub.s32 1, %s11
  %s14 = scalar_select 0, %s13, %s11
  $region1: #{tpu_custom_call.1} parent=0
    #allocation7 [shape = 'u8[65536]{0}', space=vmem, size = 0x10000, scoped, tag = 'input window, operand 3, single buffered']
    #allocation8 [shape = 's32[1]{0}', space=sflag, size = 0x4, scoped, tag = 'scoped memory for tpu_custom_call.1']
    #allocation9 [shape = 's32[1]{0}', space=sflag, size = 0x4, scoped, tag = 'scoped memory for tpu_custom_call.1']
    #allocation10 [shape = 'u8[32768]{0}', space=vmem, size = 0x8000, scoped, tag = 'input window, operand 5, single buffered']
    #allocation11 [shape = 's32[1]{0}', space=sflag, size = 0x4, scoped, tag = 'scoped memory for tpu_custom_call.1']
    #allocation12 [shape = 'u8[32768]{0}', space=vmem, size = 0x8000, scoped, tag = 'output window, operand 0, single buffered']
    #allocation13 [shape = 'u8[32768]{0}', space=vmem, size = 0x8000, scoped, tag = 'output window, operand 1, single buffered']
    #allocation14 [shape = 's32[1]{0}', space=sflag, size = 0x4, scoped, tag = 'scoped memory for tpu_custom_call.1']
    #allocation15 [shape = 'u8[8192]{0}', space=vmem, size = 0x2000, scoped, tag = 'output window, operand 2, single buffered']
    #allocation16 [shape = 'u8[8192]{0}', space=vmem, size = 0x2000, scoped, tag = 'output window, operand 3, single buffered']
    #allocation17 [shape = 's32[1]{0}', space=sflag, size = 0x4, scoped, tag = 'scoped memory for tpu_custom_call.1']
    %15 = vsyncpa [#allocation8], 0
    %16 = vsyncpa [#allocation11], 0
    %17 = vsyncpa [#allocation9], 0
    %18 = vsyncpa [#allocation14], 0
    %19 = vsyncpa [#allocation17], 0
    // Predicated region
    $region2: #{tpu_custom_call.1} parent=1 // pred_check
      _
    $region3: #{tpu_custom_call.1} parent=1 // pred_check_branch
      %21 = sbr.rel (0) target = $region5
    $region4: #{tpu_custom_call.1} parent=1 // pred_region
      _
    $region5: #{tpu_custom_call.1} parent=1 // pred_fallthru
      _
    // Predicated region
    $region6: #{tpu_custom_call.1} parent=1 // pred_check
      _
    $region7: #{tpu_custom_call.1} parent=1 // pred_check_branch
      %23 = sbr.rel (0) target = $region9
    $region8: #{tpu_custom_call.1} parent=1 // pred_region
      _
    $region9: #{tpu_custom_call.1} parent=1 // pred_fallthru
      _
    // Predicated region
    $region10: #{tpu_custom_call.1} parent=1 // pred_check
      _
    $region11: #{tpu_custom_call.1} parent=1 // pred_check_branch
      %25 = sbr.rel (0) target = $region13
    $region12: #{tpu_custom_call.1} parent=1 // pred_region
      _
    $region13: #{tpu_custom_call.1} parent=1 // pred_fallthru
      _
    // Predicated region
    $region14: #{tpu_custom_call.1} parent=1 // pred_check
      _
    $region15: #{tpu_custom_call.1} parent=1 // pred_check_branch
      %27 = sbr.rel (0) target = $region17
    $region16: #{tpu_custom_call.1} parent=1 // pred_region
      %s29 = ssub.s32 2048, 2048
      %30 = vsyncadd [#allocation8], %s29
      %s31 = sshll.u32 [#allocation7], 4
      %s32 = int_to_ptr.vmem [resolvable:$true] %s31
      %37 = dma.hbm_to_vmem [thread:$0]  %s3, 2048, %s32, [#allocation8], 256, 256, 16
    $region17: #{tpu_custom_call.1} parent=1 // pred_fallthru
      _
    // Predicated region
    $region18: #{tpu_custom_call.1} parent=1 // pred_check
      _
    $region19: #{tpu_custom_call.1} parent=1 // pred_check_branch
      %39 = sbr.rel (0) target = $region21
    $region20: #{tpu_custom_call.1} parent=1 // pred_region
      _
    $region21: #{tpu_custom_call.1} parent=1 // pred_fallthru
      _
    // Predicated region
    $region22: #{tpu_custom_call.1} parent=1 // pred_check
      _
    $region23: #{tpu_custom_call.1} parent=1 // pred_check_branch
      %41 = sbr.rel (0) target = $region25
    $region24: #{tpu_custom_call.1} parent=1 // pred_region
      %s43 = ssub.s32 1024, 1024
      %44 = vsyncadd [#allocation11], %s43
      %s45 = sshll.u32 [#allocation10], 4
      %s46 = int_to_ptr.vmem [resolvable:$true] %s45
      %51 = dma.hbm_to_vmem [thread:$0]  %s5, 1024, %s46, [#allocation11], 128, 128, 8
    $region25: #{tpu_custom_call.1} parent=1 // pred_fallthru
      _
    // Predicated region
    $region26: #{tpu_custom_call.1} parent=1 // pred_check
      _
    $region27: #{tpu_custom_call.1} parent=1 // pred_check_branch
      %53 = sbr.rel (0) target = $region29
    $region28: #{tpu_custom_call.1} parent=1 // pred_region
      %54 = dma.done [#allocation8], 2048
    $region29: #{tpu_custom_call.1} parent=1 // pred_fallthru
      _
    // Predicated region
    $region30: #{tpu_custom_call.1} parent=1 // pred_check
      _
    $region31: #{tpu_custom_call.1} parent=1 // pred_check_branch
      %56 = sbr.rel (0) target = $region33
    $region32: #{tpu_custom_call.1} parent=1 // pred_region
      %57 = dma.done [#allocation11], 1024
    $region33: #{tpu_custom_call.1} parent=1 // pred_fallthru
      _
    %v58 = vld [vmem:[%s0] sm:$0xff]
    %v59 = vld [vmem:[%s0 + $0x8] sm:$0xff]
    %v60 = vld [vmem:[%s0 + $0x10] sm:$0xff]
    %v61 = vld [vmem:[%s0 + $0x18] sm:$0xff]
    %v62 = vld [vmem:[%s0 + $0x20] sm:$0xff]
    %v63 = vld [vmem:[%s0 + $0x28] sm:$0xff]
    %v64 = vld [vmem:[%s0 + $0x30] sm:$0xff]
    %v65 = vld [vmem:[%s0 + $0x38] sm:$0xff]
    %v66 = vld [vmem:[%s2] sm:$0xff]
    %v67 = vld [vmem:[%s2 + $0x8] sm:$0xff]
    %v68 = vld [vmem:[%s2 + $0x10] sm:$0xff]
    %v69 = vld [vmem:[%s2 + $0x18] sm:$0xff]
    %v70 = vld [vmem:[%s2 + $0x20] sm:$0xff]
    %v71 = vld [vmem:[%s2 + $0x28] sm:$0xff]
    %v72 = vld [vmem:[%s2 + $0x30] sm:$0xff]
    %v73 = vld [vmem:[%s2 + $0x38] sm:$0xff]
    %v74 = vld [vmem:[%s4] sm:$0x3]
    %v76 = vlaneseq
    %v77 = vshrl.u32 %v76, 7
    %v78 = vsub.s32 0, %v77
    %v79 = vrot.slane %v74, %v78
    %v80 = vlaneseq
    %v81 = vshrl.u32 %v80, 7
    %v82 = vsub.s32 1, %v81
    %v83 = vrot.slane %v74, %v82
    %vm86 = vcmask 261120
    %v88 = vsel %vm86, %v58, 0
    %v91 = vsel %vm86, %v59, 0
    %v94 = vsel %vm86, %v60, 0
    %v97 = vsel %vm86, %v61, 0
    %v100 = vsel %vm86, %v62, 0
    %v103 = vsel %vm86, %v63, 0
    %v106 = vsel %vm86, %v64, 0
    %v109 = vsel %vm86, %v65, 0
    %111 = vmatprep.subr.mxu0 %v67
    %112 = vmatpush1.msra.mxu0 %v66
    %113 = vmatprep.subr.mxu0 %v69
    %114 = vmatpush1.msra.mxu0 %v68
    %115 = vmatprep.subr.mxu0 %v71
    %116 = vmatpush1.msra.mxu0 %v70
    %117 = vmatprep.subr.mxu0 %v73
    %118 = vmatpush1.msra.mxu0 %v72
    %119 = vmatprep.subr.mxu0 0.0
    %120 = vmatpush1.msra.mxu0 0.0
    %121 = vmatprep.subr.mxu0 0.0
    %122 = vmatpush1.msra.mxu0 0.0
    %123 = vmatprep.subr.mxu0 0.0
    %124 = vmatpush1.msra.mxu0 0.0
    %125 = vmatprep.subr.mxu0 0.0
    %126 = vmatpush1.msra.mxu0 0.0
    %127 = vmatprep.subr.mxu0 0.0
    %128 = vmatpush1.msra.mxu0 0.0
    %129 = vmatprep.subr.mxu0 0.0
    %130 = vmatpush1.msra.mxu0 0.0
    %131 = vmatprep.subr.mxu0 0.0
    %132 = vmatpush1.msra.mxu0 0.0
    %133 = vmatprep.subr.mxu0 0.0
    %134 = vmatpush1.msra.mxu0 0.0
    %135 = vmatprep.subr.mxu0 0.0
    %136 = vmatpush1.msra.mxu0 0.0
    %137 = vmatprep.subr.mxu0 0.0
    %138 = vmatpush1.msra.mxu0 0.0
    %139 = vmatprep.subr.mxu0 0.0
    %140 = vmatpush1.msra.mxu0 0.0
    %141 = vmatprep.subr.mxu0 0.0
    %142 = vmatpush1.msra.mxu0 0.0
    %143 = vmatprep.subr.mxu0 0.0
    %144 = vmatpush1.msra.mxu0 0.0
    %145 = vmatprep.subr.mxu0 0.0
    %146 = vmatpush1.msra.mxu0 0.0
    %147 = vmatprep.subr.mxu0 0.0
    %148 = vmatpush1.msra.mxu0 0.0
    %149 = vmatprep.subr.mxu0 0.0
    %150 = vmatpush1.msra.mxu0 0.0
    %151 = vmatprep.subr.mxu0 0.0
    %152 = vmatpush1.msra.mxu0 0.0
    %153 = vmatprep.subr.mxu0 0.0
    %154 = vmatpush1.msra.mxu0 0.0
    %155 = vmatprep.subr.mxu0 0.0
    %156 = vmatpush1.msra.mxu0 0.0
    %157 = vmatprep.subr.mxu0 0.0
    %158 = vmatpush1.msra.mxu0 0.0
    %159 = vmatprep.subr.mxu0 0.0
    %160 = vmatpush1.msra.mxu0 0.0
    %161 = vmatprep.subr.mxu0 0.0
    %162 = vmatpush1.msra.mxu0 0.0
    %163 = vmatprep.subr.mxu0 0.0
    %164 = vmatpush1.msra.mxu0 0.0
    %165 = vmatprep.subr.mxu0 0.0
    %166 = vmatpush1.msra.mxu0 0.0
    %167 = vmatprep.subr.mxu0 0.0
    %168 = vmatpush1.msra.mxu0 0.0
    %169 = vmatprep.subr.mxu0 0.0
    %170 = vmatpush1.msra.mxu0 0.0
    %171 = vmatprep.subr.mxu0 0.0
    %172 = vmatpush1.msra.mxu0 0.0
    %173 = vmatprep.subr.mxu0 0.0
    %174 = vmatpush1.msra.mxu0 0.0
    %175 = vmatprep.mubr.f32.mxu0 0.0
    %176 = vmatmul.mubr.f32.gmra.mrb[0].mxu0 %v88
    %v177 = vpop.f32.mrb[0].mxu0
    %v178 = vadd.f32 %v79, %v177
    %v179 = vpop.f32.mrb[0].mxu0
    %v180 = vadd.f32 %v83, %v179
    %181 = vmatprep.mubr.f32.mxu0 0.0
    %182 = vmatmul.mubr.f32.gmra.mrb[0].mxu0 %v91
    %v183 = vpop.f32.mrb[0].mxu0
    %v184 = vadd.f32 %v79, %v183
    %v185 = vpop.f32.mrb[0].mxu0
    %v186 = vadd.f32 %v83, %v185
    %187 = vmatprep.mubr.f32.mxu0 0.0
    %188 = vmatmul.mubr.f32.gmra.mrb[0].mxu0 %v94
    %v189 = vpop.f32.mrb[0].mxu0
    %v190 = vadd.f32 %v79, %v189
    %v191 = vpop.f32.mrb[0].mxu0
    %v192 = vadd.f32 %v83, %v191
    %193 = vmatprep.mubr.f32.mxu0 0.0
    %194 = vmatmul.mubr.f32.gmra.mrb[0].mxu0 %v97
    %v195 = vpop.f32.mrb[0].mxu0
    %v196 = vadd.f32 %v79, %v195
    %v197 = vpop.f32.mrb[0].mxu0
    %v198 = vadd.f32 %v83, %v197
    %199 = vmatprep.mubr.f32.mxu0 0.0
    %200 = vmatmul.mubr.f32.gmra.mrb[0].mxu0 %v100
    %v201 = vpop.f32.mrb[0].mxu0
    %v202 = vadd.f32 %v79, %v201
    %v203 = vpop.f32.mrb[0].mxu0
    %v204 = vadd.f32 %v83, %v203
    %205 = vmatprep.mubr.f32.mxu0 0.0
    %206 = vmatmul.mubr.f32.gmra.mrb[0].mxu0 %v103
    %v207 = vpop.f32.mrb[0].mxu0
    %v208 = vadd.f32 %v79, %v207
    %v209 = vpop.f32.mrb[0].mxu0
    %v210 = vadd.f32 %v83, %v209
    %211 = vmatprep.mubr.f32.mxu0 0.0
    %212 = vmatmul.mubr.f32.gmra.mrb[0].mxu0 %v106
    %v213 = vpop.f32.mrb[0].mxu0
    %v214 = vadd.f32 %v79, %v213
    %v215 = vpop.f32.mrb[0].mxu0
    %v216 = vadd.f32 %v83, %v215
    %217 = vmatprep.mubr.f32.mxu0 0.0
    %218 = vmatmul.mubr.f32.gmra.mrb[0].mxu0 %v109
    %v219 = vpop.f32.mrb[0].mxu0
    %v220 = vadd.f32 %v79, %v219
    %v221 = vpop.f32.mrb[0].mxu0
    %v222 = vadd.f32 %v83, %v221
    %223 = vdwg.mxu0
    %224 = vst [vmem:[#allocation2] sm:$0xff] %v178
    %225 = vst [vmem:[#allocation2 + $0x8] sm:$0xff] %v180
    %226 = vst [vmem:[#allocation2 + $0x10] sm:$0xff] %v184
    %227 = vst [vmem:[#allocation2 + $0x18] sm:$0xff] %v186
    %228 = vst [vmem:[#allocation2 + $0x20] sm:$0xff] %v190
    %229 = vst [vmem:[#allocation2 + $0x28] sm:$0xff] %v192
    %230 = vst [vmem:[#allocation2 + $0x30] sm:$0xff] %v196
    %231 = vst [vmem:[#allocation2 + $0x38] sm:$0xff] %v198
    %232 = vst [vmem:[#allocation2 + $0x40] sm:$0xff] %v202
    %233 = vst [vmem:[#allocation2 + $0x48] sm:$0xff] %v204
    %234 = vst [vmem:[#allocation2 + $0x50] sm:$0xff] %v208
    %235 = vst [vmem:[#allocation2 + $0x58] sm:$0xff] %v210
    %236 = vst [vmem:[#allocation2 + $0x60] sm:$0xff] %v214
    %237 = vst [vmem:[#allocation2 + $0x68] sm:$0xff] %v216
    %238 = vst [vmem:[#allocation2 + $0x70] sm:$0xff] %v220
    %239 = vst [vmem:[#allocation2 + $0x78] sm:$0xff] %v222
    %v240 = vld [vmem:[%s1] sm:$0xff]
    %vm241 = vcmask 523264
    %242 = vst.msk [vmem:[#allocation3] sm:$0xff] %vm241, 0.0
    %243 = vst.msk [vmem:[#allocation4] sm:$0xff] %vm241, 0.0
    %v244 = vld [vmem:[#allocation3] sm:$0xff]
    %v245 = vld [vmem:[#allocation4] sm:$0xff]
    %v246 = vld [vmem:[#allocation7] sm:$0xff]
    %v247 = vld [vmem:[#allocation7 + $0x8] sm:$0xff]
    %v248 = vld [vmem:[#allocation7 + $0x10] sm:$0xff]
    %v249 = vld [vmem:[#allocation7 + $0x18] sm:$0xff]
    %v250 = vld [vmem:[#allocation7 + $0x20] sm:$0xff]
    %v251 = vld [vmem:[#allocation7 + $0x28] sm:$0xff]
    %v252 = vld [vmem:[#allocation7 + $0x30] sm:$0xff]
    %v253 = vld [vmem:[#allocation7 + $0x38] sm:$0xff]
    %v254 = vld [vmem:[#allocation7 + $0x40] sm:$0xff]
    %v255 = vld [vmem:[#allocation7 + $0x48] sm:$0xff]
    %v256 = vld [vmem:[#allocation7 + $0x50] sm:$0xff]
    %v257 = vld [vmem:[#allocation7 + $0x58] sm:$0xff]
    %v258 = vld [vmem:[#allocation7 + $0x60] sm:$0xff]
    %v259 = vld [vmem:[#allocation7 + $0x68] sm:$0xff]
    %v260 = vld [vmem:[#allocation7 + $0x70] sm:$0xff]
    %v261 = vld [vmem:[#allocation7 + $0x78] sm:$0xff]
    %v263 = vsel %vm241, %v244, 0
    %265 = vmatprep.subr.mxu0 %v247
    %266 = vmatpush1.msra.mxu0 %v246
    %267 = vmatprep.subr.mxu0 %v249
    %268 = vmatpush1.msra.mxu0 %v248
    %269 = vmatprep.subr.mxu0 %v251
    %270 = vmatpush1.msra.mxu0 %v250
    %271 = vmatprep.subr.mxu0 %v253
    %272 = vmatpush1.msra.mxu0 %v252
    %273 = vmatprep.subr.mxu0 %v255
    %274 = vmatpush1.msra.mxu0 %v254
    %275 = vmatprep.subr.mxu0 %v257
    %276 = vmatpush1.msra.mxu0 %v256
    %277 = vmatprep.subr.mxu0 %v259
    %278 = vmatpush1.msra.mxu0 %v258
    %279 = vmatprep.subr.mxu0 %v261
    %280 = vmatpush1.msra.mxu0 %v260
    %281 = vmatprep.subr.mxu0 0.0
    %282 = vmatpush1.msra.mxu0 0.0
    %283 = vmatprep.subr.mxu0 0.0
    %284 = vmatpush1.msra.mxu0 0.0
    %285 = vmatprep.subr.mxu0 0.0
    %286 = vmatpush1.msra.mxu0 0.0
    %287 = vmatprep.subr.mxu0 0.0
    %288 = vmatpush1.msra.mxu0 0.0
    %289 = vmatprep.subr.mxu0 0.0
    %290 = vmatpush1.msra.mxu0 0.0
    %291 = vmatprep.subr.mxu0 0.0
    %292 = vmatpush1.msra.mxu0 0.0
    %293 = vmatprep.subr.mxu0 0.0
    %294 = vmatpush1.msra.mxu0 0.0
    %295 = vmatprep.subr.mxu0 0.0
    %296 = vmatpush1.msra.mxu0 0.0
    %297 = vmatprep.subr.mxu0 0.0
    %298 = vmatpush1.msra.mxu0 0.0
    %299 = vmatprep.subr.mxu0 0.0
    %300 = vmatpush1.msra.mxu0 0.0
    %301 = vmatprep.subr.mxu0 0.0
    %302 = vmatpush1.msra.mxu0 0.0
    %303 = vmatprep.subr.mxu0 0.0
    %304 = vmatpush1.msra.mxu0 0.0
    %305 = vmatprep.subr.mxu0 0.0
    %306 = vmatpush1.msra.mxu0 0.0
    %307 = vmatprep.subr.mxu0 0.0
    %308 = vmatpush1.msra.mxu0 0.0
    %309 = vmatprep.subr.mxu0 0.0
    %310 = vmatpush1.msra.mxu0 0.0
    %311 = vmatprep.subr.mxu0 0.0
    %312 = vmatpush1.msra.mxu0 0.0
    %313 = vmatprep.subr.mxu0 0.0
    %314 = vmatpush1.msra.mxu0 0.0
    %315 = vmatprep.subr.mxu0 0.0
    %316 = vmatpush1.msra.mxu0 0.0
    %317 = vmatprep.subr.mxu0 0.0
    %318 = vmatpush1.msra.mxu0 0.0
    %319 = vmatprep.subr.mxu0 0.0
    %320 = vmatpush1.msra.mxu0 0.0
    %321 = vmatprep.subr.mxu0 0.0
    %322 = vmatpush1.msra.mxu0 0.0
    %323 = vmatprep.subr.mxu0 0.0
    %324 = vmatpush1.msra.mxu0 0.0
    %325 = vmatprep.subr.mxu0 0.0
    %326 = vmatpush1.msra.mxu0 0.0
    %327 = vmatprep.subr.mxu0 0.0
    %328 = vmatpush1.msra.mxu0 0.0
    %329 = vmatprep.mubr.f32.mxu0 0.0
    %330 = vmatmul.mubr.f32.gmra.mrb[0].mxu0 %v263
    %v331 = vpop.f32.mrb[0].mxu0
    %v332 = vadd.f32 0.0, %v331
    %v333 = vpop.f32.mrb[0].mxu0
    %v334 = vadd.f32 0.0, %v333
    %335 = vdwg.mxu0
    %v336 = vld [vmem:[#allocation2] sm:$0xff]
    %v337 = vld [vmem:[#allocation2 + $0x78] sm:$0xff]
    %v338 = vadd.f32 %v336, %v332
    %v339 = vadd.f32 %v337, %v334
    %v340 = vxor.u32 %v338, 2147483648
    %v341 = vmul.f32 %v340, 1.442695
    %v342 = vpow.pop %v341
    %v343 = vadd.f32 %v342, 1.0
    %v344 = vrcp.pop %v343
    %v345 = vmul.f32 1.0, %v344
    %v346 = vtanh.pop %v338
    %348 = vrot.lane.b32.xlu0 %v245, 32
    %v349 = vpop.permute.xlu0 %348
    %v351 = vmul.f32 %v345, %v349
    %353 = vrot.lane.b32.xlu0 %v346, 64
    %v354 = vpop.permute.xlu0 %353
    %v356 = vmul.f32 %v345, %v354
    %358 = vrot.lane.b32.xlu0 %v356, 32
    %v359 = vpop.permute.xlu0 %358
    %v361 = vadd.f32 %v351, %v359
    %v362 = vtanh.pop %v361
    %364 = vrot.lane.b32.xlu0 %v362, 64
    %v365 = vpop.permute.xlu0 %364
    %v367 = vmul.f32 %v345, %v365
    %v368 = vxor.u32 %v339, 2147483648
    %v369 = vmul.f32 %v368, 1.442695
    %v370 = vpow.pop %v369
    %v371 = vadd.f32 %v370, 1.0
    %v372 = vrcp.pop %v371
    %v373 = vmul.f32 1.0, %v372
    %v374 = vtanh.pop %v339
    %v375 = vmul.f32 %v373, %v245
    %377 = vrot.lane.b32.xlu0 %v374, 64
    %v378 = vpop.permute.xlu0 %377
    %v380 = vmul.f32 %v373, %v378
    %382 = vrot.lane.b32.xlu0 %v380, 32
    %v383 = vpop.permute.xlu0 %382
    %v385 = vadd.f32 %v375, %v383
    %v386 = vtanh.pop %v385
    %388 = vrot.lane.b32.xlu0 %v386, 64
    %v389 = vpop.permute.xlu0 %388
    %v391 = vmul.f32 %v373, %v389
    %vm392 = vcmp.gt.s32.totalorder %v240, 0
    %vm393 = vcmp.gt.s32.totalorder %v240, 7
    %v394 = vsel %vm392, 1, 0
    %395 = vset.pattern.permute.xlu0 0
    %396 = vperm.xlu0 %395, %v394
    %v397 = vpop.permute.xlu0 %396
    %vm398 = vcmp.eq.s32.totalorder %v397, 1
    %399 = vrot.lane.b32.xlu0 %v244, 96
    %v400 = vpop.permute.xlu0 %399
    %v402 = vsel %vm398, %v367, %v400
    %v403 = vsel %vm398, %v361, %v349
    %v404 = vsel %vm393, 1, 0
    %405 = vset.pattern.permute.xlu0 0
    %406 = vperm.xlu0 %405, %v404
    %v407 = vpop.permute.xlu0 %406
    %vm408 = vcmp.eq.s32.totalorder %v407, 1
    %409 = vrot.lane.b32.xlu0 %v244, 64
    %v410 = vpop.permute.xlu0 %409
    %v412 = vsel %vm408, %v391, %v410
    %v413 = vsel %vm408, %v385, %v245
    %415 = vrot.lane.b32.xlu0 %v402, 32
    %v416 = vpop.permute.xlu0 %415
    %419 = vrot.lane.b32.xlu0 %v412, 64
    %v420 = vpop.permute.xlu0 %419
    %v422 = vsel %vm86, %v416, %v420
    %423 = vst.msk [vmem:[#allocation3] sm:$0xff] %vm241, %v422
    %425 = vrot.lane.b32.xlu0 %v403, 96
    %v426 = vpop.permute.xlu0 %425
    %v428 = vsel %vm86, %v426, %v413
    %429 = vst.msk [vmem:[#allocation4] sm:$0xff] %vm241, %v428
    %v430 = vsel %vm398, %v367, 0.0
    %432 = vrot.lane.b32.xlu0 %v430, 32
    %v433 = vpop.permute.xlu0 %432
    %435 = vst.msk [vmem:[#allocation5] sm:$0xff] %vm86, %v433
    %v436 = vsel %vm408, %v391, 0.0
    %438 = vrot.lane.b32.xlu0 %v436, 32
    %v439 = vpop.permute.xlu0 %438
    %441 = vst.msk [vmem:[#allocation6 + $0x38] sm:$0xff] %vm86, %v439
    %v442 = vld [vmem:[#allocation3] sm:$0xff]
    %v443 = vld [vmem:[#allocation4] sm:$0xff]
    %v444 = vld [vmem:[#allocation7] sm:$0xff]
    %v445 = vld [vmem:[#allocation7 + $0x8] sm:$0xff]
    %v446 = vld [vmem:[#allocation7 + $0x10] sm:$0xff]
    %v447 = vld [vmem:[#allocation7 + $0x18] sm:$0xff]
    %v448 = vld [vmem:[#allocation7 + $0x20] sm:$0xff]
    %v449 = vld [vmem:[#allocation7 + $0x28] sm:$0xff]
    %v450 = vld [vmem:[#allocation7 + $0x30] sm:$0xff]
    %v451 = vld [vmem:[#allocation7 + $0x38] sm:$0xff]
    %v452 = vld [vmem:[#allocation7 + $0x40] sm:$0xff]
    %v453 = vld [vmem:[#allocation7 + $0x48] sm:$0xff]
    %v454 = vld [vmem:[#allocation7 + $0x50] sm:$0xff]
    %v455 = vld [vmem:[#allocation7 + $0x58] sm:$0xff]
    %v456 = vld [vmem:[#allocation7 + $0x60] sm:$0xff]
    %v457 = vld [vmem:[#allocation7 + $0x68] sm:$0xff]
    %v458 = vld [vmem:[#allocation7 + $0x70] sm:$0xff]
    %v459 = vld [vmem:[#allocation7 + $0x78] sm:$0xff]
    %v461 = vsel %vm241, %v442, 0
    %463 = vmatprep.subr.mxu0 %v445
    %464 = vmatpush1.msra.mxu0 %v444
    %465 = vmatprep.subr.mxu0 %v447
    %466 = vmatpush1.msra.mxu0 %v446
    %467 = vmatprep.subr.mxu0 %v449
    %468 = vmatpush1.msra.mxu0 %v448
    %469 = vmatprep.subr.mxu0 %v451
    %470 = vmatpush1.msra.mxu0 %v450
    %471 = vmatprep.subr.mxu0 %v453
    %472 = vmatpush1.msra.mxu0 %v452
    %473 = vmatprep.subr.mxu0 %v455
    %474 = vmatpush1.msra.mxu0 %v454
    %475 = vmatprep.subr.mxu0 %v457
    %476 = vmatpush1.msra.mxu0 %v456
    %477 = vmatprep.subr.mxu0 %v459
    %478 = vmatpush1.msra.mxu0 %v458
    %479 = vmatprep.subr.mxu0 0.0
    %480 = vmatpush1.msra.mxu0 0.0
    %481 = vmatprep.subr.mxu0 0.0
    %482 = vmatpush1.msra.mxu0 0.0
    %483 = vmatprep.subr.mxu0 0.0
    %484 = vmatpush1.msra.mxu0 0.0
    %485 = vmatprep.subr.mxu0 0.0
    %486 = vmatpush1.msra.mxu0 0.0
    %487 = vmatprep.subr.mxu0 0.0
    %488 = vmatpush1.msra.mxu0 0.0
    %489 = vmatprep.subr.mxu0 0.0
    %490 = vmatpush1.msra.mxu0 0.0
    %491 = vmatprep.subr.mxu0 0.0
    %492 = vmatpush1.msra.mxu0 0.0
    %493 = vmatprep.subr.mxu0 0.0
    %494 = vmatpush1.msra.mxu0 0.0
    %495 = vmatprep.subr.mxu0 0.0
    %496 = vmatpush1.msra.mxu0 0.0
    %497 = vmatprep.subr.mxu0 0.0
    %498 = vmatpush1.msra.mxu0 0.0
    %499 = vmatprep.subr.mxu0 0.0
    %500 = vmatpush1.msra.mxu0 0.0
    %501 = vmatprep.subr.mxu0 0.0
    %502 = vmatpush1.msra.mxu0 0.0
    %503 = vmatprep.subr.mxu0 0.0
    %504 = vmatpush1.msra.mxu0 0.0
    %505 = vmatprep.subr.mxu0 0.0
    %506 = vmatpush1.msra.mxu0 0.0
    %507 = vmatprep.subr.mxu0 0.0
    %508 = vmatpush1.msra.mxu0 0.0
    %509 = vmatprep.subr.mxu0 0.0
    %510 = vmatpush1.msra.mxu0 0.0
    %511 = vmatprep.subr.mxu0 0.0
    %512 = vmatpush1.msra.mxu0 0.0
    %513 = vmatprep.subr.mxu0 0.0
    %514 = vmatpush1.msra.mxu0 0.0
    %515 = vmatprep.subr.mxu0 0.0
    %516 = vmatpush1.msra.mxu0 0.0
    %517 = vmatprep.subr.mxu0 0.0
    %518 = vmatpush1.msra.mxu0 0.0
    %519 = vmatprep.subr.mxu0 0.0
    %520 = vmatpush1.msra.mxu0 0.0
    %521 = vmatprep.subr.mxu0 0.0
    %522 = vmatpush1.msra.mxu0 0.0
    %523 = vmatprep.subr.mxu0 0.0
    %524 = vmatpush1.msra.mxu0 0.0
    %525 = vmatprep.subr.mxu0 0.0
    %526 = vmatpush1.msra.mxu0 0.0
    %527 = vmatprep.mubr.f32.mxu0 0.0
    %528 = vmatmul.mubr.f32.gmra.mrb[0].mxu0 %v461
    %v529 = vpop.f32.mrb[0].mxu0
    %v530 = vadd.f32 0.0, %v529
    %v531 = vpop.f32.mrb[0].mxu0
    %v532 = vadd.f32 0.0, %v531
    %533 = vdwg.mxu0
    %v534 = vld [vmem:[#allocation2 + $0x10] sm:$0xff]
    %v535 = vld [vmem:[#allocation2 + $0x68] sm:$0xff]
    %v536 = vadd.f32 %v534, %v530
    %v537 = vadd.f32 %v535, %v532
    %v538 = vxor.u32 %v536, 2147483648
    %v539 = vmul.f32 %v538, 1.442695
    %v540 = vpow.pop %v539
    %v541 = vadd.f32 %v540, 1.0
    %v542 = vrcp.pop %v541
    %v543 = vmul.f32 1.0, %v542
    %v544 = vtanh.pop %v536
    %546 = vrot.lane.b32.xlu0 %v443, 32
    %v547 = vpop.permute.xlu0 %546
    %v549 = vmul.f32 %v543, %v547
    %551 = vrot.lane.b32.xlu0 %v544, 64
    %v552 = vpop.permute.xlu0 %551
    %v554 = vmul.f32 %v543, %v552
    %556 = vrot.lane.b32.xlu0 %v554, 32
    %v557 = vpop.permute.xlu0 %556
    %v559 = vadd.f32 %v549, %v557
    %v560 = vtanh.pop %v559
    %562 = vrot.lane.b32.xlu0 %v560, 64
    %v563 = vpop.permute.xlu0 %562
    %v565 = vmul.f32 %v543, %v563
    %v566 = vxor.u32 %v537, 2147483648
    %v567 = vmul.f32 %v566, 1.442695
    %v568 = vpow.pop %v567
    %v569 = vadd.f32 %v568, 1.0
    %v570 = vrcp.pop %v569
    %v571 = vmul.f32 1.0, %v570
    %v572 = vtanh.pop %v537
    %v573 = vmul.f32 %v571, %v443
    %575 = vrot.lane.b32.xlu0 %v572, 64
    %v576 = vpop.permute.xlu0 %575
    %v578 = vmul.f32 %v571, %v576
    %580 = vrot.lane.b32.xlu0 %v578, 32
    %v581 = vpop.permute.xlu0 %580
    %v583 = vadd.f32 %v573, %v581
    %v584 = vtanh.pop %v583
    %586 = vrot.lane.b32.xlu0 %v584, 64
    %v587 = vpop.permute.xlu0 %586
    %v589 = vmul.f32 %v571, %v587
    %vm590 = vcmp.gt.s32.totalorder %v240, 1
    %vm591 = vcmp.gt.s32.totalorder %v240, 6
    %v592 = vsel %vm590, 1, 0
    %593 = vset.pattern.permute.xlu0 0
    %594 = vperm.xlu0 %593, %v592
    %v595 = vpop.permute.xlu0 %594
    %vm596 = vcmp.eq.s32.totalorder %v595, 1
    %597 = vrot.lane.b32.xlu0 %v442, 96
    %v598 = vpop.permute.xlu0 %597
    %v600 = vsel %vm596, %v565, %v598
    %v601 = vsel %vm596, %v559, %v547
    %v602 = vsel %vm591, 1, 0
    %603 = vset.pattern.permute.xlu0 0
    %604 = vperm.xlu0 %603, %v602
    %v605 = vpop.permute.xlu0 %604
    %vm606 = vcmp.eq.s32.totalorder %v605, 1
    %607 = vrot.lane.b32.xlu0 %v442, 64
    %v608 = vpop.permute.xlu0 %607
    %v610 = vsel %vm606, %v589, %v608
    %v611 = vsel %vm606, %v583, %v443
    %613 = vrot.lane.b32.xlu0 %v600, 32
    %v614 = vpop.permute.xlu0 %613
    %617 = vrot.lane.b32.xlu0 %v610, 64
    %v618 = vpop.permute.xlu0 %617
    %v620 = vsel %vm86, %v614, %v618
    %621 = vst.msk [vmem:[#allocation3] sm:$0xff] %vm241, %v620
    %623 = vrot.lane.b32.xlu0 %v601, 96
    %v624 = vpop.permute.xlu0 %623
    %v626 = vsel %vm86, %v624, %v611
    %627 = vst.msk [vmem:[#allocation4] sm:$0xff] %vm241, %v626
    %v628 = vsel %vm596, %v565, 0.0
    %630 = vrot.lane.b32.xlu0 %v628, 32
    %v631 = vpop.permute.xlu0 %630
    %633 = vst.msk [vmem:[#allocation5 + $0x8] sm:$0xff] %vm86, %v631
    %v634 = vsel %vm606, %v589, 0.0
    %636 = vrot.lane.b32.xlu0 %v634, 32
    %v637 = vpop.permute.xlu0 %636
    %639 = vst.msk [vmem:[#allocation6 + $0x30] sm:$0xff] %vm86, %v637
    %v640 = vld [vmem:[#allocation3] sm:$0xff]
    %v641 = vld [vmem:[#allocation4] sm:$0xff]
    %v642 = vld [vmem:[#allocation7] sm:$0xff]
    %v643 = vld [vmem:[#allocation7 + $0x8] sm:$0xff]
    %v644 = vld [vmem:[#allocation7 + $0x10] sm:$0xff]
    %v645 = vld [vmem:[#allocation7 + $0x18] sm:$0xff]
    %v646 = vld [vmem:[#allocation7 + $0x20] sm:$0xff]
    %v647 = vld [vmem:[#allocation7 + $0x28] sm:$0xff]
    %v648 = vld [vmem:[#allocation7 + $0x30] sm:$0xff]
    %v649 = vld [vmem:[#allocation7 + $0x38] sm:$0xff]
    %v650 = vld [vmem:[#allocation7 + $0x40] sm:$0xff]
    %v651 = vld [vmem:[#allocation7 + $0x48] sm:$0xff]
    %v652 = vld [vmem:[#allocation7 + $0x50] sm:$0xff]
    %v653 = vld [vmem:[#allocation7 + $0x58] sm:$0xff]
    %v654 = vld [vmem:[#allocation7 + $0x60] sm:$0xff]
    %v655 = vld [vmem:[#allocation7 + $0x68] sm:$0xff]
    %v656 = vld [vmem:[#allocation7 + $0x70] sm:$0xff]
    %v657 = vld [vmem:[#allocation7 + $0x78] sm:$0xff]
    %v659 = vsel %vm241, %v640, 0
    %661 = vmatprep.subr.mxu0 %v643
    %662 = vmatpush1.msra.mxu0 %v642
    %663 = vmatprep.subr.mxu0 %v645
    %664 = vmatpush1.msra.mxu0 %v644
    %665 = vmatprep.subr.mxu0 %v647
    %666 = vmatpush1.msra.mxu0 %v646
    %667 = vmatprep.subr.mxu0 %v649
    %668 = vmatpush1.msra.mxu0 %v648
    %669 = vmatprep.subr.mxu0 %v651
    %670 = vmatpush1.msra.mxu0 %v650
    %671 = vmatprep.subr.mxu0 %v653
    %672 = vmatpush1.msra.mxu0 %v652
    %673 = vmatprep.subr.mxu0 %v655
    %674 = vmatpush1.msra.mxu0 %v654
    %675 = vmatprep.subr.mxu0 %v657
    %676 = vmatpush1.msra.mxu0 %v656
    %677 = vmatprep.subr.mxu0 0.0
    %678 = vmatpush1.msra.mxu0 0.0
    %679 = vmatprep.subr.mxu0 0.0
    %680 = vmatpush1.msra.mxu0 0.0
    %681 = vmatprep.subr.mxu0 0.0
    %682 = vmatpush1.msra.mxu0 0.0
    %683 = vmatprep.subr.mxu0 0.0
    %684 = vmatpush1.msra.mxu0 0.0
    %685 = vmatprep.subr.mxu0 0.0
    %686 = vmatpush1.msra.mxu0 0.0
    %687 = vmatprep.subr.mxu0 0.0
    %688 = vmatpush1.msra.mxu0 0.0
    %689 = vmatprep.subr.mxu0 0.0
    %690 = vmatpush1.msra.mxu0 0.0
    %691 = vmatprep.subr.mxu0 0.0
    %692 = vmatpush1.msra.mxu0 0.0
    %693 = vmatprep.subr.mxu0 0.0
    %694 = vmatpush1.msra.mxu0 0.0
    %695 = vmatprep.subr.mxu0 0.0
    %696 = vmatpush1.msra.mxu0 0.0
    %697 = vmatprep.subr.mxu0 0.0
    %698 = vmatpush1.msra.mxu0 0.0
    %699 = vmatprep.subr.mxu0 0.0
    %700 = vmatpush1.msra.mxu0 0.0
    %701 = vmatprep.subr.mxu0 0.0
    %702 = vmatpush1.msra.mxu0 0.0
    %703 = vmatprep.subr.mxu0 0.0
    %704 = vmatpush1.msra.mxu0 0.0
    %705 = vmatprep.subr.mxu0 0.0
    %706 = vmatpush1.msra.mxu0 0.0
    %707 = vmatprep.subr.mxu0 0.0
    %708 = vmatpush1.msra.mxu0 0.0
    %709 = vmatprep.subr.mxu0 0.0
    %710 = vmatpush1.msra.mxu0 0.0
    %711 = vmatprep.subr.mxu0 0.0
    %712 = vmatpush1.msra.mxu0 0.0
    %713 = vmatprep.subr.mxu0 0.0
    %714 = vmatpush1.msra.mxu0 0.0
    %715 = vmatprep.subr.mxu0 0.0
    %716 = vmatpush1.msra.mxu0 0.0
    %717 = vmatprep.subr.mxu0 0.0
    %718 = vmatpush1.msra.mxu0 0.0
    %719 = vmatprep.subr.mxu0 0.0
    %720 = vmatpush1.msra.mxu0 0.0
    %721 = vmatprep.subr.mxu0 0.0
    %722 = vmatpush1.msra.mxu0 0.0
    %723 = vmatprep.subr.mxu0 0.0
    %724 = vmatpush1.msra.mxu0 0.0
    %725 = vmatprep.mubr.f32.mxu0 0.0
    %726 = vmatmul.mubr.f32.gmra.mrb[0].mxu0 %v659
    %v727 = vpop.f32.mrb[0].mxu0
    %v728 = vadd.f32 0.0, %v727
    %v729 = vpop.f32.mrb[0].mxu0
    %v730 = vadd.f32 0.0, %v729
    %731 = vdwg.mxu0
    %v732 = vld [vmem:[#allocation2 + $0x20] sm:$0xff]
    %v733 = vld [vmem:[#allocation2 + $0x58] sm:$0xff]
    %v734 = vadd.f32 %v732, %v728
    %v735 = vadd.f32 %v733, %v730
    %v736 = vxor.u32 %v734, 2147483648
    %v737 = vmul.f32 %v736, 1.442695
    %v738 = vpow.pop %v737
    %v739 = vadd.f32 %v738, 1.0
    %v740 = vrcp.pop %v739
    %v741 = vmul.f32 1.0, %v740
    %v742 = vtanh.pop %v734
    %744 = vrot.lane.b32.xlu0 %v641, 32
    %v745 = vpop.permute.xlu0 %744
    %v747 = vmul.f32 %v741, %v745
    %749 = vrot.lane.b32.xlu0 %v742, 64
    %v750 = vpop.permute.xlu0 %749
    %v752 = vmul.f32 %v741, %v750
    %754 = vrot.lane.b32.xlu0 %v752, 32
    %v755 = vpop.permute.xlu0 %754
    %v757 = vadd.f32 %v747, %v755
    %v758 = vtanh.pop %v757
    %760 = vrot.lane.b32.xlu0 %v758, 64
    %v761 = vpop.permute.xlu0 %760
    %v763 = vmul.f32 %v741, %v761
    %v764 = vxor.u32 %v735, 2147483648
    %v765 = vmul.f32 %v764, 1.442695
    %v766 = vpow.pop %v765
    %v767 = vadd.f32 %v766, 1.0
    %v768 = vrcp.pop %v767
    %v769 = vmul.f32 1.0, %v768
    %v770 = vtanh.pop %v735
    %v771 = vmul.f32 %v769, %v641
    %773 = vrot.lane.b32.xlu0 %v770, 64
    %v774 = vpop.permute.xlu0 %773
    %v776 = vmul.f32 %v769, %v774
    %778 = vrot.lane.b32.xlu0 %v776, 32
    %v779 = vpop.permute.xlu0 %778
    %v781 = vadd.f32 %v771, %v779
    %v782 = vtanh.pop %v781
    %784 = vrot.lane.b32.xlu0 %v782, 64
    %v785 = vpop.permute.xlu0 %784
    %v787 = vmul.f32 %v769, %v785
    %vm788 = vcmp.gt.s32.totalorder %v240, 2
    %vm789 = vcmp.gt.s32.totalorder %v240, 5
    %v790 = vsel %vm788, 1, 0
    %791 = vset.pattern.permute.xlu0 0
    %792 = vperm.xlu0 %791, %v790
    %v793 = vpop.permute.xlu0 %792
    %vm794 = vcmp.eq.s32.totalorder %v793, 1
    %795 = vrot.lane.b32.xlu0 %v640, 96
    %v796 = vpop.permute.xlu0 %795
    %v798 = vsel %vm794, %v763, %v796
    %v799 = vsel %vm794, %v757, %v745
    %v800 = vsel %vm789, 1, 0
    %801 = vset.pattern.permute.xlu0 0
    %802 = vperm.xlu0 %801, %v800
    %v803 = vpop.permute.xlu0 %802
    %vm804 = vcmp.eq.s32.totalorder %v803, 1
    %805 = vrot.lane.b32.xlu0 %v640, 64
    %v806 = vpop.permute.xlu0 %805
    %v808 = vsel %vm804, %v787, %v806
    %v809 = vsel %vm804, %v781, %v641
    %811 = vrot.lane.b32.xlu0 %v798, 32
    %v812 = vpop.permute.xlu0 %811
    %815 = vrot.lane.b32.xlu0 %v808, 64
    %v816 = vpop.permute.xlu0 %815
    %v818 = vsel %vm86, %v812, %v816
    %819 = vst.msk [vmem:[#allocation3] sm:$0xff] %vm241, %v818
    %821 = vrot.lane.b32.xlu0 %v799, 96
    %v822 = vpop.permute.xlu0 %821
    %v824 = vsel %vm86, %v822, %v809
    %825 = vst.msk [vmem:[#allocation4] sm:$0xff] %vm241, %v824
    %v826 = vsel %vm794, %v763, 0.0
    %828 = vrot.lane.b32.xlu0 %v826, 32
    %v829 = vpop.permute.xlu0 %828
    %831 = vst.msk [vmem:[#allocation5 + $0x10] sm:$0xff] %vm86, %v829
    %v832 = vsel %vm804, %v787, 0.0
    %834 = vrot.lane.b32.xlu0 %v832, 32
    %v835 = vpop.permute.xlu0 %834
    %837 = vst.msk [vmem:[#allocation6 + $0x28] sm:$0xff] %vm86, %v835
    %v838 = vld [vmem:[#allocation3] sm:$0xff]
    %v839 = vld [vmem:[#allocation4] sm:$0xff]
    %v840 = vld [vmem:[#allocation7] sm:$0xff]
    %v841 = vld [vmem:[#allocation7 + $0x8] sm:$0xff]
    %v842 = vld [vmem:[#allocation7 + $0x10] sm:$0xff]
    %v843 = vld [vmem:[#allocation7 + $0x18] sm:$0xff]
    %v844 = vld [vmem:[#allocation7 + $0x20] sm:$0xff]
    %v845 = vld [vmem:[#allocation7 + $0x28] sm:$0xff]
    %v846 = vld [vmem:[#allocation7 + $0x30] sm:$0xff]
    %v847 = vld [vmem:[#allocation7 + $0x38] sm:$0xff]
    %v848 = vld [vmem:[#allocation7 + $0x40] sm:$0xff]
    %v849 = vld [vmem:[#allocation7 + $0x48] sm:$0xff]
    %v850 = vld [vmem:[#allocation7 + $0x50] sm:$0xff]
    %v851 = vld [vmem:[#allocation7 + $0x58] sm:$0xff]
    %v852 = vld [vmem:[#allocation7 + $0x60] sm:$0xff]
    %v853 = vld [vmem:[#allocation7 + $0x68] sm:$0xff]
    %v854 = vld [vmem:[#allocation7 + $0x70] sm:$0xff]
    %v855 = vld [vmem:[#allocation7 + $0x78] sm:$0xff]
    %v857 = vsel %vm241, %v838, 0
    %859 = vmatprep.subr.mxu0 %v841
    %860 = vmatpush1.msra.mxu0 %v840
    %861 = vmatprep.subr.mxu0 %v843
    %862 = vmatpush1.msra.mxu0 %v842
    %863 = vmatprep.subr.mxu0 %v845
    %864 = vmatpush1.msra.mxu0 %v844
    %865 = vmatprep.subr.mxu0 %v847
    %866 = vmatpush1.msra.mxu0 %v846
    %867 = vmatprep.subr.mxu0 %v849
    %868 = vmatpush1.msra.mxu0 %v848
    %869 = vmatprep.subr.mxu0 %v851
    %870 = vmatpush1.msra.mxu0 %v850
    %871 = vmatprep.subr.mxu0 %v853
    %872 = vmatpush1.msra.mxu0 %v852
    %873 = vmatprep.subr.mxu0 %v855
    %874 = vmatpush1.msra.mxu0 %v854
    %875 = vmatprep.subr.mxu0 0.0
    %876 = vmatpush1.msra.mxu0 0.0
    %877 = vmatprep.subr.mxu0 0.0
    %878 = vmatpush1.msra.mxu0 0.0
    %879 = vmatprep.subr.mxu0 0.0
    %880 = vmatpush1.msra.mxu0 0.0
    %881 = vmatprep.subr.mxu0 0.0
    %882 = vmatpush1.msra.mxu0 0.0
    %883 = vmatprep.subr.mxu0 0.0
    %884 = vmatpush1.msra.mxu0 0.0
    %885 = vmatprep.subr.mxu0 0.0
    %886 = vmatpush1.msra.mxu0 0.0
    %887 = vmatprep.subr.mxu0 0.0
    %888 = vmatpush1.msra.mxu0 0.0
    %889 = vmatprep.subr.mxu0 0.0
    %890 = vmatpush1.msra.mxu0 0.0
    %891 = vmatprep.subr.mxu0 0.0
    %892 = vmatpush1.msra.mxu0 0.0
    %893 = vmatprep.subr.mxu0 0.0
    %894 = vmatpush1.msra.mxu0 0.0
    %895 = vmatprep.subr.mxu0 0.0
    %896 = vmatpush1.msra.mxu0 0.0
    %897 = vmatprep.subr.mxu0 0.0
    %898 = vmatpush1.msra.mxu0 0.0
    %899 = vmatprep.subr.mxu0 0.0
    %900 = vmatpush1.msra.mxu0 0.0
    %901 = vmatprep.subr.mxu0 0.0
    %902 = vmatpush1.msra.mxu0 0.0
    %903 = vmatprep.subr.mxu0 0.0
    %904 = vmatpush1.msra.mxu0 0.0
    %905 = vmatprep.subr.mxu0 0.0
    %906 = vmatpush1.msra.mxu0 0.0
    %907 = vmatprep.subr.mxu0 0.0
    %908 = vmatpush1.msra.mxu0 0.0
    %909 = vmatprep.subr.mxu0 0.0
    %910 = vmatpush1.msra.mxu0 0.0
    %911 = vmatprep.subr.mxu0 0.0
    %912 = vmatpush1.msra.mxu0 0.0
    %913 = vmatprep.subr.mxu0 0.0
    %914 = vmatpush1.msra.mxu0 0.0
    %915 = vmatprep.subr.mxu0 0.0
    %916 = vmatpush1.msra.mxu0 0.0
    %917 = vmatprep.subr.mxu0 0.0
    %918 = vmatpush1.msra.mxu0 0.0
    %919 = vmatprep.subr.mxu0 0.0
    %920 = vmatpush1.msra.mxu0 0.0
    %921 = vmatprep.subr.mxu0 0.0
    %922 = vmatpush1.msra.mxu0 0.0
    %923 = vmatprep.mubr.f32.mxu0 0.0
    %924 = vmatmul.mubr.f32.gmra.mrb[0].mxu0 %v857
    %v925 = vpop.f32.mrb[0].mxu0
    %v926 = vadd.f32 0.0, %v925
    %v927 = vpop.f32.mrb[0].mxu0
    %v928 = vadd.f32 0.0, %v927
    %929 = vdwg.mxu0
    %v930 = vld [vmem:[#allocation2 + $0x30] sm:$0xff]
    %v931 = vld [vmem:[#allocation2 + $0x48] sm:$0xff]
    %v932 = vadd.f32 %v930, %v926
    %v933 = vadd.f32 %v931, %v928
    %v934 = vxor.u32 %v932, 2147483648
    %v935 = vmul.f32 %v934, 1.442695
    %v936 = vpow.pop %v935
    %v937 = vadd.f32 %v936, 1.0
    %v938 = vrcp.pop %v937
    %v939 = vmul.f32 1.0, %v938
    %v940 = vtanh.pop %v932
    %942 = vrot.lane.b32.xlu0 %v839, 32
    %v943 = vpop.permute.xlu0 %942
    %v945 = vmul.f32 %v939, %v943
    %947 = vrot.lane.b32.xlu0 %v940, 64
    %v948 = vpop.permute.xlu0 %947
    %v950 = vmul.f32 %v939, %v948
    %952 = vrot.lane.b32.xlu0 %v950, 32
    %v953 = vpop.permute.xlu0 %952
    %v955 = vadd.f32 %v945, %v953
    %v956 = vtanh.pop %v955
    %958 = vrot.lane.b32.xlu0 %v956, 64
    %v959 = vpop.permute.xlu0 %958
    %v961 = vmul.f32 %v939, %v959
    %v962 = vxor.u32 %v933, 2147483648
    %v963 = vmul.f32 %v962, 1.442695
    %v964 = vpow.pop %v963
    %v965 = vadd.f32 %v964, 1.0
    %v966 = vrcp.pop %v965
    %v967 = vmul.f32 1.0, %v966
    %v968 = vtanh.pop %v933
    %v969 = vmul.f32 %v967, %v839
    %971 = vrot.lane.b32.xlu0 %v968, 64
    %v972 = vpop.permute.xlu0 %971
    %v974 = vmul.f32 %v967, %v972
    %976 = vrot.lane.b32.xlu0 %v974, 32
    %v977 = vpop.permute.xlu0 %976
    %v979 = vadd.f32 %v969, %v977
    %v980 = vtanh.pop %v979
    %982 = vrot.lane.b32.xlu0 %v980, 64
    %v983 = vpop.permute.xlu0 %982
    %v985 = vmul.f32 %v967, %v983
    %vm986 = vcmp.gt.s32.totalorder %v240, 3
    %vm987 = vcmp.gt.s32.totalorder %v240, 4
    %v988 = vsel %vm986, 1, 0
    %989 = vset.pattern.permute.xlu0 0
    %990 = vperm.xlu0 %989, %v988
    %v991 = vpop.permute.xlu0 %990
    %vm992 = vcmp.eq.s32.totalorder %v991, 1
    %993 = vrot.lane.b32.xlu0 %v838, 96
    %v994 = vpop.permute.xlu0 %993
    %v996 = vsel %vm992, %v961, %v994
    %v997 = vsel %vm992, %v955, %v943
    %v998 = vsel %vm987, 1, 0
    %999 = vset.pattern.permute.xlu0 0
    %1000 = vperm.xlu0 %999, %v998
    %v1001 = vpop.permute.xlu0 %1000
    %vm1002 = vcmp.eq.s32.totalorder %v1001, 1
    %1003 = vrot.lane.b32.xlu0 %v838, 64
    %v1004 = vpop.permute.xlu0 %1003
    %v1006 = vsel %vm1002, %v985, %v1004
    %v1007 = vsel %vm1002, %v979, %v839
    %1009 = vrot.lane.b32.xlu0 %v996, 32
    %v1010 = vpop.permute.xlu0 %1009
    %1013 = vrot.lane.b32.xlu0 %v1006, 64
    %v1014 = vpop.permute.xlu0 %1013
    %v1016 = vsel %vm86, %v1010, %v1014
    %1017 = vst.msk [vmem:[#allocation3] sm:$0xff] %vm241, %v1016
    %1019 = vrot.lane.b32.xlu0 %v997, 96
    %v1020 = vpop.permute.xlu0 %1019
    %v1022 = vsel %vm86, %v1020, %v1007
    %1023 = vst.msk [vmem:[#allocation4] sm:$0xff] %vm241, %v1022
    %v1024 = vsel %vm992, %v961, 0.0
    %1026 = vrot.lane.b32.xlu0 %v1024, 32
    %v1027 = vpop.permute.xlu0 %1026
    %1029 = vst.msk [vmem:[#allocation5 + $0x18] sm:$0xff] %vm86, %v1027
    %v1030 = vsel %vm1002, %v985, 0.0
    %1032 = vrot.lane.b32.xlu0 %v1030, 32
    %v1033 = vpop.permute.xlu0 %1032
    %1035 = vst.msk [vmem:[#allocation6 + $0x20] sm:$0xff] %vm86, %v1033
    %v1036 = vld [vmem:[#allocation3] sm:$0xff]
    %v1037 = vld [vmem:[#allocation4] sm:$0xff]
    %v1038 = vld [vmem:[#allocation7] sm:$0xff]
    %v1039 = vld [vmem:[#allocation7 + $0x8] sm:$0xff]
    %v1040 = vld [vmem:[#allocation7 + $0x10] sm:$0xff]
    %v1041 = vld [vmem:[#allocation7 + $0x18] sm:$0xff]
    %v1042 = vld [vmem:[#allocation7 + $0x20] sm:$0xff]
    %v1043 = vld [vmem:[#allocation7 + $0x28] sm:$0xff]
    %v1044 = vld [vmem:[#allocation7 + $0x30] sm:$0xff]
    %v1045 = vld [vmem:[#allocation7 + $0x38] sm:$0xff]
    %v1046 = vld [vmem:[#allocation7 + $0x40] sm:$0xff]
    %v1047 = vld [vmem:[#allocation7 + $0x48] sm:$0xff]
    %v1048 = vld [vmem:[#allocation7 + $0x50] sm:$0xff]
    %v1049 = vld [vmem:[#allocation7 + $0x58] sm:$0xff]
    %v1050 = vld [vmem:[#allocation7 + $0x60] sm:$0xff]
    %v1051 = vld [vmem:[#allocation7 + $0x68] sm:$0xff]
    %v1052 = vld [vmem:[#allocation7 + $0x70] sm:$0xff]
    %v1053 = vld [vmem:[#allocation7 + $0x78] sm:$0xff]
    %v1055 = vsel %vm241, %v1036, 0
    %1057 = vmatprep.subr.mxu0 %v1039
    %1058 = vmatpush1.msra.mxu0 %v1038
    %1059 = vmatprep.subr.mxu0 %v1041
    %1060 = vmatpush1.msra.mxu0 %v1040
    %1061 = vmatprep.subr.mxu0 %v1043
    %1062 = vmatpush1.msra.mxu0 %v1042
    %1063 = vmatprep.subr.mxu0 %v1045
    %1064 = vmatpush1.msra.mxu0 %v1044
    %1065 = vmatprep.subr.mxu0 %v1047
    %1066 = vmatpush1.msra.mxu0 %v1046
    %1067 = vmatprep.subr.mxu0 %v1049
    %1068 = vmatpush1.msra.mxu0 %v1048
    %1069 = vmatprep.subr.mxu0 %v1051
    %1070 = vmatpush1.msra.mxu0 %v1050
    %1071 = vmatprep.subr.mxu0 %v1053
    %1072 = vmatpush1.msra.mxu0 %v1052
    %1073 = vmatprep.subr.mxu0 0.0
    %1074 = vmatpush1.msra.mxu0 0.0
    %1075 = vmatprep.subr.mxu0 0.0
    %1076 = vmatpush1.msra.mxu0 0.0
    %1077 = vmatprep.subr.mxu0 0.0
    %1078 = vmatpush1.msra.mxu0 0.0
    %1079 = vmatprep.subr.mxu0 0.0
    %1080 = vmatpush1.msra.mxu0 0.0
    %1081 = vmatprep.subr.mxu0 0.0
    %1082 = vmatpush1.msra.mxu0 0.0
    %1083 = vmatprep.subr.mxu0 0.0
    %1084 = vmatpush1.msra.mxu0 0.0
    %1085 = vmatprep.subr.mxu0 0.0
    %1086 = vmatpush1.msra.mxu0 0.0
    %1087 = vmatprep.subr.mxu0 0.0
    %1088 = vmatpush1.msra.mxu0 0.0
    %1089 = vmatprep.subr.mxu0 0.0
    %1090 = vmatpush1.msra.mxu0 0.0
    %1091 = vmatprep.subr.mxu0 0.0
    %1092 = vmatpush1.msra.mxu0 0.0
    %1093 = vmatprep.subr.mxu0 0.0
    %1094 = vmatpush1.msra.mxu0 0.0
    %1095 = vmatprep.subr.mxu0 0.0
    %1096 = vmatpush1.msra.mxu0 0.0
    %1097 = vmatprep.subr.mxu0 0.0
    %1098 = vmatpush1.msra.mxu0 0.0
    %1099 = vmatprep.subr.mxu0 0.0
    %1100 = vmatpush1.msra.mxu0 0.0
    %1101 = vmatprep.subr.mxu0 0.0
    %1102 = vmatpush1.msra.mxu0 0.0
    %1103 = vmatprep.subr.mxu0 0.0
    %1104 = vmatpush1.msra.mxu0 0.0
    %1105 = vmatprep.subr.mxu0 0.0
    %1106 = vmatpush1.msra.mxu0 0.0
    %1107 = vmatprep.subr.mxu0 0.0
    %1108 = vmatpush1.msra.mxu0 0.0
    %1109 = vmatprep.subr.mxu0 0.0
    %1110 = vmatpush1.msra.mxu0 0.0
    %1111 = vmatprep.subr.mxu0 0.0
    %1112 = vmatpush1.msra.mxu0 0.0
    %1113 = vmatprep.subr.mxu0 0.0
    %1114 = vmatpush1.msra.mxu0 0.0
    %1115 = vmatprep.subr.mxu0 0.0
    %1116 = vmatpush1.msra.mxu0 0.0
    %1117 = vmatprep.subr.mxu0 0.0
    %1118 = vmatpush1.msra.mxu0 0.0
    %1119 = vmatprep.subr.mxu0 0.0
    %1120 = vmatpush1.msra.mxu0 0.0
    %1121 = vmatprep.mubr.f32.mxu0 0.0
    %1122 = vmatmul.mubr.f32.gmra.mrb[0].mxu0 %v1055
    %v1123 = vpop.f32.mrb[0].mxu0
    %v1124 = vadd.f32 0.0, %v1123
    %v1125 = vpop.f32.mrb[0].mxu0
    %v1126 = vadd.f32 0.0, %v1125
    %1127 = vdwg.mxu0
    %v1128 = vld [vmem:[#allocation2 + $0x40] sm:$0xff]
    %v1129 = vld [vmem:[#allocation2 + $0x38] sm:$0xff]
    %v1130 = vadd.f32 %v1128, %v1124
    %v1131 = vadd.f32 %v1129, %v1126
    %v1132 = vxor.u32 %v1130, 2147483648
    %v1133 = vmul.f32 %v1132, 1.442695
    %v1134 = vpow.pop %v1133
    %v1135 = vadd.f32 %v1134, 1.0
    %v1136 = vrcp.pop %v1135
    %v1137 = vmul.f32 1.0, %v1136
    %v1138 = vtanh.pop %v1130
    %1140 = vrot.lane.b32.xlu0 %v1037, 32
    %v1141 = vpop.permute.xlu0 %1140
    %v1143 = vmul.f32 %v1137, %v1141
    %1145 = vrot.lane.b32.xlu0 %v1138, 64
    %v1146 = vpop.permute.xlu0 %1145
    %v1148 = vmul.f32 %v1137, %v1146
    %1150 = vrot.lane.b32.xlu0 %v1148, 32
    %v1151 = vpop.permute.xlu0 %1150
    %v1153 = vadd.f32 %v1143, %v1151
    %v1154 = vtanh.pop %v1153
    %1156 = vrot.lane.b32.xlu0 %v1154, 64
    %v1157 = vpop.permute.xlu0 %1156
    %v1159 = vmul.f32 %v1137, %v1157
    %v1160 = vxor.u32 %v1131, 2147483648
    %v1161 = vmul.f32 %v1160, 1.442695
    %v1162 = vpow.pop %v1161
    %v1163 = vadd.f32 %v1162, 1.0
    %v1164 = vrcp.pop %v1163
    %v1165 = vmul.f32 1.0, %v1164
    %v1166 = vtanh.pop %v1131
    %v1167 = vmul.f32 %v1165, %v1037
    %1169 = vrot.lane.b32.xlu0 %v1166, 64
    %v1170 = vpop.permute.xlu0 %1169
    %v1172 = vmul.f32 %v1165, %v1170
    %1174 = vrot.lane.b32.xlu0 %v1172, 32
    %v1175 = vpop.permute.xlu0 %1174
    %v1177 = vadd.f32 %v1167, %v1175
    %v1178 = vtanh.pop %v1177
    %1180 = vrot.lane.b32.xlu0 %v1178, 64
    %v1181 = vpop.permute.xlu0 %1180
    %v1183 = vmul.f32 %v1165, %v1181
    %1184 = vrot.lane.b32.xlu0 %v1036, 96
    %v1185 = vpop.permute.xlu0 %1184
    %v1187 = vsel %vm1002, %v1159, %v1185
    %v1188 = vsel %vm1002, %v1153, %v1141
    %1189 = vrot.lane.b32.xlu0 %v1036, 64
    %v1190 = vpop.permute.xlu0 %1189
    %v1192 = vsel %vm992, %v1183, %v1190
    %v1193 = vsel %vm992, %v1177, %v1037
    %1195 = vrot.lane.b32.xlu0 %v1187, 32
    %v1196 = vpop.permute.xlu0 %1195
    %1199 = vrot.lane.b32.xlu0 %v1192, 64
    %v1200 = vpop.permute.xlu0 %1199
    %v1202 = vsel %vm86, %v1196, %v1200
    %1203 = vst.msk [vmem:[#allocation3] sm:$0xff] %vm241, %v1202
    %1205 = vrot.lane.b32.xlu0 %v1188, 96
    %v1206 = vpop.permute.xlu0 %1205
    %v1208 = vsel %vm86, %v1206, %v1193
    %1209 = vst.msk [vmem:[#allocation4] sm:$0xff] %vm241, %v1208
    %v1210 = vsel %vm1002, %v1159, 0.0
    %1212 = vrot.lane.b32.xlu0 %v1210, 32
    %v1213 = vpop.permute.xlu0 %1212
    %1215 = vst.msk [vmem:[#allocation5 + $0x20] sm:$0xff] %vm86, %v1213
    %v1216 = vsel %vm992, %v1183, 0.0
    %1218 = vrot.lane.b32.xlu0 %v1216, 32
    %v1219 = vpop.permute.xlu0 %1218
    %1221 = vst.msk [vmem:[#allocation6 + $0x18] sm:$0xff] %vm86, %v1219
    %v1222 = vld [vmem:[#allocation3] sm:$0xff]
    %v1223 = vld [vmem:[#allocation4] sm:$0xff]
    %v1224 = vld [vmem:[#allocation7] sm:$0xff]
    %v1225 = vld [vmem:[#allocation7 + $0x8] sm:$0xff]
    %v1226 = vld [vmem:[#allocation7 + $0x10] sm:$0xff]
    %v1227 = vld [vmem:[#allocation7 + $0x18] sm:$0xff]
    %v1228 = vld [vmem:[#allocation7 + $0x20] sm:$0xff]
    %v1229 = vld [vmem:[#allocation7 + $0x28] sm:$0xff]
    %v1230 = vld [vmem:[#allocation7 + $0x30] sm:$0xff]
    %v1231 = vld [vmem:[#allocation7 + $0x38] sm:$0xff]
    %v1232 = vld [vmem:[#allocation7 + $0x40] sm:$0xff]
    %v1233 = vld [vmem:[#allocation7 + $0x48] sm:$0xff]
    %v1234 = vld [vmem:[#allocation7 + $0x50] sm:$0xff]
    %v1235 = vld [vmem:[#allocation7 + $0x58] sm:$0xff]
    %v1236 = vld [vmem:[#allocation7 + $0x60] sm:$0xff]
    %v1237 = vld [vmem:[#allocation7 + $0x68] sm:$0xff]
    %v1238 = vld [vmem:[#allocation7 + $0x70] sm:$0xff]
    %v1239 = vld [vmem:[#allocation7 + $0x78] sm:$0xff]
    %v1241 = vsel %vm241, %v1222, 0
    %1243 = vmatprep.subr.mxu0 %v1225
    %1244 = vmatpush1.msra.mxu0 %v1224
    %1245 = vmatprep.subr.mxu0 %v1227
    %1246 = vmatpush1.msra.mxu0 %v1226
    %1247 = vmatprep.subr.mxu0 %v1229
    %1248 = vmatpush1.msra.mxu0 %v1228
    %1249 = vmatprep.subr.mxu0 %v1231
    %1250 = vmatpush1.msra.mxu0 %v1230
    %1251 = vmatprep.subr.mxu0 %v1233
    %1252 = vmatpush1.msra.mxu0 %v1232
    %1253 = vmatprep.subr.mxu0 %v1235
    %1254 = vmatpush1.msra.mxu0 %v1234
    %1255 = vmatprep.subr.mxu0 %v1237
    %1256 = vmatpush1.msra.mxu0 %v1236
    %1257 = vmatprep.subr.mxu0 %v1239
    %1258 = vmatpush1.msra.mxu0 %v1238
    %1259 = vmatprep.subr.mxu0 0.0
    %1260 = vmatpush1.msra.mxu0 0.0
    %1261 = vmatprep.subr.mxu0 0.0
    %1262 = vmatpush1.msra.mxu0 0.0
    %1263 = vmatprep.subr.mxu0 0.0
    %1264 = vmatpush1.msra.mxu0 0.0
    %1265 = vmatprep.subr.mxu0 0.0
    %1266 = vmatpush1.msra.mxu0 0.0
    %1267 = vmatprep.subr.mxu0 0.0
    %1268 = vmatpush1.msra.mxu0 0.0
    %1269 = vmatprep.subr.mxu0 0.0
    %1270 = vmatpush1.msra.mxu0 0.0
    %1271 = vmatprep.subr.mxu0 0.0
    %1272 = vmatpush1.msra.mxu0 0.0
    %1273 = vmatprep.subr.mxu0 0.0
    %1274 = vmatpush1.msra.mxu0 0.0
    %1275 = vmatprep.subr.mxu0 0.0
    %1276 = vmatpush1.msra.mxu0 0.0
    %1277 = vmatprep.subr.mxu0 0.0
    %1278 = vmatpush1.msra.mxu0 0.0
    %1279 = vmatprep.subr.mxu0 0.0
    %1280 = vmatpush1.msra.mxu0 0.0
    %1281 = vmatprep.subr.mxu0 0.0
    %1282 = vmatpush1.msra.mxu0 0.0
    %1283 = vmatprep.subr.mxu0 0.0
    %1284 = vmatpush1.msra.mxu0 0.0
    %1285 = vmatprep.subr.mxu0 0.0
    %1286 = vmatpush1.msra.mxu0 0.0
    %1287 = vmatprep.subr.mxu0 0.0
    %1288 = vmatpush1.msra.mxu0 0.0
    %1289 = vmatprep.subr.mxu0 0.0
    %1290 = vmatpush1.msra.mxu0 0.0
    %1291 = vmatprep.subr.mxu0 0.0
    %1292 = vmatpush1.msra.mxu0 0.0
    %1293 = vmatprep.subr.mxu0 0.0
    %1294 = vmatpush1.msra.mxu0 0.0
    %1295 = vmatprep.subr.mxu0 0.0
    %1296 = vmatpush1.msra.mxu0 0.0
    %1297 = vmatprep.subr.mxu0 0.0
    %1298 = vmatpush1.msra.mxu0 0.0
    %1299 = vmatprep.subr.mxu0 0.0
    %1300 = vmatpush1.msra.mxu0 0.0
    %1301 = vmatprep.subr.mxu0 0.0
    %1302 = vmatpush1.msra.mxu0 0.0
    %1303 = vmatprep.subr.mxu0 0.0
    %1304 = vmatpush1.msra.mxu0 0.0
    %1305 = vmatprep.subr.mxu0 0.0
    %1306 = vmatpush1.msra.mxu0 0.0
    %1307 = vmatprep.mubr.f32.mxu0 0.0
    %1308 = vmatmul.mubr.f32.gmra.mrb[0].mxu0 %v1241
    %v1309 = vpop.f32.mrb[0].mxu0
    %v1310 = vadd.f32 0.0, %v1309
    %v1311 = vpop.f32.mrb[0].mxu0
    %v1312 = vadd.f32 0.0, %v1311
    %1313 = vdwg.mxu0
    %v1314 = vld [vmem:[#allocation2 + $0x50] sm:$0xff]
    %v1315 = vld [vmem:[#allocation2 + $0x28] sm:$0xff]
    %v1316 = vadd.f32 %v1314, %v1310
    %v1317 = vadd.f32 %v1315, %v1312
    %v1318 = vxor.u32 %v1316, 2147483648
    %v1319 = vmul.f32 %v1318, 1.442695
    %v1320 = vpow.pop %v1319
    %v1321 = vadd.f32 %v1320, 1.0
    %v1322 = vrcp.pop %v1321
    %v1323 = vmul.f32 1.0, %v1322
    %v1324 = vtanh.pop %v1316
    %1326 = vrot.lane.b32.xlu0 %v1223, 32
    %v1327 = vpop.permute.xlu0 %1326
    %v1329 = vmul.f32 %v1323, %v1327
    %1331 = vrot.lane.b32.xlu0 %v1324, 64
    %v1332 = vpop.permute.xlu0 %1331
    %v1334 = vmul.f32 %v1323, %v1332
    %1336 = vrot.lane.b32.xlu0 %v1334, 32
    %v1337 = vpop.permute.xlu0 %1336
    %v1339 = vadd.f32 %v1329, %v1337
    %v1340 = vtanh.pop %v1339
    %1342 = vrot.lane.b32.xlu0 %v1340, 64
    %v1343 = vpop.permute.xlu0 %1342
    %v1345 = vmul.f32 %v1323, %v1343
    %v1346 = vxor.u32 %v1317, 2147483648
    %v1347 = vmul.f32 %v1346, 1.442695
    %v1348 = vpow.pop %v1347
    %v1349 = vadd.f32 %v1348, 1.0
    %v1350 = vrcp.pop %v1349
    %v1351 = vmul.f32 1.0, %v1350
    %v1352 = vtanh.pop %v1317
    %v1353 = vmul.f32 %v1351, %v1223
    %1355 = vrot.lane.b32.xlu0 %v1352, 64
    %v1356 = vpop.permute.xlu0 %1355
    %v1358 = vmul.f32 %v1351, %v1356
    %1360 = vrot.lane.b32.xlu0 %v1358, 32
    %v1361 = vpop.permute.xlu0 %1360
    %v1363 = vadd.f32 %v1353, %v1361
    %v1364 = vtanh.pop %v1363
    %1366 = vrot.lane.b32.xlu0 %v1364, 64
    %v1367 = vpop.permute.xlu0 %1366
    %v1369 = vmul.f32 %v1351, %v1367
    %1370 = vrot.lane.b32.xlu0 %v1222, 96
    %v1371 = vpop.permute.xlu0 %1370
    %v1373 = vsel %vm804, %v1345, %v1371
    %v1374 = vsel %vm804, %v1339, %v1327
    %1375 = vrot.lane.b32.xlu0 %v1222, 64
    %v1376 = vpop.permute.xlu0 %1375
    %v1378 = vsel %vm794, %v1369, %v1376
    %v1379 = vsel %vm794, %v1363, %v1223
    %1381 = vrot.lane.b32.xlu0 %v1373, 32
    %v1382 = vpop.permute.xlu0 %1381
    %1385 = vrot.lane.b32.xlu0 %v1378, 64
    %v1386 = vpop.permute.xlu0 %1385
    %v1388 = vsel %vm86, %v1382, %v1386
    %1389 = vst.msk [vmem:[#allocation3] sm:$0xff] %vm241, %v1388
    %1391 = vrot.lane.b32.xlu0 %v1374, 96
    %v1392 = vpop.permute.xlu0 %1391
    %v1394 = vsel %vm86, %v1392, %v1379
    %1395 = vst.msk [vmem:[#allocation4] sm:$0xff] %vm241, %v1394
    %v1396 = vsel %vm804, %v1345, 0.0
    %1398 = vrot.lane.b32.xlu0 %v1396, 32
    %v1399 = vpop.permute.xlu0 %1398
    %1401 = vst.msk [vmem:[#allocation5 + $0x28] sm:$0xff] %vm86, %v1399
    %v1402 = vsel %vm794, %v1369, 0.0
    %1404 = vrot.lane.b32.xlu0 %v1402, 32
    %v1405 = vpop.permute.xlu0 %1404
    %1407 = vst.msk [vmem:[#allocation6 + $0x10] sm:$0xff] %vm86, %v1405
    %v1408 = vld [vmem:[#allocation3] sm:$0xff]
    %v1409 = vld [vmem:[#allocation4] sm:$0xff]
    %v1410 = vld [vmem:[#allocation7] sm:$0xff]
    %v1411 = vld [vmem:[#allocation7 + $0x8] sm:$0xff]
    %v1412 = vld [vmem:[#allocation7 + $0x10] sm:$0xff]
    %v1413 = vld [vmem:[#allocation7 + $0x18] sm:$0xff]
    %v1414 = vld [vmem:[#allocation7 + $0x20] sm:$0xff]
    %v1415 = vld [vmem:[#allocation7 + $0x28] sm:$0xff]
    %v1416 = vld [vmem:[#allocation7 + $0x30] sm:$0xff]
    %v1417 = vld [vmem:[#allocation7 + $0x38] sm:$0xff]
    %v1418 = vld [vmem:[#allocation7 + $0x40] sm:$0xff]
    %v1419 = vld [vmem:[#allocation7 + $0x48] sm:$0xff]
    %v1420 = vld [vmem:[#allocation7 + $0x50] sm:$0xff]
    %v1421 = vld [vmem:[#allocation7 + $0x58] sm:$0xff]
    %v1422 = vld [vmem:[#allocation7 + $0x60] sm:$0xff]
    %v1423 = vld [vmem:[#allocation7 + $0x68] sm:$0xff]
    %v1424 = vld [vmem:[#allocation7 + $0x70] sm:$0xff]
    %v1425 = vld [vmem:[#allocation7 + $0x78] sm:$0xff]
    %v1427 = vsel %vm241, %v1408, 0
    %1429 = vmatprep.subr.mxu0 %v1411
    %1430 = vmatpush1.msra.mxu0 %v1410
    %1431 = vmatprep.subr.mxu0 %v1413
    %1432 = vmatpush1.msra.mxu0 %v1412
    %1433 = vmatprep.subr.mxu0 %v1415
    %1434 = vmatpush1.msra.mxu0 %v1414
    %1435 = vmatprep.subr.mxu0 %v1417
    %1436 = vmatpush1.msra.mxu0 %v1416
    %1437 = vmatprep.subr.mxu0 %v1419
    %1438 = vmatpush1.msra.mxu0 %v1418
    %1439 = vmatprep.subr.mxu0 %v1421
    %1440 = vmatpush1.msra.mxu0 %v1420
    %1441 = vmatprep.subr.mxu0 %v1423
    %1442 = vmatpush1.msra.mxu0 %v1422
    %1443 = vmatprep.subr.mxu0 %v1425
    %1444 = vmatpush1.msra.mxu0 %v1424
    %1445 = vmatprep.subr.mxu0 0.0
    %1446 = vmatpush1.msra.mxu0 0.0
    %1447 = vmatprep.subr.mxu0 0.0
    %1448 = vmatpush1.msra.mxu0 0.0
    %1449 = vmatprep.subr.mxu0 0.0
    %1450 = vmatpush1.msra.mxu0 0.0
    %1451 = vmatprep.subr.mxu0 0.0
    %1452 = vmatpush1.msra.mxu0 0.0
    %1453 = vmatprep.subr.mxu0 0.0
    %1454 = vmatpush1.msra.mxu0 0.0
    %1455 = vmatprep.subr.mxu0 0.0
    %1456 = vmatpush1.msra.mxu0 0.0
    %1457 = vmatprep.subr.mxu0 0.0
    %1458 = vmatpush1.msra.mxu0 0.0
    %1459 = vmatprep.subr.mxu0 0.0
    %1460 = vmatpush1.msra.mxu0 0.0
    %1461 = vmatprep.subr.mxu0 0.0
    %1462 = vmatpush1.msra.mxu0 0.0
    %1463 = vmatprep.subr.mxu0 0.0
    %1464 = vmatpush1.msra.mxu0 0.0
    %1465 = vmatprep.subr.mxu0 0.0
    %1466 = vmatpush1.msra.mxu0 0.0
    %1467 = vmatprep.subr.mxu0 0.0
    %1468 = vmatpush1.msra.mxu0 0.0
    %1469 = vmatprep.subr.mxu0 0.0
    %1470 = vmatpush1.msra.mxu0 0.0
    %1471 = vmatprep.subr.mxu0 0.0
    %1472 = vmatpush1.msra.mxu0 0.0
    %1473 = vmatprep.subr.mxu0 0.0
    %1474 = vmatpush1.msra.mxu0 0.0
    %1475 = vmatprep.subr.mxu0 0.0
    %1476 = vmatpush1.msra.mxu0 0.0
    %1477 = vmatprep.subr.mxu0 0.0
    %1478 = vmatpush1.msra.mxu0 0.0
    %1479 = vmatprep.subr.mxu0 0.0
    %1480 = vmatpush1.msra.mxu0 0.0
    %1481 = vmatprep.subr.mxu0 0.0
    %1482 = vmatpush1.msra.mxu0 0.0
    %1483 = vmatprep.subr.mxu0 0.0
    %1484 = vmatpush1.msra.mxu0 0.0
    %1485 = vmatprep.subr.mxu0 0.0
    %1486 = vmatpush1.msra.mxu0 0.0
    %1487 = vmatprep.subr.mxu0 0.0
    %1488 = vmatpush1.msra.mxu0 0.0
    %1489 = vmatprep.subr.mxu0 0.0
    %1490 = vmatpush1.msra.mxu0 0.0
    %1491 = vmatprep.subr.mxu0 0.0
    %1492 = vmatpush1.msra.mxu0 0.0
    %1493 = vmatprep.mubr.f32.mxu0 0.0
    %1494 = vmatmul.mubr.f32.gmra.mrb[0].mxu0 %v1427
    %v1495 = vpop.f32.mrb[0].mxu0
    %v1496 = vadd.f32 0.0, %v1495
    %v1497 = vpop.f32.mrb[0].mxu0
    %v1498 = vadd.f32 0.0, %v1497
    %1499 = vdwg.mxu0
    %v1500 = vld [vmem:[#allocation2 + $0x60] sm:$0xff]
    %v1501 = vld [vmem:[#allocation2 + $0x18] sm:$0xff]
    %v1502 = vadd.f32 %v1500, %v1496
    %v1503 = vadd.f32 %v1501, %v1498
    %v1504 = vxor.u32 %v1502, 2147483648
    %v1505 = vmul.f32 %v1504, 1.442695
    %v1506 = vpow.pop %v1505
    %v1507 = vadd.f32 %v1506, 1.0
    %v1508 = vrcp.pop %v1507
    %v1509 = vmul.f32 1.0, %v1508
    %v1510 = vtanh.pop %v1502
    %1512 = vrot.lane.b32.xlu0 %v1409, 32
    %v1513 = vpop.permute.xlu0 %1512
    %v1515 = vmul.f32 %v1509, %v1513
    %1517 = vrot.lane.b32.xlu0 %v1510, 64
    %v1518 = vpop.permute.xlu0 %1517
    %v1520 = vmul.f32 %v1509, %v1518
    %1522 = vrot.lane.b32.xlu0 %v1520, 32
    %v1523 = vpop.permute.xlu0 %1522
    %v1525 = vadd.f32 %v1515, %v1523
    %v1526 = vtanh.pop %v1525
    %1528 = vrot.lane.b32.xlu0 %v1526, 64
    %v1529 = vpop.permute.xlu0 %1528
    %v1531 = vmul.f32 %v1509, %v1529
    %v1532 = vxor.u32 %v1503, 2147483648
    %v1533 = vmul.f32 %v1532, 1.442695
    %v1534 = vpow.pop %v1533
    %v1535 = vadd.f32 %v1534, 1.0
    %v1536 = vrcp.pop %v1535
    %v1537 = vmul.f32 1.0, %v1536
    %v1538 = vtanh.pop %v1503
    %v1539 = vmul.f32 %v1537, %v1409
    %1541 = vrot.lane.b32.xlu0 %v1538, 64
    %v1542 = vpop.permute.xlu0 %1541
    %v1544 = vmul.f32 %v1537, %v1542
    %1546 = vrot.lane.b32.xlu0 %v1544, 32
    %v1547 = vpop.permute.xlu0 %1546
    %v1549 = vadd.f32 %v1539, %v1547
    %v1550 = vtanh.pop %v1549
    %1552 = vrot.lane.b32.xlu0 %v1550, 64
    %v1553 = vpop.permute.xlu0 %1552
    %v1555 = vmul.f32 %v1537, %v1553
    %1556 = vrot.lane.b32.xlu0 %v1408, 96
    %v1557 = vpop.permute.xlu0 %1556
    %v1559 = vsel %vm606, %v1531, %v1557
    %v1560 = vsel %vm606, %v1525, %v1513
    %1561 = vrot.lane.b32.xlu0 %v1408, 64
    %v1562 = vpop.permute.xlu0 %1561
    %v1564 = vsel %vm596, %v1555, %v1562
    %v1565 = vsel %vm596, %v1549, %v1409
    %1567 = vrot.lane.b32.xlu0 %v1559, 32
    %v1568 = vpop.permute.xlu0 %1567
    %1571 = vrot.lane.b32.xlu0 %v1564, 64
    %v1572 = vpop.permute.xlu0 %1571
    %v1574 = vsel %vm86, %v1568, %v1572
    %1575 = vst.msk [vmem:[#allocation3] sm:$0xff] %vm241, %v1574
    %1577 = vrot.lane.b32.xlu0 %v1560, 96
    %v1578 = vpop.permute.xlu0 %1577
    %v1580 = vsel %vm86, %v1578, %v1565
    %1581 = vst.msk [vmem:[#allocation4] sm:$0xff] %vm241, %v1580
    %v1582 = vsel %vm606, %v1531, 0.0
    %1584 = vrot.lane.b32.xlu0 %v1582, 32
    %v1585 = vpop.permute.xlu0 %1584
    %1587 = vst.msk [vmem:[#allocation5 + $0x30] sm:$0xff] %vm86, %v1585
    %v1588 = vsel %vm596, %v1555, 0.0
    %1590 = vrot.lane.b32.xlu0 %v1588, 32
    %v1591 = vpop.permute.xlu0 %1590
    %1593 = vst.msk [vmem:[#allocation6 + $0x8] sm:$0xff] %vm86, %v1591
    %v1594 = vld [vmem:[#allocation3] sm:$0xff]
    %v1595 = vld [vmem:[#allocation4] sm:$0xff]
    %v1596 = vld [vmem:[#allocation7] sm:$0xff]
    %v1597 = vld [vmem:[#allocation7 + $0x8] sm:$0xff]
    %v1598 = vld [vmem:[#allocation7 + $0x10] sm:$0xff]
    %v1599 = vld [vmem:[#allocation7 + $0x18] sm:$0xff]
    %v1600 = vld [vmem:[#allocation7 + $0x20] sm:$0xff]
    %v1601 = vld [vmem:[#allocation7 + $0x28] sm:$0xff]
    %v1602 = vld [vmem:[#allocation7 + $0x30] sm:$0xff]
    %v1603 = vld [vmem:[#allocation7 + $0x38] sm:$0xff]
    %v1604 = vld [vmem:[#allocation7 + $0x40] sm:$0xff]
    %v1605 = vld [vmem:[#allocation7 + $0x48] sm:$0xff]
    %v1606 = vld [vmem:[#allocation7 + $0x50] sm:$0xff]
    %v1607 = vld [vmem:[#allocation7 + $0x58] sm:$0xff]
    %v1608 = vld [vmem:[#allocation7 + $0x60] sm:$0xff]
    %v1609 = vld [vmem:[#allocation7 + $0x68] sm:$0xff]
    %v1610 = vld [vmem:[#allocation7 + $0x70] sm:$0xff]
    %v1611 = vld [vmem:[#allocation7 + $0x78] sm:$0xff]
    %v1613 = vsel %vm241, %v1594, 0
    %1615 = vmatprep.subr.mxu0 %v1597
    %1616 = vmatpush1.msra.mxu0 %v1596
    %1617 = vmatprep.subr.mxu0 %v1599
    %1618 = vmatpush1.msra.mxu0 %v1598
    %1619 = vmatprep.subr.mxu0 %v1601
    %1620 = vmatpush1.msra.mxu0 %v1600
    %1621 = vmatprep.subr.mxu0 %v1603
    %1622 = vmatpush1.msra.mxu0 %v1602
    %1623 = vmatprep.subr.mxu0 %v1605
    %1624 = vmatpush1.msra.mxu0 %v1604
    %1625 = vmatprep.subr.mxu0 %v1607
    %1626 = vmatpush1.msra.mxu0 %v1606
    %1627 = vmatprep.subr.mxu0 %v1609
    %1628 = vmatpush1.msra.mxu0 %v1608
    %1629 = vmatprep.subr.mxu0 %v1611
    %1630 = vmatpush1.msra.mxu0 %v1610
    %1631 = vmatprep.subr.mxu0 0.0
    %1632 = vmatpush1.msra.mxu0 0.0
    %1633 = vmatprep.subr.mxu0 0.0
    %1634 = vmatpush1.msra.mxu0 0.0
    %1635 = vmatprep.subr.mxu0 0.0
    %1636 = vmatpush1.msra.mxu0 0.0
    %1637 = vmatprep.subr.mxu0 0.0
    %1638 = vmatpush1.msra.mxu0 0.0
    %1639 = vmatprep.subr.mxu0 0.0
    %1640 = vmatpush1.msra.mxu0 0.0
    %1641 = vmatprep.subr.mxu0 0.0
    %1642 = vmatpush1.msra.mxu0 0.0
    %1643 = vmatprep.subr.mxu0 0.0
    %1644 = vmatpush1.msra.mxu0 0.0
    %1645 = vmatprep.subr.mxu0 0.0
    %1646 = vmatpush1.msra.mxu0 0.0
    %1647 = vmatprep.subr.mxu0 0.0
    %1648 = vmatpush1.msra.mxu0 0.0
    %1649 = vmatprep.subr.mxu0 0.0
    %1650 = vmatpush1.msra.mxu0 0.0
    %1651 = vmatprep.subr.mxu0 0.0
    %1652 = vmatpush1.msra.mxu0 0.0
    %1653 = vmatprep.subr.mxu0 0.0
    %1654 = vmatpush1.msra.mxu0 0.0
    %1655 = vmatprep.subr.mxu0 0.0
    %1656 = vmatpush1.msra.mxu0 0.0
    %1657 = vmatprep.subr.mxu0 0.0
    %1658 = vmatpush1.msra.mxu0 0.0
    %1659 = vmatprep.subr.mxu0 0.0
    %1660 = vmatpush1.msra.mxu0 0.0
    %1661 = vmatprep.subr.mxu0 0.0
    %1662 = vmatpush1.msra.mxu0 0.0
    %1663 = vmatprep.subr.mxu0 0.0
    %1664 = vmatpush1.msra.mxu0 0.0
    %1665 = vmatprep.subr.mxu0 0.0
    %1666 = vmatpush1.msra.mxu0 0.0
    %1667 = vmatprep.subr.mxu0 0.0
    %1668 = vmatpush1.msra.mxu0 0.0
    %1669 = vmatprep.subr.mxu0 0.0
    %1670 = vmatpush1.msra.mxu0 0.0
    %1671 = vmatprep.subr.mxu0 0.0
    %1672 = vmatpush1.msra.mxu0 0.0
    %1673 = vmatprep.subr.mxu0 0.0
    %1674 = vmatpush1.msra.mxu0 0.0
    %1675 = vmatprep.subr.mxu0 0.0
    %1676 = vmatpush1.msra.mxu0 0.0
    %1677 = vmatprep.subr.mxu0 0.0
    %1678 = vmatpush1.msra.mxu0 0.0
    %1679 = vmatprep.mubr.f32.mxu0 0.0
    %1680 = vmatmul.mubr.f32.gmra.mrb[0].mxu0 %v1613
    %v1681 = vpop.f32.mrb[0].mxu0
    %v1682 = vadd.f32 0.0, %v1681
    %v1683 = vpop.f32.mrb[0].mxu0
    %v1684 = vadd.f32 0.0, %v1683
    %1685 = vdwg.mxu0
    %v1686 = vld [vmem:[#allocation2 + $0x70] sm:$0xff]
    %v1687 = vld [vmem:[#allocation2 + $0x8] sm:$0xff]
    %v1688 = vadd.f32 %v1686, %v1682
    %v1689 = vadd.f32 %v1687, %v1684
    %v1690 = vxor.u32 %v1688, 2147483648
    %v1691 = vmul.f32 %v1690, 1.442695
    %v1692 = vpow.pop %v1691
    %v1693 = vadd.f32 %v1692, 1.0
    %v1694 = vrcp.pop %v1693
    %v1695 = vmul.f32 1.0, %v1694
    %v1696 = vtanh.pop %v1688
    %1698 = vrot.lane.b32.xlu0 %v1595, 32
    %v1699 = vpop.permute.xlu0 %1698
    %v1701 = vmul.f32 %v1695, %v1699
    %1703 = vrot.lane.b32.xlu0 %v1696, 64
    %v1704 = vpop.permute.xlu0 %1703
    %v1706 = vmul.f32 %v1695, %v1704
    %1708 = vrot.lane.b32.xlu0 %v1706, 32
    %v1709 = vpop.permute.xlu0 %1708
    %v1711 = vadd.f32 %v1701, %v1709
    %v1712 = vtanh.pop %v1711
    %1714 = vrot.lane.b32.xlu0 %v1712, 64
    %v1715 = vpop.permute.xlu0 %1714
    %v1717 = vmul.f32 %v1695, %v1715
    %v1718 = vxor.u32 %v1689, 2147483648
    %v1719 = vmul.f32 %v1718, 1.442695
    %v1720 = vpow.pop %v1719
    %v1721 = vadd.f32 %v1720, 1.0
    %v1722 = vrcp.pop %v1721
    %v1723 = vmul.f32 1.0, %v1722
    %v1724 = vtanh.pop %v1689
    %v1725 = vmul.f32 %v1723, %v1595
    %1727 = vrot.lane.b32.xlu0 %v1724, 64
    %v1728 = vpop.permute.xlu0 %1727
    %v1730 = vmul.f32 %v1723, %v1728
    %1732 = vrot.lane.b32.xlu0 %v1730, 32
    %v1733 = vpop.permute.xlu0 %1732
    %v1735 = vadd.f32 %v1725, %v1733
    %v1736 = vtanh.pop %v1735
    %1738 = vrot.lane.b32.xlu0 %v1736, 64
    %v1739 = vpop.permute.xlu0 %1738
    %v1741 = vmul.f32 %v1723, %v1739
    %1742 = vrot.lane.b32.xlu0 %v1594, 96
    %v1743 = vpop.permute.xlu0 %1742
    %v1745 = vsel %vm408, %v1717, %v1743
    %v1746 = vsel %vm408, %v1711, %v1699
    %1747 = vrot.lane.b32.xlu0 %v1594, 64
    %v1748 = vpop.permute.xlu0 %1747
    %v1750 = vsel %vm398, %v1741, %v1748
    %v1751 = vsel %vm398, %v1735, %v1595
    %1753 = vrot.lane.b32.xlu0 %v1745, 32
    %v1754 = vpop.permute.xlu0 %1753
    %1757 = vrot.lane.b32.xlu0 %v1750, 64
    %v1758 = vpop.permute.xlu0 %1757
    %v1760 = vsel %vm86, %v1754, %v1758
    %1761 = vst.msk [vmem:[#allocation3] sm:$0xff] %vm241, %v1760
    %1763 = vrot.lane.b32.xlu0 %v1746, 96
    %v1764 = vpop.permute.xlu0 %1763
    %v1766 = vsel %vm86, %v1764, %v1751
    %1767 = vst.msk [vmem:[#allocation4] sm:$0xff] %vm241, %v1766
    %v1768 = vsel %vm408, %v1717, 0.0
    %1770 = vrot.lane.b32.xlu0 %v1768, 32
    %v1771 = vpop.permute.xlu0 %1770
    %1773 = vst.msk [vmem:[#allocation5 + $0x38] sm:$0xff] %vm86, %v1771
    %v1774 = vsel %vm398, %v1741, 0.0
    %1776 = vrot.lane.b32.xlu0 %v1774, 32
    %v1777 = vpop.permute.xlu0 %1776
    %1779 = vst.msk [vmem:[#allocation6] sm:$0xff] %vm86, %v1777
    %v1780 = vld [vmem:[#allocation5] sm:$0xff]
    %v1781 = vld [vmem:[#allocation5 + $0x8] sm:$0xff]
    %v1782 = vld [vmem:[#allocation5 + $0x10] sm:$0xff]
    %v1783 = vld [vmem:[#allocation5 + $0x18] sm:$0xff]
    %v1784 = vld [vmem:[#allocation5 + $0x20] sm:$0xff]
    %v1785 = vld [vmem:[#allocation5 + $0x28] sm:$0xff]
    %v1786 = vld [vmem:[#allocation5 + $0x30] sm:$0xff]
    %v1787 = vld [vmem:[#allocation5 + $0x38] sm:$0xff]
    %v1788 = vld [vmem:[#allocation6] sm:$0xff]
    %v1789 = vld [vmem:[#allocation6 + $0x8] sm:$0xff]
    %v1790 = vld [vmem:[#allocation6 + $0x10] sm:$0xff]
    %v1791 = vld [vmem:[#allocation6 + $0x18] sm:$0xff]
    %v1792 = vld [vmem:[#allocation6 + $0x20] sm:$0xff]
    %v1793 = vld [vmem:[#allocation6 + $0x28] sm:$0xff]
    %v1794 = vld [vmem:[#allocation6 + $0x30] sm:$0xff]
    %v1795 = vld [vmem:[#allocation6 + $0x38] sm:$0xff]
    %1804 = vrot.lane.b32.xlu0 %v1788, 32
    %v1805 = vpop.permute.xlu0 %1804
    %1806 = vrot.lane.b32.xlu0 %v1789, 32
    %v1807 = vpop.permute.xlu0 %1806
    %1808 = vrot.lane.b32.xlu0 %v1790, 32
    %v1809 = vpop.permute.xlu0 %1808
    %1810 = vrot.lane.b32.xlu0 %v1791, 32
    %v1811 = vpop.permute.xlu0 %1810
    %1812 = vrot.lane.b32.xlu0 %v1792, 32
    %v1813 = vpop.permute.xlu0 %1812
    %1814 = vrot.lane.b32.xlu0 %v1793, 32
    %v1815 = vpop.permute.xlu0 %1814
    %1816 = vrot.lane.b32.xlu0 %v1794, 32
    %v1817 = vpop.permute.xlu0 %1816
    %1818 = vrot.lane.b32.xlu0 %v1795, 32
    %v1819 = vpop.permute.xlu0 %1818
    %v1828 = vsel %vm86, %v1780, %v1805
    %v1829 = vsel %vm86, %v1781, %v1807
    %v1830 = vsel %vm86, %v1782, %v1809
    %v1831 = vsel %vm86, %v1783, %v1811
    %v1832 = vsel %vm86, %v1784, %v1813
    %v1833 = vsel %vm86, %v1785, %v1815
    %v1834 = vsel %vm86, %v1786, %v1817
    %v1835 = vsel %vm86, %v1787, %v1819
    %1836 = vst.msk [vmem:[#allocation12] sm:$0xff] %vm241, %v1828
    %1837 = vst.msk [vmem:[#allocation12 + $0x8] sm:$0xff] %vm241, %v1829
    %1838 = vst.msk [vmem:[#allocation12 + $0x10] sm:$0xff] %vm241, %v1830
    %1839 = vst.msk [vmem:[#allocation12 + $0x18] sm:$0xff] %vm241, %v1831
    %1840 = vst.msk [vmem:[#allocation12 + $0x20] sm:$0xff] %vm241, %v1832
    %1841 = vst.msk [vmem:[#allocation12 + $0x28] sm:$0xff] %vm241, %v1833
    %1842 = vst.msk [vmem:[#allocation12 + $0x30] sm:$0xff] %vm241, %v1834
    %1843 = vst.msk [vmem:[#allocation12 + $0x38] sm:$0xff] %vm241, %v1835
    %v1844 = vld [vmem:[#allocation10] sm:$0xff]
    %v1845 = vld [vmem:[#allocation10 + $0x8] sm:$0xff]
    %v1846 = vld [vmem:[#allocation10 + $0x10] sm:$0xff]
    %v1847 = vld [vmem:[#allocation10 + $0x18] sm:$0xff]
    %v1848 = vld [vmem:[#allocation10 + $0x20] sm:$0xff]
    %v1849 = vld [vmem:[#allocation10 + $0x28] sm:$0xff]
    %v1850 = vld [vmem:[#allocation10 + $0x30] sm:$0xff]
    %v1851 = vld [vmem:[#allocation10 + $0x38] sm:$0xff]
    %v1853 = vsel %vm241, %v1828, 0
    %v1856 = vsel %vm241, %v1829, 0
    %v1859 = vsel %vm241, %v1830, 0
    %v1862 = vsel %vm241, %v1831, 0
    %v1865 = vsel %vm241, %v1832, 0
    %v1868 = vsel %vm241, %v1833, 0
    %v1871 = vsel %vm241, %v1834, 0
    %v1874 = vsel %vm241, %v1835, 0
    %1876 = vmatprep.subr.mxu0 0.0
    %1877 = vmatpush1.msra.mxu0 %v1844
    %1878 = vmatprep.subr.mxu0 0.0
    %1879 = vmatpush1.msra.mxu0 %v1845
    %1880 = vmatprep.subr.mxu0 0.0
    %1881 = vmatpush1.msra.mxu0 %v1846
    %1882 = vmatprep.subr.mxu0 0.0
    %1883 = vmatpush1.msra.mxu0 %v1847
    %1884 = vmatprep.subr.mxu0 0.0
    %1885 = vmatpush1.msra.mxu0 %v1848
    %1886 = vmatprep.subr.mxu0 0.0
    %1887 = vmatpush1.msra.mxu0 %v1849
    %1888 = vmatprep.subr.mxu0 0.0
    %1889 = vmatpush1.msra.mxu0 %v1850
    %1890 = vmatprep.subr.mxu0 0.0
    %1891 = vmatpush1.msra.mxu0 %v1851
    %1892 = vmatprep.subr.mxu0 0.0
    %1893 = vmatpush1.msra.mxu0 0.0
    %1894 = vmatprep.subr.mxu0 0.0
    %1895 = vmatpush1.msra.mxu0 0.0
    %1896 = vmatprep.subr.mxu0 0.0
    %1897 = vmatpush1.msra.mxu0 0.0
    %1898 = vmatprep.subr.mxu0 0.0
    %1899 = vmatpush1.msra.mxu0 0.0
    %1900 = vmatprep.subr.mxu0 0.0
    %1901 = vmatpush1.msra.mxu0 0.0
    %1902 = vmatprep.subr.mxu0 0.0
    %1903 = vmatpush1.msra.mxu0 0.0
    %1904 = vmatprep.subr.mxu0 0.0
    %1905 = vmatpush1.msra.mxu0 0.0
    %1906 = vmatprep.subr.mxu0 0.0
    %1907 = vmatpush1.msra.mxu0 0.0
    %1908 = vmatprep.subr.mxu0 0.0
    %1909 = vmatpush1.msra.mxu0 0.0
    %1910 = vmatprep.subr.mxu0 0.0
    %1911 = vmatpush1.msra.mxu0 0.0
    %1912 = vmatprep.subr.mxu0 0.0
    %1913 = vmatpush1.msra.mxu0 0.0
    %1914 = vmatprep.subr.mxu0 0.0
    %1915 = vmatpush1.msra.mxu0 0.0
    %1916 = vmatprep.subr.mxu0 0.0
    %1917 = vmatpush1.msra.mxu0 0.0
    %1918 = vmatprep.subr.mxu0 0.0
    %1919 = vmatpush1.msra.mxu0 0.0
    %1920 = vmatprep.subr.mxu0 0.0
    %1921 = vmatpush1.msra.mxu0 0.0
    %1922 = vmatprep.subr.mxu0 0.0
    %1923 = vmatpush1.msra.mxu0 0.0
    %1924 = vmatprep.subr.mxu0 0.0
    %1925 = vmatpush1.msra.mxu0 0.0
    %1926 = vmatprep.subr.mxu0 0.0
    %1927 = vmatpush1.msra.mxu0 0.0
    %1928 = vmatprep.subr.mxu0 0.0
    %1929 = vmatpush1.msra.mxu0 0.0
    %1930 = vmatprep.subr.mxu0 0.0
    %1931 = vmatpush1.msra.mxu0 0.0
    %1932 = vmatprep.subr.mxu0 0.0
    %1933 = vmatpush1.msra.mxu0 0.0
    %1934 = vmatprep.subr.mxu0 0.0
    %1935 = vmatpush1.msra.mxu0 0.0
    %1936 = vmatprep.subr.mxu0 0.0
    %1937 = vmatpush1.msra.mxu0 0.0
    %1938 = vmatprep.subr.mxu0 0.0
    %1939 = vmatpush1.msra.mxu0 0.0
    %1940 = vmatprep.mubr.f32.mxu0 0.0
    %1941 = vmatmul.mubr.f32.gmra.mrb[0].mxu0 %v1853
    %v1942 = vpop.f32.mrb[0].mxu0
    %v1943 = vadd.f32 0.0, %v1942
    %v1944 = vpop.f32.mrb[0].mxu0
    %1945 = vmatprep.mubr.f32.mxu0 0.0
    %1946 = vmatmul.mubr.f32.gmra.mrb[0].mxu0 %v1856
    %v1947 = vpop.f32.mrb[0].mxu0
    %v1948 = vadd.f32 0.0, %v1947
    %v1949 = vpop.f32.mrb[0].mxu0
    %1950 = vmatprep.mubr.f32.mxu0 0.0
    %1951 = vmatmul.mubr.f32.gmra.mrb[0].mxu0 %v1859
    %v1952 = vpop.f32.mrb[0].mxu0
    %v1953 = vadd.f32 0.0, %v1952
    %v1954 = vpop.f32.mrb[0].mxu0
    %1955 = vmatprep.mubr.f32.mxu0 0.0
    %1956 = vmatmul.mubr.f32.gmra.mrb[0].mxu0 %v1862
    %v1957 = vpop.f32.mrb[0].mxu0
    %v1958 = vadd.f32 0.0, %v1957
    %v1959 = vpop.f32.mrb[0].mxu0
    %1960 = vmatprep.mubr.f32.mxu0 0.0
    %1961 = vmatmul.mubr.f32.gmra.mrb[0].mxu0 %v1865
    %v1962 = vpop.f32.mrb[0].mxu0
    %v1963 = vadd.f32 0.0, %v1962
    %v1964 = vpop.f32.mrb[0].mxu0
    %1965 = vmatprep.mubr.f32.mxu0 0.0
    %1966 = vmatmul.mubr.f32.gmra.mrb[0].mxu0 %v1868
    %v1967 = vpop.f32.mrb[0].mxu0
    %v1968 = vadd.f32 0.0, %v1967
    %v1969 = vpop.f32.mrb[0].mxu0
    %1970 = vmatprep.mubr.f32.mxu0 0.0
    %1971 = vmatmul.mubr.f32.gmra.mrb[0].mxu0 %v1871
    %v1972 = vpop.f32.mrb[0].mxu0
    %v1973 = vadd.f32 0.0, %v1972
    %v1974 = vpop.f32.mrb[0].mxu0
    %1975 = vmatprep.mubr.f32.mxu0 0.0
    %1976 = vmatmul.mubr.f32.gmra.mrb[0].mxu0 %v1874
    %v1977 = vpop.f32.mrb[0].mxu0
    %v1978 = vadd.f32 0.0, %v1977
    %v1979 = vpop.f32.mrb[0].mxu0
    %1980 = vdwg.mxu0
    %1981 = vst.msk [vmem:[#allocation13] sm:$0xff] %vm241, %v1943
    %1982 = vst.msk [vmem:[#allocation13 + $0x8] sm:$0xff] %vm241, %v1948
    %1983 = vst.msk [vmem:[#allocation13 + $0x10] sm:$0xff] %vm241, %v1953
    %1984 = vst.msk [vmem:[#allocation13 + $0x18] sm:$0xff] %vm241, %v1958
    %1985 = vst.msk [vmem:[#allocation13 + $0x20] sm:$0xff] %vm241, %v1963
    %1986 = vst.msk [vmem:[#allocation13 + $0x28] sm:$0xff] %vm241, %v1968
    %1987 = vst.msk [vmem:[#allocation13 + $0x30] sm:$0xff] %vm241, %v1973
    %1988 = vst.msk [vmem:[#allocation13 + $0x38] sm:$0xff] %vm241, %v1978
    %v1989 = vld [vmem:[#allocation3] sm:$0xff]
    %v1990 = vld [vmem:[#allocation4] sm:$0xff]
    %1991 = vst.msk [vmem:[#allocation15] sm:$0xff] %vm86, %v1989
    %1993 = vrot.lane.b32.xlu0 %v1989, 96
    %v1994 = vpop.permute.xlu0 %1993
    %s1996 = scalar_lea.vmem [#allocation15], 8
    %1997 = vst.msk [vmem:[%s1996] sm:$0xff] %vm86, %v1994
    %1998 = vst.msk [vmem:[#allocation16] sm:$0xff] %vm86, %v1990
    %2000 = vrot.lane.b32.xlu0 %v1990, 96
    %v2001 = vpop.permute.xlu0 %2000
    %s2003 = scalar_lea.vmem [#allocation16], 8
    %2004 = vst.msk [vmem:[%s2003] sm:$0xff] %vm86, %v2001
    // Predicated region
    $region34: #{tpu_custom_call.1} parent=1 // pred_check
      _
    $region35: #{tpu_custom_call.1} parent=1 // pred_check_branch
      %2006 = sbr.rel (0) target = $region37
    $region36: #{tpu_custom_call.1} parent=1 // pred_region
      %s2008 = ssub.s32 1024, 1024
      %2009 = vsyncadd [#allocation9], %s2008
      %s2010 = sshll.u32 [#allocation12], 4
      %s2011 = int_to_ptr.vmem [resolvable:$true] %s2010
      %2016 = dma.vmem_to_hbm [thread:$0]  %s2011, 1024, %s6, [#allocation9], 128, 128, 8
    $region37: #{tpu_custom_call.1} parent=1 // pred_fallthru
      _
    // Predicated region
    $region38: #{tpu_custom_call.1} parent=1 // pred_check
      _
    $region39: #{tpu_custom_call.1} parent=1 // pred_check_branch
      %2018 = sbr.rel (0) target = $region41
    $region40: #{tpu_custom_call.1} parent=1 // pred_region
      %s2020 = ssub.s32 1024, 1024
      %2021 = vsyncadd [#allocation14], %s2020
      %s2022 = sshll.u32 [#allocation13], 4
      %s2023 = int_to_ptr.vmem [resolvable:$true] %s2022
      %2028 = dma.vmem_to_hbm [thread:$0]  %s2023, 1024, %s7, [#allocation14], 128, 128, 8
    $region41: #{tpu_custom_call.1} parent=1 // pred_fallthru
      _
    // Predicated region
    $region42: #{tpu_custom_call.1} parent=1 // pred_check
      _
    $region43: #{tpu_custom_call.1} parent=1 // pred_check_branch
      %2030 = sbr.rel (0) target = $region45
    $region44: #{tpu_custom_call.1} parent=1 // pred_region
      %s2032 = ssub.s32 256, 256
      %2033 = vsyncadd [#allocation14], %s2032
      %s2034 = sshll.u32 [#allocation15], 4
      %s2035 = int_to_ptr.vmem [resolvable:$true] %s2034
      %2040 = dma.vmem_to_hbm [thread:$0]  %s2035, 256, %s8, [#allocation14], 128, 128, 8
    $region45: #{tpu_custom_call.1} parent=1 // pred_fallthru
      _
    // Predicated region
    $region46: #{tpu_custom_call.1} parent=1 // pred_check
      _
    $region47: #{tpu_custom_call.1} parent=1 // pred_check_branch
      %2042 = sbr.rel (0) target = $region49
    $region48: #{tpu_custom_call.1} parent=1 // pred_region
      %s2044 = ssub.s32 256, 256
      %2045 = vsyncadd [#allocation17], %s2044
      %s2046 = sshll.u32 [#allocation16], 4
      %s2047 = int_to_ptr.vmem [resolvable:$true] %s2046
      %2052 = dma.vmem_to_hbm [thread:$0]  %s2047, 256, %s9, [#allocation17], 128, 128, 8
    $region49: #{tpu_custom_call.1} parent=1 // pred_fallthru
      _
    // Predicated region
    $region50: #{tpu_custom_call.1} parent=1 // pred_check
      _
    $region51: #{tpu_custom_call.1} parent=1 // pred_check_branch
      %2054 = sbr.rel (0) target = $region53
    $region52: #{tpu_custom_call.1} parent=1 // pred_region
      %2055 = dma.done [#allocation9], 1024
    $region53: #{tpu_custom_call.1} parent=1 // pred_fallthru
      _
    // Predicated region
    $region54: #{tpu_custom_call.1} parent=1 // pred_check
      _
    $region55: #{tpu_custom_call.1} parent=1 // pred_check_branch
      %2057 = sbr.rel (0) target = $region57
    $region56: #{tpu_custom_call.1} parent=1 // pred_region
      %2058 = dma.done [#allocation14], 1024
    $region57: #{tpu_custom_call.1} parent=1 // pred_fallthru
      _
    // Predicated region
    $region58: #{tpu_custom_call.1} parent=1 // pred_check
      _
    $region59: #{tpu_custom_call.1} parent=1 // pred_check_branch
      %2060 = sbr.rel (0) target = $region61
    $region60: #{tpu_custom_call.1} parent=1 // pred_region
      %2061 = dma.done [#allocation14], 256
    $region61: #{tpu_custom_call.1} parent=1 // pred_fallthru
      _
    // Predicated region
    $region62: #{tpu_custom_call.1} parent=1 // pred_check
      _
    $region63: #{tpu_custom_call.1} parent=1 // pred_check_branch
      %2063 = sbr.rel (0) target = $region65
    $region64: #{tpu_custom_call.1} parent=1 // pred_region
      %2064 = dma.done [#allocation17], 256
    $region65: #{tpu_custom_call.1} parent=1 // pred_fallthru
      _
    %2065 = vsyncpa [#allocation8], 1
    %2066 = vsyncpa [#allocation11], 1
    %2067 = vsyncpa [#allocation9], 1
    %2068 = vsyncpa [#allocation14], 1
    %2069 = vsyncpa [#allocation17], 1

</llo_original>
